<compile_context>
chip_gen: v6e
topology: v6e:2x2x1
jax: 0.10.0
libtpu: 0.0.40
codegen_flags: <defaults>
</compile_context>

<pallas_src>
import jax
import jax.numpy as jnp
from jax.experimental import pallas as pl
from jax.experimental.pallas import tpu as pltpu

LEAKY_SLOPE = 0.01   # nn.LeakyReLU() default negative_slope
BN_EPS = 1e-5


def _round_up(x, m):
    return -(-x // m) * m


def _conv_out_len(l):
    # torch Conv1d(kernel=5, stride=2, padding=2) output length
    return (l + 2 * 2 - 5) // 2 + 1


# ----------------------------------------------------------------------------
# Fused kernel: [conv(k5,s2,p2) + BN + LeakyReLU] * depth  +  Linear head
# ----------------------------------------------------------------------------
def _make_fused_kernel(depth, l_outs, c_mid, bb):
    def kernel(*args):
        x1_ref = args[0]                        # (bb, L1, K1)  bf16 layer-1 patches
        layer_refs = args[1:1 + 3 * depth]      # (w, scale, bias) per conv layer
        fcw_ref = args[1 + 3 * depth]           # (L_last, C, N_pad) bf16
        fcb_ref = args[2 + 3 * depth]           # (1, N_pad) f32
        o_ref = args[3 + 3 * depth]             # (bb, N_pad) f32
        scr = args[4 + 3 * depth]               # VMEM (bb, L1 + 4, C) f32

        def bn_lrelu(acc, s_ref, b_ref):
            # folded BatchNorm affine + LeakyReLU, in f32 on the VPU
            y = acc * s_ref[...] + b_ref[...]
            return jnp.where(y > 0, y, LEAKY_SLOPE * y)

        l1 = l_outs[0]
        k1p = x1_ref.shape[-1]

        # ---- layer 1: patches prebuilt in the wrapper -> single MXU dot ----
        p = x1_ref[...].reshape(bb * l1, k1p)
        acc = jnp.dot(p, layer_refs[0][...], preferred_element_type=jnp.float32)
        act = bn_lrelu(acc, layer_refs[1], layer_refs[2])        # (bb*L1, C) f32

        # left padding (rows 0,1) is never overwritten below: zero it ONCE
        if depth > 1:
            scr[:, 0:2, :] = jnp.zeros((bb, 2, c_mid), jnp.float32)

        # ---- layers 2..depth: stride-2 tap reads + 5 accumulated per-tap dots
        for i in range(1, depth):
            li = l_outs[i - 1]      # input length of this layer
            lo = l_outs[i]          # output length of this layer
            w_ref = layer_refs[3 * i]            # (5, C, C) bf16
            s_ref = layer_refs[3 * i + 1]
            b_ref = layer_refs[3 * i + 2]

            # activation into padded rows 2..li+1
            scr[:, 2:li + 2, :] = act.reshape(bb, li, c_mid)
            # zero only the right-pad rows actually read (tap 4 reads up to 2*lo+2)
            rhi = 2 * lo + 3
            scr[:, li + 2:rhi, :] = jnp.zeros((bb, rhi - (li + 2), c_mid),
                                              jnp.float32)

            acc = None
            for t in range(5):
                # tap t of the stride-2 conv reads padded rows t, t+2, ..., t+2*(lo-1)
                tap = scr[:, pl.ds(t, lo, stride=2), :]          # (bb, lo, C) f32
                tap = tap.reshape(bb * lo, c_mid).astype(jnp.bfloat16)
                d = jnp.dot(tap, w_ref[t], preferred_element_type=jnp.float32)
                acc = d if acc is None else acc + d
            act = bn_lrelu(acc, s_ref, b_ref)                    # (bb*lo, C) f32

        # ---- FC head: flatten stays implicit -> l_last accumulated dots ----
        l_last = l_outs[-1]
        act3 = act.reshape(bb, l_last, c_mid)
        out = None
        for l in range(l_last):
            d = jnp.dot(act3[:, l, :].astype(jnp.bfloat16), fcw_ref[l],
                        preferred_element_type=jnp.float32)
            out = d if out is None else out + d
        o_ref[...] = out + fcb_ref[...]                          # (bb, N_pad) dense

    return kernel


# ----------------------------------------------------------------------------
# Full forward pass
# ----------------------------------------------------------------------------
def resunit_forward(x_ncl, conv_w, conv_scale, conv_bias, fc_w, fc_b, *, n_classes):
    """x_ncl: (B, C_in, L_in) torch-style NCL input."""
    B, c_in, l_in = x_ncl.shape
    depth = len(conv_w)
    c_mid = conv_w[0].shape[1]
    k1p = conv_w[0].shape[0]
    n_pad = fc_b.shape[-1]

    l_outs = []
    l = l_in
    for _ in range(depth):
        l = _conv_out_len(l)
        l_outs.append(l)
    l1 = l_outs[0]
    l_last = l_outs[-1]

    # ---- layer-1 im2col in the wrapper (tiny: only C_in channels) ----
    x = jnp.transpose(x_ncl, (0, 2, 1)).astype(jnp.float32)       # (B, L_in, C_in)
    need_rows = 2 * (l1 - 1) + 5                                  # padded rows used
    rpad = max(0, need_rows - (l_in + 2))
    xp = jnp.pad(x, ((0, 0), (2, rpad), (0, 0)))
    taps = [xp[:, t:t + 2 * l1:2, :] for t in range(5)]           # (B, L1, C_in)
    x1p = jnp.concatenate(taps, axis=-1)                          # (B, L1, 5*C_in)
    if k1p > 5 * c_in:
        x1p = jnp.pad(x1p, ((0, 0), (0, 0), (0, k1p - 5 * c_in)))
    x1p = x1p.astype(jnp.bfloat16)

    # ---- batch tile: fill the MXU M dimension on the DEEPEST conv layer ----
    # target bb*l_last >= 256 (v6e/v7x full rows), bb a multiple of 8.
    bb = _round_up(max(1, -(-256 // l_last)), 8)
    # shrink for small B to limit padding waste, keeping bb*l_last >= 128.
    while bb >= 16 and (bb // 2) % 8 == 0 and (bb // 2) * l_last >= 128 \
            and B <= bb // 2:
        bb //= 2
    # prefer >=2 grid steps when B allows it (v7x has 2 TensorCores).
    if -(-B // bb) == 1 and B > 8:
        half = _round_up(-(-B // 2), 8)
        if half * l_last >= 128:
            bb = min(bb, half)
    grid = -(-B // bb)
    b_pad = grid * bb

    # pad batch to a multiple of bb (uniform behaviour for any B)
    if b_pad > B:
        x1p = jnp.pad(x1p, ((0, b_pad - B), (0, 0), (0, 0)))

    # ---- specs / operands ----
    in_specs = [pl.BlockSpec((bb, l1, k1p), lambda b: (b, 0, 0))]
    operands = [x1p]

    # layer 1 weight is 2-D (K1, C); deeper weights are 3-D (5, C, C)
    in_specs += [pl.BlockSpec(conv_w[0].shape, lambda b: (0, 0)),
                 pl.BlockSpec(conv_scale[0].shape, lambda b: (0, 0)),
                 pl.BlockSpec(conv_bias[0].shape, lambda b: (0, 0))]
    operands += [conv_w[0], conv_scale[0], conv_bias[0]]
    for w, s, bias in zip(conv_w[1:], conv_scale[1:], conv_bias[1:]):
        in_specs += [pl.BlockSpec(w.shape, lambda b: (0, 0, 0)),
                     pl.BlockSpec(s.shape, lambda b: (0, 0)),
                     pl.BlockSpec(bias.shape, lambda b: (0, 0))]
        operands += [w, s, bias]
    in_specs += [pl.BlockSpec(fc_w.shape, lambda b: (0, 0, 0)),
                 pl.BlockSpec(fc_b.shape, lambda b: (0, 0))]
    operands += [fc_w, fc_b]

    kernel = _make_fused_kernel(depth, tuple(l_outs), c_mid, bb)

    # ---- cost estimate (helps XLA schedule the surrounding wrapper ops) ----
    flops = 2 * b_pad * (l1 * k1p * c_mid
                         + sum(l_outs[i] * 5 * c_mid * c_mid
                               for i in range(1, depth))
                         + l_last * c_mid * n_pad)
    bytes_in = (int(x1p.size) * 2
                + sum(int(w.size) * 2 for w in conv_w)
                + sum(int(s.size) * 4 for s in conv_scale)
                + sum(int(b_.size) * 4 for b_ in conv_bias)
                + int(fc_w.size) * 2 + int(fc_b.size) * 4)
    bytes_out = b_pad * n_pad * 4
    cost = pl.CostEstimate(flops=int(flops), transcendentals=0,
                           bytes_accessed=int(bytes_in + bytes_out))

    # ---- explicit VMEM budget (v7x has only 64 MiB physical VMEM) ----
    blk_bytes = (bb * l1 * k1p * 2                      # x1p block
                 + sum(int(w.size) * 2 for w in conv_w)
                 + sum(int(s.size) * 4 for s in conv_scale)
                 + sum(int(b_.size) * 4 for b_ in conv_bias)
                 + int(fc_w.size) * 2 + int(fc_b.size) * 4
                 + bb * n_pad * 4)                      # output block
    scr_bytes = bb * (l1 + 4) * c_mid * 4
    work_bytes = 6 * bb * l1 * c_mid * 4                # acc/tap working set headroom
    vmem_need = 2 * blk_bytes + scr_bytes + work_bytes  # x2: double-buffered specs
    vmem_limit = int(min(max(vmem_need, 32 << 20), 64 << 20))

    out = pl.pallas_call(
        kernel,
        out_shape=jax.ShapeDtypeStruct((b_pad, n_pad), jnp.float32),
        grid=(grid,),
        in_specs=in_specs,
        out_specs=pl.BlockSpec((bb, n_pad), lambda b: (b, 0)),
        scratch_shapes=[pltpu.VMEM((bb, l1 + 4, c_mid), jnp.float32)],
        compiler_params=pltpu.CompilerParams(
            dimension_semantics=("parallel",),
            vmem_limit_bytes=vmem_limit),
        cost_estimate=cost,
    )(*operands)

    return out[:B, :n_classes]


# ----------------------------------------------------------------------------
# Parameter initialization (deterministic, synthetic; eval-mode BN folding)
# ----------------------------------------------------------------------------
def init_params(key, data_channel, n_classes, a, depth, l_in):
    c_mid = 8 * a
    n_pad = _round_up(n_classes, 128)
    conv_w, conv_scale, conv_bias = [], [], []
    c1 = data_channel
    l = l_in
    for layer in range(depth):
        key, kw, kg, kb, km, kv = jax.random.split(key, 6)
        fan_in = c1 * 5
        # torch weight layout (C_out, C_in, K)
        w = jax.random.normal(kw, (c_mid, c1, 5), jnp.float32) / jnp.sqrt(fan_in)
        gamma = jax.random.uniform(kg, (c_mid,), jnp.float32, 0.5, 1.5)
        beta = 0.1 * jax.random.normal(kb, (c_mid,), jnp.float32)
        run_mean = 0.1 * jax.random.normal(km, (c_mid,), jnp.float32)
        run_var = jax.random.uniform(kv, (c_mid,), jnp.float32, 0.5, 1.5)
        scale = gamma / jnp.sqrt(run_var + BN_EPS)
        bias = beta - run_mean * scale
        wt = jnp.transpose(w, (2, 1, 0))                  # (5, C_in, C_out)
        if layer == 0:
            # layer 1: tap-major flattened (row = t*C_in + ci), contraction
            # padded only to a sublane multiple of 8
            w_flat = wt.reshape(5 * c1, c_mid)
            k1p = max(8, _round_up(5 * c1, 8))
            w_flat = jnp.pad(w_flat, ((0, k1p - 5 * c1), (0, 0)))
            conv_w.append(w_flat.astype(jnp.bfloat16))
        else:
            # deep layers: per-tap weight (5, C_in, C_out) for accumulated dots
            conv_w.append(wt.astype(jnp.bfloat16))
        conv_scale.append(scale.reshape(1, c_mid))
        conv_bias.append(bias.reshape(1, c_mid))
        c1 = c_mid
        l = _conv_out_len(l)

    # FC head: torch Linear(C*L, n_classes), torch flatten order = c*L + l.
    feat = c_mid * l
    key, kfw, kfb = jax.random.split(key, 3)
    bound = 1.0 / jnp.sqrt(feat)
    fc_w = jax.random.uniform(kfw, (n_classes, feat), jnp.float32, -bound, bound)
    fc_b = jax.random.uniform(kfb, (n_classes,), jnp.float32, -bound, bound)
    # reshape to per-position slices (l, c, n): fcw3[l, c, n] = fc_w[n, c*L + l];
    # pad classes to a multiple of 128 for lane-dense output stores
    wt = fc_w.T.reshape(c_mid, l, n_classes)
    wt = jnp.transpose(wt, (1, 0, 2))                     # (L, C, n_classes)
    wt = jnp.pad(wt, ((0, 0), (0, 0), (0, n_pad - n_classes))).astype(jnp.bfloat16)
    fb = jnp.pad(fc_b, (0, n_pad - n_classes)).reshape(1, n_pad).astype(jnp.float32)
    return conv_w, conv_scale, conv_bias, wt, fb


if __name__ == "__main__":
    # Small but structurally faithful config:
    #   data_channel=1, a=16 -> plane=128, depth=3, n_classes=10, L_in=64
    B, C_IN, L_IN = 2, 1, 64
    N_CLASSES, A, DEPTH = 10, 16, 3

    key = jax.random.PRNGKey(0)
    key, kx = jax.random.split(key)
    x = jax.random.normal(kx, (B, C_IN, L_IN), jnp.float32)   # torch-style NCL

    conv_w, conv_scale, conv_bias, fc_w, fc_b = init_params(
        key, data_channel=C_IN, n_classes=N_CLASSES, a=A, depth=DEPTH, l_in=L_IN)

    fwd = jax.jit(resunit_forward, static_argnames=("n_classes",))
    out = fwd(x, conv_w, conv_scale, conv_bias, fc_w, fc_b, n_classes=N_CLASSES)
    out = jax.block_until_ready(out)
    assert out.shape == (B, N_CLASSES), out.shape
    print("KERNEL_OK")
</pallas_src>

<mosaic_0001>
module attributes {stable_mosaic.version = 11 : i64} {
  func.func @kernel(%arg0: i32, %arg1: memref<16x32x8xbf16, #tpu.memory_space<vmem>>, %arg2: memref<8x128xbf16, #tpu.memory_space<vmem>>, %arg3: memref<1x128xf32, #tpu.memory_space<vmem>>, %arg4: memref<1x128xf32, #tpu.memory_space<vmem>>, %arg5: memref<5x128x128xbf16, #tpu.memory_space<vmem>>, %arg6: memref<1x128xf32, #tpu.memory_space<vmem>>, %arg7: memref<1x128xf32, #tpu.memory_space<vmem>>, %arg8: memref<5x128x128xbf16, #tpu.memory_space<vmem>>, %arg9: memref<1x128xf32, #tpu.memory_space<vmem>>, %arg10: memref<1x128xf32, #tpu.memory_space<vmem>>, %arg11: memref<8x128x128xbf16, #tpu.memory_space<vmem>>, %arg12: memref<1x128xf32, #tpu.memory_space<vmem>>, %arg13: memref<16x128xf32, #tpu.memory_space<vmem>>, %arg14: memref<16x36x128xf32, #tpu.memory_space<vmem>>) attributes {dimension_semantics = [#tpu.dimension_semantics<parallel>], iteration_bounds = array<i64: 1>, scalar_prefetch = 0 : i64, scratch_operands = 1 : i64, tpu.core_type = #tpu.core_type<tc>, window_params = [{transform_indices = @transform_0, window_bounds = array<i64: 16, 32, 8>}, {pipeline_mode = #tpu.pipeline_mode<synchronous>, transform_indices = @transform_1, window_bounds = array<i64: 8, 128>}, {pipeline_mode = #tpu.pipeline_mode<synchronous>, transform_indices = @transform_2, window_bounds = array<i64: 1, 128>}, {pipeline_mode = #tpu.pipeline_mode<synchronous>, transform_indices = @transform_3, window_bounds = array<i64: 1, 128>}, {pipeline_mode = #tpu.pipeline_mode<synchronous>, transform_indices = @transform_4, window_bounds = array<i64: 5, 128, 128>}, {pipeline_mode = #tpu.pipeline_mode<synchronous>, transform_indices = @transform_5, window_bounds = array<i64: 1, 128>}, {pipeline_mode = #tpu.pipeline_mode<synchronous>, transform_indices = @transform_6, window_bounds = array<i64: 1, 128>}, {pipeline_mode = #tpu.pipeline_mode<synchronous>, transform_indices = @transform_7, window_bounds = array<i64: 5, 128, 128>}, {pipeline_mode = #tpu.pipeline_mode<synchronous>, transform_indices = @transform_8, window_bounds = array<i64: 1, 128>}, {pipeline_mode = #tpu.pipeline_mode<synchronous>, transform_indices = @transform_9, window_bounds = array<i64: 1, 128>}, {pipeline_mode = #tpu.pipeline_mode<synchronous>, transform_indices = @transform_10, window_bounds = array<i64: 8, 128, 128>}, {pipeline_mode = #tpu.pipeline_mode<synchronous>, transform_indices = @transform_11, window_bounds = array<i64: 1, 128>}, {transform_indices = @transform_12, window_bounds = array<i64: 16, 128>}]} {
    %c0 = arith.constant 0 : index
    %c0_0 = arith.constant 0 : index
    %c0_1 = arith.constant 0 : index
    %0 = vector.load %arg1[%c0, %c0_0, %c0_1] : memref<16x32x8xbf16, #tpu.memory_space<vmem>>, vector<16x32x8xbf16>
    %1 = vector.shape_cast %0 : vector<16x32x8xbf16> to vector<512x8xbf16>
    %c0_2 = arith.constant 0 : index
    %c0_3 = arith.constant 0 : index
    %2 = vector.load %arg2[%c0_2, %c0_3] : memref<8x128xbf16, #tpu.memory_space<vmem>>, vector<8x128xbf16>
    %cst = arith.constant dense<0.000000e+00> : vector<512x128xf32>
    %3 = tpu.matmul %1, %2, %cst {dimension_numbers = #tpu.dot_dimension_numbers<[1], [0], [0], [1], [0, 0, 1, 1], [], []>} : vector<512x8xbf16>, vector<8x128xbf16>, vector<512x128xf32> -> vector<512x128xf32>
    %c0_4 = arith.constant 0 : index
    %c0_5 = arith.constant 0 : index
    %4 = vector.load %arg3[%c0_4, %c0_5] : memref<1x128xf32, #tpu.memory_space<vmem>>, vector<1x128xf32>
    %5 = vector.broadcast %4 : vector<1x128xf32> to vector<512x128xf32>
    %6 = arith.mulf %3, %5 : vector<512x128xf32>
    %c0_6 = arith.constant 0 : index
    %c0_7 = arith.constant 0 : index
    %7 = vector.load %arg4[%c0_6, %c0_7] : memref<1x128xf32, #tpu.memory_space<vmem>>, vector<1x128xf32>
    %8 = vector.broadcast %7 : vector<1x128xf32> to vector<512x128xf32>
    %9 = arith.addf %6, %8 : vector<512x128xf32>
    %cst_8 = arith.constant 0.000000e+00 : f32
    %10 = vector.broadcast %cst_8 : f32 to vector<512x128xf32>
    %11 = arith.cmpf ogt, %9, %10 : vector<512x128xf32>
    %cst_9 = arith.constant 0.00999999977 : f32
    %12 = vector.broadcast %cst_9 : f32 to vector<512x128xf32>
    %13 = arith.mulf %12, %9 : vector<512x128xf32>
    %14 = arith.select %11, %9, %13 : vector<512x128xi1>, vector<512x128xf32>
    %cst_10 = arith.constant 0.000000e+00 : f32
    %15 = vector.broadcast %cst_10 : f32 to vector<16x2x128xf32>
    %c0_11 = arith.constant 0 : index
    %c0_12 = arith.constant 0 : index
    %c0_13 = arith.constant 0 : index
    %16 = vector.load %arg14[%c0_11, %c0_12, %c0_13] : memref<16x36x128xf32, #tpu.memory_space<vmem>>, vector<16x2x128xf32>
    tpu.vector_store %arg14[%c0_11, %c0_12, %c0_13], %15 {strides = array<i32>} : memref<16x36x128xf32, #tpu.memory_space<vmem>>, vector<16x2x128xf32>,
    %17 = vector.shape_cast %14 : vector<512x128xf32> to vector<16x32x128xf32>
    %c0_14 = arith.constant 0 : index
    %c2 = arith.constant 2 : index
    %c0_15 = arith.constant 0 : index
    %18 = vector.load %arg14[%c0_14, %c2, %c0_15] : memref<16x36x128xf32, #tpu.memory_space<vmem>>, vector<16x32x128xf32>
    tpu.vector_store %arg14[%c0_14, %c2, %c0_15], %17 {strides = array<i32>} : memref<16x36x128xf32, #tpu.memory_space<vmem>>, vector<16x32x128xf32>,
    %cst_16 = arith.constant 0.000000e+00 : f32
    %19 = vector.broadcast %cst_16 : f32 to vector<16x1x128xf32>
    %c0_17 = arith.constant 0 : index
    %c34 = arith.constant 34 : index
    %c0_18 = arith.constant 0 : index
    %20 = vector.load %arg14[%c0_17, %c34, %c0_18] : memref<16x36x128xf32, #tpu.memory_space<vmem>>, vector<16x1x128xf32>
    tpu.vector_store %arg14[%c0_17, %c34, %c0_18], %19 {strides = array<i32>} : memref<16x36x128xf32, #tpu.memory_space<vmem>>, vector<16x1x128xf32>,
    %c0_19 = arith.constant 0 : index
    %c0_20 = arith.constant 0 : index
    %c0_21 = arith.constant 0 : index
    %21 = tpu.strided_load %arg14[%c0_19, %c0_20, %c0_21] {strides = array<i32: 1, 2, 1>} : memref<16x36x128xf32, #tpu.memory_space<vmem>>, vector<16x16x128xf32>
    %22 = vector.shape_cast %21 : vector<16x16x128xf32> to vector<256x128xf32>
    %23 = arith.truncf %22 : vector<256x128xf32> to vector<256x128xbf16>
    %c0_22 = arith.constant 0 : index
    %c0_23 = arith.constant 0 : index
    %c0_24 = arith.constant 0 : index
    %24 = vector.load %arg5[%c0_22, %c0_23, %c0_24] : memref<5x128x128xbf16, #tpu.memory_space<vmem>>, vector<1x128x128xbf16>
    %25 = vector.shape_cast %24 : vector<1x128x128xbf16> to vector<128x128xbf16>
    %cst_25 = arith.constant dense<0.000000e+00> : vector<256x128xf32>
    %26 = tpu.matmul %23, %25, %cst_25 {dimension_numbers = #tpu.dot_dimension_numbers<[1], [0], [0], [1], [0, 0, 1, 1], [], []>} : vector<256x128xbf16>, vector<128x128xbf16>, vector<256x128xf32> -> vector<256x128xf32>
    %c0_26 = arith.constant 0 : index
    %c1 = arith.constant 1 : index
    %c0_27 = arith.constant 0 : index
    %27 = tpu.strided_load %arg14[%c0_26, %c1, %c0_27] {strides = array<i32: 1, 2, 1>} : memref<16x36x128xf32, #tpu.memory_space<vmem>>, vector<16x16x128xf32>
    %28 = vector.shape_cast %27 : vector<16x16x128xf32> to vector<256x128xf32>
    %29 = arith.truncf %28 : vector<256x128xf32> to vector<256x128xbf16>
    %c1_28 = arith.constant 1 : index
    %c0_29 = arith.constant 0 : index
    %c0_30 = arith.constant 0 : index
    %30 = vector.load %arg5[%c1_28, %c0_29, %c0_30] : memref<5x128x128xbf16, #tpu.memory_space<vmem>>, vector<1x128x128xbf16>
    %31 = vector.shape_cast %30 : vector<1x128x128xbf16> to vector<128x128xbf16>
    %cst_31 = arith.constant dense<0.000000e+00> : vector<256x128xf32>
    %32 = tpu.matmul %29, %31, %cst_31 {dimension_numbers = #tpu.dot_dimension_numbers<[1], [0], [0], [1], [0, 0, 1, 1], [], []>} : vector<256x128xbf16>, vector<128x128xbf16>, vector<256x128xf32> -> vector<256x128xf32>
    %33 = arith.addf %26, %32 : vector<256x128xf32>
    %c0_32 = arith.constant 0 : index
    %c2_33 = arith.constant 2 : index
    %c0_34 = arith.constant 0 : index
    %34 = tpu.strided_load %arg14[%c0_32, %c2_33, %c0_34] {strides = array<i32: 1, 2, 1>} : memref<16x36x128xf32, #tpu.memory_space<vmem>>, vector<16x16x128xf32>
    %35 = vector.shape_cast %34 : vector<16x16x128xf32> to vector<256x128xf32>
    %36 = arith.truncf %35 : vector<256x128xf32> to vector<256x128xbf16>
    %c2_35 = arith.constant 2 : index
    %c0_36 = arith.constant 0 : index
    %c0_37 = arith.constant 0 : index
    %37 = vector.load %arg5[%c2_35, %c0_36, %c0_37] : memref<5x128x128xbf16, #tpu.memory_space<vmem>>, vector<1x128x128xbf16>
    %38 = vector.shape_cast %37 : vector<1x128x128xbf16> to vector<128x128xbf16>
    %cst_38 = arith.constant dense<0.000000e+00> : vector<256x128xf32>
    %39 = tpu.matmul %36, %38, %cst_38 {dimension_numbers = #tpu.dot_dimension_numbers<[1], [0], [0], [1], [0, 0, 1, 1], [], []>} : vector<256x128xbf16>, vector<128x128xbf16>, vector<256x128xf32> -> vector<256x128xf32>
    %40 = arith.addf %33, %39 : vector<256x128xf32>
    %c0_39 = arith.constant 0 : index
    %c3 = arith.constant 3 : index
    %c0_40 = arith.constant 0 : index
    %41 = tpu.strided_load %arg14[%c0_39, %c3, %c0_40] {strides = array<i32: 1, 2, 1>} : memref<16x36x128xf32, #tpu.memory_space<vmem>>, vector<16x16x128xf32>
    %42 = vector.shape_cast %41 : vector<16x16x128xf32> to vector<256x128xf32>
    %43 = arith.truncf %42 : vector<256x128xf32> to vector<256x128xbf16>
    %c3_41 = arith.constant 3 : index
    %c0_42 = arith.constant 0 : index
    %c0_43 = arith.constant 0 : index
    %44 = vector.load %arg5[%c3_41, %c0_42, %c0_43] : memref<5x128x128xbf16, #tpu.memory_space<vmem>>, vector<1x128x128xbf16>
    %45 = vector.shape_cast %44 : vector<1x128x128xbf16> to vector<128x128xbf16>
    %cst_44 = arith.constant dense<0.000000e+00> : vector<256x128xf32>
    %46 = tpu.matmul %43, %45, %cst_44 {dimension_numbers = #tpu.dot_dimension_numbers<[1], [0], [0], [1], [0, 0, 1, 1], [], []>} : vector<256x128xbf16>, vector<128x128xbf16>, vector<256x128xf32> -> vector<256x128xf32>
    %47 = arith.addf %40, %46 : vector<256x128xf32>
    %c0_45 = arith.constant 0 : index
    %c4 = arith.constant 4 : index
    %c0_46 = arith.constant 0 : index
    %48 = tpu.strided_load %arg14[%c0_45, %c4, %c0_46] {strides = array<i32: 1, 2, 1>} : memref<16x36x128xf32, #tpu.memory_space<vmem>>, vector<16x16x128xf32>
    %49 = vector.shape_cast %48 : vector<16x16x128xf32> to vector<256x128xf32>
    %50 = arith.truncf %49 : vector<256x128xf32> to vector<256x128xbf16>
    %c4_47 = arith.constant 4 : index
    %c0_48 = arith.constant 0 : index
    %c0_49 = arith.constant 0 : index
    %51 = vector.load %arg5[%c4_47, %c0_48, %c0_49] : memref<5x128x128xbf16, #tpu.memory_space<vmem>>, vector<1x128x128xbf16>
    %52 = vector.shape_cast %51 : vector<1x128x128xbf16> to vector<128x128xbf16>
    %cst_50 = arith.constant dense<0.000000e+00> : vector<256x128xf32>
    %53 = tpu.matmul %50, %52, %cst_50 {dimension_numbers = #tpu.dot_dimension_numbers<[1], [0], [0], [1], [0, 0, 1, 1], [], []>} : vector<256x128xbf16>, vector<128x128xbf16>, vector<256x128xf32> -> vector<256x128xf32>
    %54 = arith.addf %47, %53 : vector<256x128xf32>
    %c0_51 = arith.constant 0 : index
    %c0_52 = arith.constant 0 : index
    %55 = vector.load %arg6[%c0_51, %c0_52] : memref<1x128xf32, #tpu.memory_space<vmem>>, vector<1x128xf32>
    %56 = vector.broadcast %55 : vector<1x128xf32> to vector<256x128xf32>
    %57 = arith.mulf %54, %56 : vector<256x128xf32>
    %c0_53 = arith.constant 0 : index
    %c0_54 = arith.constant 0 : index
    %58 = vector.load %arg7[%c0_53, %c0_54] : memref<1x128xf32, #tpu.memory_space<vmem>>, vector<1x128xf32>
    %59 = vector.broadcast %58 : vector<1x128xf32> to vector<256x128xf32>
    %60 = arith.addf %57, %59 : vector<256x128xf32>
    %cst_55 = arith.constant 0.000000e+00 : f32
    %61 = vector.broadcast %cst_55 : f32 to vector<256x128xf32>
    %62 = arith.cmpf ogt, %60, %61 : vector<256x128xf32>
    %cst_56 = arith.constant 0.00999999977 : f32
    %63 = vector.broadcast %cst_56 : f32 to vector<256x128xf32>
    %64 = arith.mulf %63, %60 : vector<256x128xf32>
    %65 = arith.select %62, %60, %64 : vector<256x128xi1>, vector<256x128xf32>
    %66 = vector.shape_cast %65 : vector<256x128xf32> to vector<16x16x128xf32>
    %c0_57 = arith.constant 0 : index
    %c2_58 = arith.constant 2 : index
    %c0_59 = arith.constant 0 : index
    %67 = vector.load %arg14[%c0_57, %c2_58, %c0_59] : memref<16x36x128xf32, #tpu.memory_space<vmem>>, vector<16x16x128xf32>
    tpu.vector_store %arg14[%c0_57, %c2_58, %c0_59], %66 {strides = array<i32>} : memref<16x36x128xf32, #tpu.memory_space<vmem>>, vector<16x16x128xf32>,
    %cst_60 = arith.constant 0.000000e+00 : f32
    %68 = vector.broadcast %cst_60 : f32 to vector<16x1x128xf32>
    %c0_61 = arith.constant 0 : index
    %c18 = arith.constant 18 : index
    %c0_62 = arith.constant 0 : index
    %69 = vector.load %arg14[%c0_61, %c18, %c0_62] : memref<16x36x128xf32, #tpu.memory_space<vmem>>, vector<16x1x128xf32>
    tpu.vector_store %arg14[%c0_61, %c18, %c0_62], %68 {strides = array<i32>} : memref<16x36x128xf32, #tpu.memory_space<vmem>>, vector<16x1x128xf32>,
    %c0_63 = arith.constant 0 : index
    %c0_64 = arith.constant 0 : index
    %c0_65 = arith.constant 0 : index
    %70 = tpu.strided_load %arg14[%c0_63, %c0_64, %c0_65] {strides = array<i32: 1, 2, 1>} : memref<16x36x128xf32, #tpu.memory_space<vmem>>, vector<16x8x128xf32>
    %71 = vector.shape_cast %70 : vector<16x8x128xf32> to vector<128x128xf32>
    %72 = arith.truncf %71 : vector<128x128xf32> to vector<128x128xbf16>
    %c0_66 = arith.constant 0 : index
    %c0_67 = arith.constant 0 : index
    %c0_68 = arith.constant 0 : index
    %73 = vector.load %arg8[%c0_66, %c0_67, %c0_68] : memref<5x128x128xbf16, #tpu.memory_space<vmem>>, vector<1x128x128xbf16>
    %74 = vector.shape_cast %73 : vector<1x128x128xbf16> to vector<128x128xbf16>
    %cst_69 = arith.constant dense<0.000000e+00> : vector<128x128xf32>
    %75 = tpu.matmul %72, %74, %cst_69 {dimension_numbers = #tpu.dot_dimension_numbers<[1], [0], [0], [1], [0, 0, 1, 1], [], []>} : vector<128x128xbf16>, vector<128x128xbf16>, vector<128x128xf32> -> vector<128x128xf32>
    %c0_70 = arith.constant 0 : index
    %c1_71 = arith.constant 1 : index
    %c0_72 = arith.constant 0 : index
    %76 = tpu.strided_load %arg14[%c0_70, %c1_71, %c0_72] {strides = array<i32: 1, 2, 1>} : memref<16x36x128xf32, #tpu.memory_space<vmem>>, vector<16x8x128xf32>
    %77 = vector.shape_cast %76 : vector<16x8x128xf32> to vector<128x128xf32>
    %78 = arith.truncf %77 : vector<128x128xf32> to vector<128x128xbf16>
    %c1_73 = arith.constant 1 : index
    %c0_74 = arith.constant 0 : index
    %c0_75 = arith.constant 0 : index
    %79 = vector.load %arg8[%c1_73, %c0_74, %c0_75] : memref<5x128x128xbf16, #tpu.memory_space<vmem>>, vector<1x128x128xbf16>
    %80 = vector.shape_cast %79 : vector<1x128x128xbf16> to vector<128x128xbf16>
    %cst_76 = arith.constant dense<0.000000e+00> : vector<128x128xf32>
    %81 = tpu.matmul %78, %80, %cst_76 {dimension_numbers = #tpu.dot_dimension_numbers<[1], [0], [0], [1], [0, 0, 1, 1], [], []>} : vector<128x128xbf16>, vector<128x128xbf16>, vector<128x128xf32> -> vector<128x128xf32>
    %82 = arith.addf %75, %81 : vector<128x128xf32>
    %c0_77 = arith.constant 0 : index
    %c2_78 = arith.constant 2 : index
    %c0_79 = arith.constant 0 : index
    %83 = tpu.strided_load %arg14[%c0_77, %c2_78, %c0_79] {strides = array<i32: 1, 2, 1>} : memref<16x36x128xf32, #tpu.memory_space<vmem>>, vector<16x8x128xf32>
    %84 = vector.shape_cast %83 : vector<16x8x128xf32> to vector<128x128xf32>
    %85 = arith.truncf %84 : vector<128x128xf32> to vector<128x128xbf16>
    %c2_80 = arith.constant 2 : index
    %c0_81 = arith.constant 0 : index
    %c0_82 = arith.constant 0 : index
    %86 = vector.load %arg8[%c2_80, %c0_81, %c0_82] : memref<5x128x128xbf16, #tpu.memory_space<vmem>>, vector<1x128x128xbf16>
    %87 = vector.shape_cast %86 : vector<1x128x128xbf16> to vector<128x128xbf16>
    %cst_83 = arith.constant dense<0.000000e+00> : vector<128x128xf32>
    %88 = tpu.matmul %85, %87, %cst_83 {dimension_numbers = #tpu.dot_dimension_numbers<[1], [0], [0], [1], [0, 0, 1, 1], [], []>} : vector<128x128xbf16>, vector<128x128xbf16>, vector<128x128xf32> -> vector<128x128xf32>
    %89 = arith.addf %82, %88 : vector<128x128xf32>
    %c0_84 = arith.constant 0 : index
    %c3_85 = arith.constant 3 : index
    %c0_86 = arith.constant 0 : index
    %90 = tpu.strided_load %arg14[%c0_84, %c3_85, %c0_86] {strides = array<i32: 1, 2, 1>} : memref<16x36x128xf32, #tpu.memory_space<vmem>>, vector<16x8x128xf32>
    %91 = vector.shape_cast %90 : vector<16x8x128xf32> to vector<128x128xf32>
    %92 = arith.truncf %91 : vector<128x128xf32> to vector<128x128xbf16>
    %c3_87 = arith.constant 3 : index
    %c0_88 = arith.constant 0 : index
    %c0_89 = arith.constant 0 : index
    %93 = vector.load %arg8[%c3_87, %c0_88, %c0_89] : memref<5x128x128xbf16, #tpu.memory_space<vmem>>, vector<1x128x128xbf16>
    %94 = vector.shape_cast %93 : vector<1x128x128xbf16> to vector<128x128xbf16>
    %cst_90 = arith.constant dense<0.000000e+00> : vector<128x128xf32>
    %95 = tpu.matmul %92, %94, %cst_90 {dimension_numbers = #tpu.dot_dimension_numbers<[1], [0], [0], [1], [0, 0, 1, 1], [], []>} : vector<128x128xbf16>, vector<128x128xbf16>, vector<128x128xf32> -> vector<128x128xf32>
    %96 = arith.addf %89, %95 : vector<128x128xf32>
    %c0_91 = arith.constant 0 : index
    %c4_92 = arith.constant 4 : index
    %c0_93 = arith.constant 0 : index
    %97 = tpu.strided_load %arg14[%c0_91, %c4_92, %c0_93] {strides = array<i32: 1, 2, 1>} : memref<16x36x128xf32, #tpu.memory_space<vmem>>, vector<16x8x128xf32>
    %98 = vector.shape_cast %97 : vector<16x8x128xf32> to vector<128x128xf32>
    %99 = arith.truncf %98 : vector<128x128xf32> to vector<128x128xbf16>
    %c4_94 = arith.constant 4 : index
    %c0_95 = arith.constant 0 : index
    %c0_96 = arith.constant 0 : index
    %100 = vector.load %arg8[%c4_94, %c0_95, %c0_96] : memref<5x128x128xbf16, #tpu.memory_space<vmem>>, vector<1x128x128xbf16>
    %101 = vector.shape_cast %100 : vector<1x128x128xbf16> to vector<128x128xbf16>
    %cst_97 = arith.constant dense<0.000000e+00> : vector<128x128xf32>
    %102 = tpu.matmul %99, %101, %cst_97 {dimension_numbers = #tpu.dot_dimension_numbers<[1], [0], [0], [1], [0, 0, 1, 1], [], []>} : vector<128x128xbf16>, vector<128x128xbf16>, vector<128x128xf32> -> vector<128x128xf32>
    %103 = arith.addf %96, %102 : vector<128x128xf32>
    %c0_98 = arith.constant 0 : index
    %c0_99 = arith.constant 0 : index
    %104 = vector.load %arg9[%c0_98, %c0_99] : memref<1x128xf32, #tpu.memory_space<vmem>>, vector<1x128xf32>
    %105 = vector.broadcast %104 : vector<1x128xf32> to vector<128x128xf32>
    %106 = arith.mulf %103, %105 : vector<128x128xf32>
    %c0_100 = arith.constant 0 : index
    %c0_101 = arith.constant 0 : index
    %107 = vector.load %arg10[%c0_100, %c0_101] : memref<1x128xf32, #tpu.memory_space<vmem>>, vector<1x128xf32>
    %108 = vector.broadcast %107 : vector<1x128xf32> to vector<128x128xf32>
    %109 = arith.addf %106, %108 : vector<128x128xf32>
    %cst_102 = arith.constant 0.000000e+00 : f32
    %110 = vector.broadcast %cst_102 : f32 to vector<128x128xf32>
    %111 = arith.cmpf ogt, %109, %110 : vector<128x128xf32>
    %cst_103 = arith.constant 0.00999999977 : f32
    %112 = vector.broadcast %cst_103 : f32 to vector<128x128xf32>
    %113 = arith.mulf %112, %109 : vector<128x128xf32>
    %114 = arith.select %111, %109, %113 : vector<128x128xi1>, vector<128x128xf32>
    %115 = vector.shape_cast %114 : vector<128x128xf32> to vector<16x8x128xf32>
    %116 = vector.extract_strided_slice %115 {offsets = [0, 0, 0], sizes = [16, 1, 128], strides = [1, 1, 1]} : vector<16x8x128xf32> to vector<16x1x128xf32>
    %117 = vector.shape_cast %116 : vector<16x1x128xf32> to vector<16x128xf32>
    %118 = arith.truncf %117 : vector<16x128xf32> to vector<16x128xbf16>
    %c0_104 = arith.constant 0 : index
    %c0_105 = arith.constant 0 : index
    %c0_106 = arith.constant 0 : index
    %119 = vector.load %arg11[%c0_104, %c0_105, %c0_106] : memref<8x128x128xbf16, #tpu.memory_space<vmem>>, vector<1x128x128xbf16>
    %120 = vector.shape_cast %119 : vector<1x128x128xbf16> to vector<128x128xbf16>
    %cst_107 = arith.constant dense<0.000000e+00> : vector<16x128xf32>
    %121 = tpu.matmul %118, %120, %cst_107 {dimension_numbers = #tpu.dot_dimension_numbers<[1], [0], [0], [1], [0, 0, 1, 1], [], []>} : vector<16x128xbf16>, vector<128x128xbf16>, vector<16x128xf32> -> vector<16x128xf32>
    %122 = vector.extract_strided_slice %115 {offsets = [0, 1, 0], sizes = [16, 1, 128], strides = [1, 1, 1]} : vector<16x8x128xf32> to vector<16x1x128xf32>
    %123 = vector.shape_cast %122 : vector<16x1x128xf32> to vector<16x128xf32>
    %124 = arith.truncf %123 : vector<16x128xf32> to vector<16x128xbf16>
    %c1_108 = arith.constant 1 : index
    %c0_109 = arith.constant 0 : index
    %c0_110 = arith.constant 0 : index
    %125 = vector.load %arg11[%c1_108, %c0_109, %c0_110] : memref<8x128x128xbf16, #tpu.memory_space<vmem>>, vector<1x128x128xbf16>
    %126 = vector.shape_cast %125 : vector<1x128x128xbf16> to vector<128x128xbf16>
    %cst_111 = arith.constant dense<0.000000e+00> : vector<16x128xf32>
    %127 = tpu.matmul %124, %126, %cst_111 {dimension_numbers = #tpu.dot_dimension_numbers<[1], [0], [0], [1], [0, 0, 1, 1], [], []>} : vector<16x128xbf16>, vector<128x128xbf16>, vector<16x128xf32> -> vector<16x128xf32>
    %128 = arith.addf %121, %127 : vector<16x128xf32>
    %129 = vector.extract_strided_slice %115 {offsets = [0, 2, 0], sizes = [16, 1, 128], strides = [1, 1, 1]} : vector<16x8x128xf32> to vector<16x1x128xf32>
    %130 = vector.shape_cast %129 : vector<16x1x128xf32> to vector<16x128xf32>
    %131 = arith.truncf %130 : vector<16x128xf32> to vector<16x128xbf16>
    %c2_112 = arith.constant 2 : index
    %c0_113 = arith.constant 0 : index
    %c0_114 = arith.constant 0 : index
    %132 = vector.load %arg11[%c2_112, %c0_113, %c0_114] : memref<8x128x128xbf16, #tpu.memory_space<vmem>>, vector<1x128x128xbf16>
    %133 = vector.shape_cast %132 : vector<1x128x128xbf16> to vector<128x128xbf16>
    %cst_115 = arith.constant dense<0.000000e+00> : vector<16x128xf32>
    %134 = tpu.matmul %131, %133, %cst_115 {dimension_numbers = #tpu.dot_dimension_numbers<[1], [0], [0], [1], [0, 0, 1, 1], [], []>} : vector<16x128xbf16>, vector<128x128xbf16>, vector<16x128xf32> -> vector<16x128xf32>
    %135 = arith.addf %128, %134 : vector<16x128xf32>
    %136 = vector.extract_strided_slice %115 {offsets = [0, 3, 0], sizes = [16, 1, 128], strides = [1, 1, 1]} : vector<16x8x128xf32> to vector<16x1x128xf32>
    %137 = vector.shape_cast %136 : vector<16x1x128xf32> to vector<16x128xf32>
    %138 = arith.truncf %137 : vector<16x128xf32> to vector<16x128xbf16>
    %c3_116 = arith.constant 3 : index
    %c0_117 = arith.constant 0 : index
    %c0_118 = arith.constant 0 : index
    %139 = vector.load %arg11[%c3_116, %c0_117, %c0_118] : memref<8x128x128xbf16, #tpu.memory_space<vmem>>, vector<1x128x128xbf16>
    %140 = vector.shape_cast %139 : vector<1x128x128xbf16> to vector<128x128xbf16>
    %cst_119 = arith.constant dense<0.000000e+00> : vector<16x128xf32>
    %141 = tpu.matmul %138, %140, %cst_119 {dimension_numbers = #tpu.dot_dimension_numbers<[1], [0], [0], [1], [0, 0, 1, 1], [], []>} : vector<16x128xbf16>, vector<128x128xbf16>, vector<16x128xf32> -> vector<16x128xf32>
    %142 = arith.addf %135, %141 : vector<16x128xf32>
    %143 = vector.extract_strided_slice %115 {offsets = [0, 4, 0], sizes = [16, 1, 128], strides = [1, 1, 1]} : vector<16x8x128xf32> to vector<16x1x128xf32>
    %144 = vector.shape_cast %143 : vector<16x1x128xf32> to vector<16x128xf32>
    %145 = arith.truncf %144 : vector<16x128xf32> to vector<16x128xbf16>
    %c4_120 = arith.constant 4 : index
    %c0_121 = arith.constant 0 : index
    %c0_122 = arith.constant 0 : index
    %146 = vector.load %arg11[%c4_120, %c0_121, %c0_122] : memref<8x128x128xbf16, #tpu.memory_space<vmem>>, vector<1x128x128xbf16>
    %147 = vector.shape_cast %146 : vector<1x128x128xbf16> to vector<128x128xbf16>
    %cst_123 = arith.constant dense<0.000000e+00> : vector<16x128xf32>
    %148 = tpu.matmul %145, %147, %cst_123 {dimension_numbers = #tpu.dot_dimension_numbers<[1], [0], [0], [1], [0, 0, 1, 1], [], []>} : vector<16x128xbf16>, vector<128x128xbf16>, vector<16x128xf32> -> vector<16x128xf32>
    %149 = arith.addf %142, %148 : vector<16x128xf32>
    %150 = vector.extract_strided_slice %115 {offsets = [0, 5, 0], sizes = [16, 1, 128], strides = [1, 1, 1]} : vector<16x8x128xf32> to vector<16x1x128xf32>
    %151 = vector.shape_cast %150 : vector<16x1x128xf32> to vector<16x128xf32>
    %152 = arith.truncf %151 : vector<16x128xf32> to vector<16x128xbf16>
    %c5 = arith.constant 5 : index
    %c0_124 = arith.constant 0 : index
    %c0_125 = arith.constant 0 : index
    %153 = vector.load %arg11[%c5, %c0_124, %c0_125] : memref<8x128x128xbf16, #tpu.memory_space<vmem>>, vector<1x128x128xbf16>
    %154 = vector.shape_cast %153 : vector<1x128x128xbf16> to vector<128x128xbf16>
    %cst_126 = arith.constant dense<0.000000e+00> : vector<16x128xf32>
    %155 = tpu.matmul %152, %154, %cst_126 {dimension_numbers = #tpu.dot_dimension_numbers<[1], [0], [0], [1], [0, 0, 1, 1], [], []>} : vector<16x128xbf16>, vector<128x128xbf16>, vector<16x128xf32> -> vector<16x128xf32>
    %156 = arith.addf %149, %155 : vector<16x128xf32>
    %157 = vector.extract_strided_slice %115 {offsets = [0, 6, 0], sizes = [16, 1, 128], strides = [1, 1, 1]} : vector<16x8x128xf32> to vector<16x1x128xf32>
    %158 = vector.shape_cast %157 : vector<16x1x128xf32> to vector<16x128xf32>
    %159 = arith.truncf %158 : vector<16x128xf32> to vector<16x128xbf16>
    %c6 = arith.constant 6 : index
    %c0_127 = arith.constant 0 : index
    %c0_128 = arith.constant 0 : index
    %160 = vector.load %arg11[%c6, %c0_127, %c0_128] : memref<8x128x128xbf16, #tpu.memory_space<vmem>>, vector<1x128x128xbf16>
    %161 = vector.shape_cast %160 : vector<1x128x128xbf16> to vector<128x128xbf16>
    %cst_129 = arith.constant dense<0.000000e+00> : vector<16x128xf32>
    %162 = tpu.matmul %159, %161, %cst_129 {dimension_numbers = #tpu.dot_dimension_numbers<[1], [0], [0], [1], [0, 0, 1, 1], [], []>} : vector<16x128xbf16>, vector<128x128xbf16>, vector<16x128xf32> -> vector<16x128xf32>
    %163 = arith.addf %156, %162 : vector<16x128xf32>
    %164 = vector.extract_strided_slice %115 {offsets = [0, 7, 0], sizes = [16, 1, 128], strides = [1, 1, 1]} : vector<16x8x128xf32> to vector<16x1x128xf32>
    %165 = vector.shape_cast %164 : vector<16x1x128xf32> to vector<16x128xf32>
    %166 = arith.truncf %165 : vector<16x128xf32> to vector<16x128xbf16>
    %c7 = arith.constant 7 : index
    %c0_130 = arith.constant 0 : index
    %c0_131 = arith.constant 0 : index
    %167 = vector.load %arg11[%c7, %c0_130, %c0_131] : memref<8x128x128xbf16, #tpu.memory_space<vmem>>, vector<1x128x128xbf16>
    %168 = vector.shape_cast %167 : vector<1x128x128xbf16> to vector<128x128xbf16>
    %cst_132 = arith.constant dense<0.000000e+00> : vector<16x128xf32>
    %169 = tpu.matmul %166, %168, %cst_132 {dimension_numbers = #tpu.dot_dimension_numbers<[1], [0], [0], [1], [0, 0, 1, 1], [], []>} : vector<16x128xbf16>, vector<128x128xbf16>, vector<16x128xf32> -> vector<16x128xf32>
    %170 = arith.addf %163, %169 : vector<16x128xf32>
    %c0_133 = arith.constant 0 : index
    %c0_134 = arith.constant 0 : index
    %171 = vector.load %arg12[%c0_133, %c0_134] : memref<1x128xf32, #tpu.memory_space<vmem>>, vector<1x128xf32>
    %172 = vector.broadcast %171 : vector<1x128xf32> to vector<16x128xf32>
    %173 = arith.addf %170, %172 : vector<16x128xf32>
    %c0_135 = arith.constant 0 : index
    %c0_136 = arith.constant 0 : index
    %174 = vector.load %arg13[%c0_135, %c0_136] : memref<16x128xf32, #tpu.memory_space<vmem>>, vector<16x128xf32>
    tpu.vector_store %arg13[%c0_135, %c0_136], %173 {strides = array<i32>} : memref<16x128xf32, #tpu.memory_space<vmem>>, vector<16x128xf32>,
    return
  }
  func.func @transform_0(%arg0: i32) -> (i32, i32, i32) {
    %c0_i32 = arith.constant 0 : i32
    %c0_i32_0 = arith.constant 0 : i32
    %c0_i32_1 = arith.constant 0 : i32
    return %arg0, %c0_i32, %c0_i32_0 : i32, i32, i32
  }
  func.func @transform_1(%arg0: i32) -> (i32, i32) {
    %c0_i32 = arith.constant 0 : i32
    %c0_i32_0 = arith.constant 0 : i32
    %c0_i32_1 = arith.constant 0 : i32
    return %c0_i32, %c0_i32_0 : i32, i32
  }
  func.func @transform_2(%arg0: i32) -> (i32, i32) {
    %c0_i32 = arith.constant 0 : i32
    %c0_i32_0 = arith.constant 0 : i32
    %c0_i32_1 = arith.constant 0 : i32
    return %c0_i32, %c0_i32_0 : i32, i32
  }
  func.func @transform_3(%arg0: i32) -> (i32, i32) {
    %c0_i32 = arith.constant 0 : i32
    %c0_i32_0 = arith.constant 0 : i32
    %c0_i32_1 = arith.constant 0 : i32
    return %c0_i32, %c0_i32_0 : i32, i32
  }
  func.func @transform_4(%arg0: i32) -> (i32, i32, i32) {
    %c0_i32 = arith.constant 0 : i32
    %c0_i32_0 = arith.constant 0 : i32
    %c0_i32_1 = arith.constant 0 : i32
    %c0_i32_2 = arith.constant 0 : i32
    return %c0_i32, %c0_i32_0, %c0_i32_1 : i32, i32, i32
  }
  func.func @transform_5(%arg0: i32) -> (i32, i32) {
    %c0_i32 = arith.constant 0 : i32
    %c0_i32_0 = arith.constant 0 : i32
    %c0_i32_1 = arith.constant 0 : i32
    return %c0_i32, %c0_i32_0 : i32, i32
  }
  func.func @transform_6(%arg0: i32) -> (i32, i32) {
    %c0_i32 = arith.constant 0 : i32
    %c0_i32_0 = arith.constant 0 : i32
    %c0_i32_1 = arith.constant 0 : i32
    return %c0_i32, %c0_i32_0 : i32, i32
  }
  func.func @transform_7(%arg0: i32) -> (i32, i32, i32) {
    %c0_i32 = arith.constant 0 : i32
    %c0_i32_0 = arith.constant 0 : i32
    %c0_i32_1 = arith.constant 0 : i32
    %c0_i32_2 = arith.constant 0 : i32
    return %c0_i32, %c0_i32_0, %c0_i32_1 : i32, i32, i32
  }
  func.func @transform_8(%arg0: i32) -> (i32, i32) {
    %c0_i32 = arith.constant 0 : i32
    %c0_i32_0 = arith.constant 0 : i32
    %c0_i32_1 = arith.constant 0 : i32
    return %c0_i32, %c0_i32_0 : i32, i32
  }
  func.func @transform_9(%arg0: i32) -> (i32, i32) {
    %c0_i32 = arith.constant 0 : i32
    %c0_i32_0 = arith.constant 0 : i32
    %c0_i32_1 = arith.constant 0 : i32
    return %c0_i32, %c0_i32_0 : i32, i32
  }
  func.func @transform_10(%arg0: i32) -> (i32, i32, i32) {
    %c0_i32 = arith.constant 0 : i32
    %c0_i32_0 = arith.constant 0 : i32
    %c0_i32_1 = arith.constant 0 : i32
    %c0_i32_2 = arith.constant 0 : i32
    return %c0_i32, %c0_i32_0, %c0_i32_1 : i32, i32, i32
  }
  func.func @transform_11(%arg0: i32) -> (i32, i32) {
    %c0_i32 = arith.constant 0 : i32
    %c0_i32_0 = arith.constant 0 : i32
    %c0_i32_1 = arith.constant 0 : i32
    return %c0_i32, %c0_i32_0 : i32, i32
  }
  func.func @transform_12(%arg0: i32) -> (i32, i32) {
    %c0_i32 = arith.constant 0 : i32
    %c0_i32_0 = arith.constant 0 : i32
    return %arg0, %c0_i32 : i32, i32
  }
}

</mosaic_0001>

<llo_original>
// kernel: resunit_forward.1
$region0: #{resunit_forward.1}
  #allocation0 [shape = 'u32[]', space=smem, size = 0x4, offset = 0x4, fixed_abs, tag = 'smem constant byte address 0x4 - core index']
  #allocation1 [shape = 'u32[144,128]{1,0:T(1,128)}', space=vmem, size = 0x12000, scoped, tag = 'internal scratch']
  #allocation2 [shape = 'f32[16,36,128]{2,1,0:T(8,128)}', space=vmem, size = 0x50000, scoped, tag = 'scratch operand']
  %s0 = inlined_call_operand.vmem [shape: bf16[16,32,8], index: 0, kind: input, shape index: {}]
  %s1 = inlined_call_operand.vmem [shape: bf16[8,128], index: 1, kind: input, shape index: {}]
  %s2 = inlined_call_operand.vmem [shape: f32[1,128], index: 2, kind: input, shape index: {}]
  %s3 = inlined_call_operand.vmem [shape: f32[1,128], index: 3, kind: input, shape index: {}]
  %s4 = inlined_call_operand.vmem [shape: bf16[5,128,128], index: 4, kind: input, shape index: {}]
  %s5 = inlined_call_operand.vmem [shape: f32[1,128], index: 5, kind: input, shape index: {}]
  %s6 = inlined_call_operand.vmem [shape: f32[1,128], index: 6, kind: input, shape index: {}]
  %s7 = inlined_call_operand.hbm [shape: bf16[5,128,128], index: 7, kind: input, shape index: {}]
  %s8 = inlined_call_operand.vmem [shape: f32[1,128], index: 8, kind: input, shape index: {}]
  %s9 = inlined_call_operand.vmem [shape: f32[1,128], index: 9, kind: input, shape index: {}]
  %s10 = inlined_call_operand.hbm [shape: bf16[8,128,128], index: 10, kind: input, shape index: {}]
  %s11 = inlined_call_operand.vmem [shape: f32[1,128], index: 11, kind: input, shape index: {}]
  %s12 = inlined_call_operand.vmem [shape: f32[16,128], index: 12, kind: output, shape index: {}]
  %s13 = sld [smem:[#allocation0]]
  $region66: #{resunit_forward.1} parent=0
    _
  %s15 = ssub.s32 1, %s13
  %s16 = scalar_select 0, %s15, %s13
  $region1: #{resunit_forward.1} parent=0
    #allocation3 [shape = 'u8[163840]{0}', space=vmem, size = 0x28000, scoped, tag = 'input window, operand 7, single buffered']
    #allocation4 [shape = 's32[1]{0}', space=sflag, size = 0x4, scoped, tag = 'scoped memory for resunit_forward.1']
    #allocation5 [shape = 'u8[262144]{0}', space=vmem, size = 0x40000, scoped, tag = 'input window, operand 10, single buffered']
    #allocation6 [shape = 's32[1]{0}', space=sflag, size = 0x4, scoped, tag = 'scoped memory for resunit_forward.1']
    %17 = vsyncpa [#allocation4], 0
    %18 = vsyncpa [#allocation6], 0
    // Predicated region
    $region2: #{resunit_forward.1} parent=1 // pred_check
      _
    $region3: #{resunit_forward.1} parent=1 // pred_check_branch
      %20 = sbr.rel (0) target = $region5
    $region4: #{resunit_forward.1} parent=1 // pred_region
      _
    $region5: #{resunit_forward.1} parent=1 // pred_fallthru
      _
    // Predicated region
    $region6: #{resunit_forward.1} parent=1 // pred_check
      _
    $region7: #{resunit_forward.1} parent=1 // pred_check_branch
      %22 = sbr.rel (0) target = $region9
    $region8: #{resunit_forward.1} parent=1 // pred_region
      _
    $region9: #{resunit_forward.1} parent=1 // pred_fallthru
      _
    // Predicated region
    $region10: #{resunit_forward.1} parent=1 // pred_check
      _
    $region11: #{resunit_forward.1} parent=1 // pred_check_branch
      %24 = sbr.rel (0) target = $region13
    $region12: #{resunit_forward.1} parent=1 // pred_region
      _
    $region13: #{resunit_forward.1} parent=1 // pred_fallthru
      _
    // Predicated region
    $region14: #{resunit_forward.1} parent=1 // pred_check
      _
    $region15: #{resunit_forward.1} parent=1 // pred_check_branch
      %26 = sbr.rel (0) target = $region17
    $region16: #{resunit_forward.1} parent=1 // pred_region
      _
    $region17: #{resunit_forward.1} parent=1 // pred_fallthru
      _
    // Predicated region
    $region18: #{resunit_forward.1} parent=1 // pred_check
      _
    $region19: #{resunit_forward.1} parent=1 // pred_check_branch
      %28 = sbr.rel (0) target = $region21
    $region20: #{resunit_forward.1} parent=1 // pred_region
      _
    $region21: #{resunit_forward.1} parent=1 // pred_fallthru
      _
    // Predicated region
    $region22: #{resunit_forward.1} parent=1 // pred_check
      _
    $region23: #{resunit_forward.1} parent=1 // pred_check_branch
      %30 = sbr.rel (0) target = $region25
    $region24: #{resunit_forward.1} parent=1 // pred_region
      _
    $region25: #{resunit_forward.1} parent=1 // pred_fallthru
      _
    // Predicated region
    $region26: #{resunit_forward.1} parent=1 // pred_check
      _
    $region27: #{resunit_forward.1} parent=1 // pred_check_branch
      %32 = sbr.rel (0) target = $region29
    $region28: #{resunit_forward.1} parent=1 // pred_region
      _
    $region29: #{resunit_forward.1} parent=1 // pred_fallthru
      _
    // Predicated region
    $region30: #{resunit_forward.1} parent=1 // pred_check
      _
    $region31: #{resunit_forward.1} parent=1 // pred_check_branch
      %34 = sbr.rel (0) target = $region33
    $region32: #{resunit_forward.1} parent=1 // pred_region
      %s36 = ssub.s32 5120, 5120
      %37 = vsyncadd [#allocation4], %s36
      %s38 = sshll.u32 [#allocation3], 4
      %s39 = int_to_ptr.vmem [resolvable:$true] %s38
      %44 = dma.hbm_to_vmem [thread:$0]  %s7, 5120, %s39, [#allocation4], 64, 64, 4
    $region33: #{resunit_forward.1} parent=1 // pred_fallthru
      _
    // Predicated region
    $region34: #{resunit_forward.1} parent=1 // pred_check
      _
    $region35: #{resunit_forward.1} parent=1 // pred_check_branch
      %46 = sbr.rel (0) target = $region37
    $region36: #{resunit_forward.1} parent=1 // pred_region
      _
    $region37: #{resunit_forward.1} parent=1 // pred_fallthru
      _
    // Predicated region
    $region38: #{resunit_forward.1} parent=1 // pred_check
      _
    $region39: #{resunit_forward.1} parent=1 // pred_check_branch
      %48 = sbr.rel (0) target = $region41
    $region40: #{resunit_forward.1} parent=1 // pred_region
      _
    $region41: #{resunit_forward.1} parent=1 // pred_fallthru
      _
    // Predicated region
    $region42: #{resunit_forward.1} parent=1 // pred_check
      _
    $region43: #{resunit_forward.1} parent=1 // pred_check_branch
      %50 = sbr.rel (0) target = $region45
    $region44: #{resunit_forward.1} parent=1 // pred_region
      %s52 = ssub.s32 8192, 8192
      %53 = vsyncadd [#allocation6], %s52
      %s54 = sshll.u32 [#allocation5], 4
      %s55 = int_to_ptr.vmem [resolvable:$true] %s54
      %60 = dma.hbm_to_vmem [thread:$0]  %s10, 8192, %s55, [#allocation6], 64, 64, 4
    $region45: #{resunit_forward.1} parent=1 // pred_fallthru
      _
    // Predicated region
    $region46: #{resunit_forward.1} parent=1 // pred_check
      _
    $region47: #{resunit_forward.1} parent=1 // pred_check_branch
      %62 = sbr.rel (0) target = $region49
    $region48: #{resunit_forward.1} parent=1 // pred_region
      _
    $region49: #{resunit_forward.1} parent=1 // pred_fallthru
      _
    // Predicated region
    $region50: #{resunit_forward.1} parent=1 // pred_check
      _
    $region51: #{resunit_forward.1} parent=1 // pred_check_branch
      %64 = sbr.rel (0) target = $region53
    $region52: #{resunit_forward.1} parent=1 // pred_region
      %65 = dma.done [#allocation4], 5120
    $region53: #{resunit_forward.1} parent=1 // pred_fallthru
      _
    // Predicated region
    $region54: #{resunit_forward.1} parent=1 // pred_check
      _
    $region55: #{resunit_forward.1} parent=1 // pred_check_branch
      %67 = sbr.rel (0) target = $region57
    $region56: #{resunit_forward.1} parent=1 // pred_region
      %68 = dma.done [#allocation6], 8192
    $region57: #{resunit_forward.1} parent=1 // pred_fallthru
      _
    %v70 = vld [vmem:[%s0] sm:$0xf]
    %v71 = vld [vmem:[%s0 + $0x4] sm:$0xf]
    %v72 = vld [vmem:[%s0 + $0x8] sm:$0xf]
    %v73 = vld [vmem:[%s0 + $0xc] sm:$0xf]
    %v74 = vld [vmem:[%s0 + $0x10] sm:$0xf]
    %v75 = vld [vmem:[%s0 + $0x14] sm:$0xf]
    %v76 = vld [vmem:[%s0 + $0x18] sm:$0xf]
    %v77 = vld [vmem:[%s0 + $0x1c] sm:$0xf]
    %v78 = vld [vmem:[%s0 + $0x20] sm:$0xf]
    %v79 = vld [vmem:[%s0 + $0x24] sm:$0xf]
    %v80 = vld [vmem:[%s0 + $0x28] sm:$0xf]
    %v81 = vld [vmem:[%s0 + $0x2c] sm:$0xf]
    %v82 = vld [vmem:[%s0 + $0x30] sm:$0xf]
    %v83 = vld [vmem:[%s0 + $0x34] sm:$0xf]
    %v84 = vld [vmem:[%s0 + $0x38] sm:$0xf]
    %v85 = vld [vmem:[%s0 + $0x3c] sm:$0xf]
    %v86 = vld [vmem:[%s0 + $0x40] sm:$0xf]
    %v87 = vld [vmem:[%s0 + $0x44] sm:$0xf]
    %v88 = vld [vmem:[%s0 + $0x48] sm:$0xf]
    %v89 = vld [vmem:[%s0 + $0x4c] sm:$0xf]
    %v90 = vld [vmem:[%s0 + $0x50] sm:$0xf]
    %v91 = vld [vmem:[%s0 + $0x54] sm:$0xf]
    %v92 = vld [vmem:[%s0 + $0x58] sm:$0xf]
    %v93 = vld [vmem:[%s0 + $0x5c] sm:$0xf]
    %v94 = vld [vmem:[%s0 + $0x60] sm:$0xf]
    %v95 = vld [vmem:[%s0 + $0x64] sm:$0xf]
    %v96 = vld [vmem:[%s0 + $0x68] sm:$0xf]
    %v97 = vld [vmem:[%s0 + $0x6c] sm:$0xf]
    %v98 = vld [vmem:[%s0 + $0x70] sm:$0xf]
    %v99 = vld [vmem:[%s0 + $0x74] sm:$0xf]
    %v100 = vld [vmem:[%s0 + $0x78] sm:$0xf]
    %v101 = vld [vmem:[%s0 + $0x7c] sm:$0xf]
    %v102 = vld [vmem:[%s0 + $0x80] sm:$0xf]
    %v103 = vld [vmem:[%s0 + $0x84] sm:$0xf]
    %v104 = vld [vmem:[%s0 + $0x88] sm:$0xf]
    %v105 = vld [vmem:[%s0 + $0x8c] sm:$0xf]
    %v106 = vld [vmem:[%s0 + $0x90] sm:$0xf]
    %v107 = vld [vmem:[%s0 + $0x94] sm:$0xf]
    %v108 = vld [vmem:[%s0 + $0x98] sm:$0xf]
    %v109 = vld [vmem:[%s0 + $0x9c] sm:$0xf]
    %v110 = vld [vmem:[%s0 + $0xa0] sm:$0xf]
    %v111 = vld [vmem:[%s0 + $0xa4] sm:$0xf]
    %v112 = vld [vmem:[%s0 + $0xa8] sm:$0xf]
    %v113 = vld [vmem:[%s0 + $0xac] sm:$0xf]
    %v114 = vld [vmem:[%s0 + $0xb0] sm:$0xf]
    %v115 = vld [vmem:[%s0 + $0xb4] sm:$0xf]
    %v116 = vld [vmem:[%s0 + $0xb8] sm:$0xf]
    %v117 = vld [vmem:[%s0 + $0xbc] sm:$0xf]
    %v118 = vld [vmem:[%s0 + $0xc0] sm:$0xf]
    %v119 = vld [vmem:[%s0 + $0xc4] sm:$0xf]
    %v120 = vld [vmem:[%s0 + $0xc8] sm:$0xf]
    %v121 = vld [vmem:[%s0 + $0xcc] sm:$0xf]
    %v122 = vld [vmem:[%s0 + $0xd0] sm:$0xf]
    %v123 = vld [vmem:[%s0 + $0xd4] sm:$0xf]
    %v124 = vld [vmem:[%s0 + $0xd8] sm:$0xf]
    %v125 = vld [vmem:[%s0 + $0xdc] sm:$0xf]
    %v126 = vld [vmem:[%s0 + $0xe0] sm:$0xf]
    %v127 = vld [vmem:[%s0 + $0xe4] sm:$0xf]
    %v128 = vld [vmem:[%s0 + $0xe8] sm:$0xf]
    %v129 = vld [vmem:[%s0 + $0xec] sm:$0xf]
    %v130 = vld [vmem:[%s0 + $0xf0] sm:$0xf]
    %v131 = vld [vmem:[%s0 + $0xf4] sm:$0xf]
    %v132 = vld [vmem:[%s0 + $0xf8] sm:$0xf]
    %v133 = vld [vmem:[%s0 + $0xfc] sm:$0xf]
    %v134 = vld [vmem:[%s1] sm:$0xf]
    %v199 = vunpack.c.l.b16 %v70
    %v200 = vunpack.c.l.b16 %v71
    %v201 = vunpack.c.l.b16 %v72
    %v202 = vunpack.c.l.b16 %v73
    %v203 = vunpack.c.l.b16 %v74
    %v204 = vunpack.c.l.b16 %v75
    %v205 = vunpack.c.l.b16 %v76
    %v206 = vunpack.c.l.b16 %v77
    %v207 = vunpack.c.l.b16 %v78
    %v208 = vunpack.c.l.b16 %v79
    %v209 = vunpack.c.l.b16 %v80
    %v210 = vunpack.c.l.b16 %v81
    %v211 = vunpack.c.l.b16 %v82
    %v212 = vunpack.c.l.b16 %v83
    %v213 = vunpack.c.l.b16 %v84
    %v214 = vunpack.c.l.b16 %v85
    %v215 = vunpack.c.l.b16 %v86
    %v216 = vunpack.c.l.b16 %v87
    %v217 = vunpack.c.l.b16 %v88
    %v218 = vunpack.c.l.b16 %v89
    %v219 = vunpack.c.l.b16 %v90
    %v220 = vunpack.c.l.b16 %v91
    %v221 = vunpack.c.l.b16 %v92
    %v222 = vunpack.c.l.b16 %v93
    %v223 = vunpack.c.l.b16 %v94
    %v224 = vunpack.c.l.b16 %v95
    %v225 = vunpack.c.l.b16 %v96
    %v226 = vunpack.c.l.b16 %v97
    %v227 = vunpack.c.l.b16 %v98
    %v228 = vunpack.c.l.b16 %v99
    %v229 = vunpack.c.l.b16 %v100
    %v230 = vunpack.c.l.b16 %v101
    %v231 = vunpack.c.l.b16 %v102
    %v232 = vunpack.c.l.b16 %v103
    %v233 = vunpack.c.l.b16 %v104
    %v234 = vunpack.c.l.b16 %v105
    %v235 = vunpack.c.l.b16 %v106
    %v236 = vunpack.c.l.b16 %v107
    %v237 = vunpack.c.l.b16 %v108
    %v238 = vunpack.c.l.b16 %v109
    %v239 = vunpack.c.l.b16 %v110
    %v240 = vunpack.c.l.b16 %v111
    %v241 = vunpack.c.l.b16 %v112
    %v242 = vunpack.c.l.b16 %v113
    %v243 = vunpack.c.l.b16 %v114
    %v244 = vunpack.c.l.b16 %v115
    %v245 = vunpack.c.l.b16 %v116
    %v246 = vunpack.c.l.b16 %v117
    %v247 = vunpack.c.l.b16 %v118
    %v248 = vunpack.c.l.b16 %v119
    %v249 = vunpack.c.l.b16 %v120
    %v250 = vunpack.c.l.b16 %v121
    %v251 = vunpack.c.l.b16 %v122
    %v252 = vunpack.c.l.b16 %v123
    %v253 = vunpack.c.l.b16 %v124
    %v254 = vunpack.c.l.b16 %v125
    %v255 = vunpack.c.l.b16 %v126
    %v256 = vunpack.c.l.b16 %v127
    %v257 = vunpack.c.l.b16 %v128
    %v258 = vunpack.c.l.b16 %v129
    %v259 = vunpack.c.l.b16 %v130
    %v260 = vunpack.c.l.b16 %v131
    %v261 = vunpack.c.l.b16 %v132
    %v262 = vunpack.c.l.b16 %v133
    %v263 = vpack.c.b16 %v200, %v199
    %v264 = vpack.c.b16 %v202, %v201
    %v265 = vpack.c.b16 %v204, %v203
    %v266 = vpack.c.b16 %v206, %v205
    %v267 = vpack.c.b16 %v208, %v207
    %v268 = vpack.c.b16 %v210, %v209
    %v269 = vpack.c.b16 %v212, %v211
    %v270 = vpack.c.b16 %v214, %v213
    %v271 = vpack.c.b16 %v216, %v215
    %v272 = vpack.c.b16 %v218, %v217
    %v273 = vpack.c.b16 %v220, %v219
    %v274 = vpack.c.b16 %v222, %v221
    %v275 = vpack.c.b16 %v224, %v223
    %v276 = vpack.c.b16 %v226, %v225
    %v277 = vpack.c.b16 %v228, %v227
    %v278 = vpack.c.b16 %v230, %v229
    %v279 = vpack.c.b16 %v232, %v231
    %v280 = vpack.c.b16 %v234, %v233
    %v281 = vpack.c.b16 %v236, %v235
    %v282 = vpack.c.b16 %v238, %v237
    %v283 = vpack.c.b16 %v240, %v239
    %v284 = vpack.c.b16 %v242, %v241
    %v285 = vpack.c.b16 %v244, %v243
    %v286 = vpack.c.b16 %v246, %v245
    %v287 = vpack.c.b16 %v248, %v247
    %v288 = vpack.c.b16 %v250, %v249
    %v289 = vpack.c.b16 %v252, %v251
    %v290 = vpack.c.b16 %v254, %v253
    %v291 = vpack.c.b16 %v256, %v255
    %v292 = vpack.c.b16 %v258, %v257
    %v293 = vpack.c.b16 %v260, %v259
    %v294 = vpack.c.b16 %v262, %v261
    %vm295 = vcmask 64512
    %v297 = vsel %vm295, %v263, 0
    %v300 = vsel %vm295, %v264, 0
    %v303 = vsel %vm295, %v265, 0
    %v306 = vsel %vm295, %v266, 0
    %v309 = vsel %vm295, %v267, 0
    %v312 = vsel %vm295, %v268, 0
    %v315 = vsel %vm295, %v269, 0
    %v318 = vsel %vm295, %v270, 0
    %v321 = vsel %vm295, %v271, 0
    %v324 = vsel %vm295, %v272, 0
    %v327 = vsel %vm295, %v273, 0
    %v330 = vsel %vm295, %v274, 0
    %v333 = vsel %vm295, %v275, 0
    %v336 = vsel %vm295, %v276, 0
    %v339 = vsel %vm295, %v277, 0
    %v342 = vsel %vm295, %v278, 0
    %v345 = vsel %vm295, %v279, 0
    %v348 = vsel %vm295, %v280, 0
    %v351 = vsel %vm295, %v281, 0
    %v354 = vsel %vm295, %v282, 0
    %v357 = vsel %vm295, %v283, 0
    %v360 = vsel %vm295, %v284, 0
    %v363 = vsel %vm295, %v285, 0
    %v366 = vsel %vm295, %v286, 0
    %v369 = vsel %vm295, %v287, 0
    %v372 = vsel %vm295, %v288, 0
    %v375 = vsel %vm295, %v289, 0
    %v378 = vsel %vm295, %v290, 0
    %v381 = vsel %vm295, %v291, 0
    %v384 = vsel %vm295, %v292, 0
    %v387 = vsel %vm295, %v293, 0
    %v390 = vsel %vm295, %v294, 0
    %vm392 = vcmask 1043456
    %v394 = vsel %vm392, %v134, 0
    %396 = vmatprep.subr.bf16.mxu0 0
    %397 = vmatpush1.bf16.msra.mxu0 0
    %398 = vmatprep.subr.bf16.mxu0 0
    %399 = vmatpush1.bf16.msra.mxu0 0
    %400 = vmatprep.subr.bf16.mxu0 0
    %401 = vmatpush1.bf16.msra.mxu0 0
    %402 = vmatprep.subr.bf16.mxu0 0
    %403 = vmatpush1.bf16.msra.mxu0 0
    %404 = vmatprep.subr.bf16.mxu0 0
    %405 = vmatpush1.bf16.msra.mxu0 0
    %406 = vmatprep.subr.bf16.mxu0 0
    %407 = vmatpush1.bf16.msra.mxu0 0
    %408 = vmatprep.subr.bf16.mxu0 0
    %409 = vmatpush1.bf16.msra.mxu0 0
    %410 = vmatprep.subr.bf16.mxu0 0
    %411 = vmatpush1.bf16.msra.mxu0 %v394
    %412 = vmatprep.subr.bf16.mxu0 0
    %413 = vmatpush2.bf16.msra.mxu0 0
    %414 = vmatprep.subr.bf16.mxu0 0
    %415 = vmatpush2.bf16.msra.mxu0 0
    %416 = vmatprep.subr.bf16.mxu0 0
    %417 = vmatpush2.bf16.msra.mxu0 0
    %418 = vmatprep.subr.bf16.mxu0 0
    %419 = vmatpush2.bf16.msra.mxu0 0
    %420 = vmatprep.subr.bf16.mxu0 0
    %421 = vmatpush2.bf16.msra.mxu0 0
    %422 = vmatprep.subr.bf16.mxu0 0
    %423 = vmatpush2.bf16.msra.mxu0 0
    %424 = vmatprep.subr.bf16.mxu0 0
    %425 = vmatpush2.bf16.msra.mxu0 0
    %426 = vmatprep.subr.bf16.mxu0 0
    %427 = vmatpush2.bf16.msra.mxu0 0
    %428 = vmatprep.mubr.bf16.mxu0 0
    %429 = vmatmul.mubr.bf16.gmra.mxu0 %v297
    %v430 = vpop.f32.mrf.mxu0
    %v431 = vadd.f32 0.0, %v430
    %v432 = vpop.f32.mrf.mxu0
    %v433 = vpop.f32.mrf.mxu0
    %v434 = vadd.f32 0.0, %v433
    %v435 = vpop.f32.mrf.mxu0
    %436 = vmatprep.mubr.bf16.mxu0 0
    %437 = vmatmul.mubr.bf16.gmra.mxu0 %v300
    %v438 = vpop.f32.mrf.mxu0
    %v439 = vadd.f32 0.0, %v438
    %v440 = vpop.f32.mrf.mxu0
    %v441 = vpop.f32.mrf.mxu0
    %v442 = vadd.f32 0.0, %v441
    %v443 = vpop.f32.mrf.mxu0
    %444 = vmatprep.mubr.bf16.mxu0 0
    %445 = vmatmul.mubr.bf16.gmra.mxu0 %v303
    %v446 = vpop.f32.mrf.mxu0
    %v447 = vadd.f32 0.0, %v446
    %v448 = vpop.f32.mrf.mxu0
    %v449 = vpop.f32.mrf.mxu0
    %v450 = vadd.f32 0.0, %v449
    %v451 = vpop.f32.mrf.mxu0
    %452 = vmatprep.mubr.bf16.mxu0 0
    %453 = vmatmul.mubr.bf16.gmra.mxu0 %v306
    %v454 = vpop.f32.mrf.mxu0
    %v455 = vadd.f32 0.0, %v454
    %v456 = vpop.f32.mrf.mxu0
    %v457 = vpop.f32.mrf.mxu0
    %v458 = vadd.f32 0.0, %v457
    %v459 = vpop.f32.mrf.mxu0
    %460 = vmatprep.mubr.bf16.mxu0 0
    %461 = vmatmul.mubr.bf16.gmra.mxu0 %v309
    %v462 = vpop.f32.mrf.mxu0
    %v463 = vadd.f32 0.0, %v462
    %v464 = vpop.f32.mrf.mxu0
    %v465 = vpop.f32.mrf.mxu0
    %v466 = vadd.f32 0.0, %v465
    %v467 = vpop.f32.mrf.mxu0
    %468 = vmatprep.mubr.bf16.mxu0 0
    %469 = vmatmul.mubr.bf16.gmra.mxu0 %v312
    %v470 = vpop.f32.mrf.mxu0
    %v471 = vadd.f32 0.0, %v470
    %v472 = vpop.f32.mrf.mxu0
    %v473 = vpop.f32.mrf.mxu0
    %v474 = vadd.f32 0.0, %v473
    %v475 = vpop.f32.mrf.mxu0
    %476 = vmatprep.mubr.bf16.mxu0 0
    %477 = vmatmul.mubr.bf16.gmra.mxu0 %v315
    %v478 = vpop.f32.mrf.mxu0
    %v479 = vadd.f32 0.0, %v478
    %v480 = vpop.f32.mrf.mxu0
    %v481 = vpop.f32.mrf.mxu0
    %v482 = vadd.f32 0.0, %v481
    %v483 = vpop.f32.mrf.mxu0
    %484 = vmatprep.mubr.bf16.mxu0 0
    %485 = vmatmul.mubr.bf16.gmra.mxu0 %v318
    %v486 = vpop.f32.mrf.mxu0
    %v487 = vadd.f32 0.0, %v486
    %v488 = vpop.f32.mrf.mxu0
    %v489 = vpop.f32.mrf.mxu0
    %v490 = vadd.f32 0.0, %v489
    %v491 = vpop.f32.mrf.mxu0
    %492 = vmatprep.mubr.bf16.mxu0 0
    %493 = vmatmul.mubr.bf16.gmra.mxu0 %v321
    %v494 = vpop.f32.mrf.mxu0
    %v495 = vadd.f32 0.0, %v494
    %v496 = vpop.f32.mrf.mxu0
    %v497 = vpop.f32.mrf.mxu0
    %v498 = vadd.f32 0.0, %v497
    %v499 = vpop.f32.mrf.mxu0
    %500 = vmatprep.mubr.bf16.mxu0 0
    %501 = vmatmul.mubr.bf16.gmra.mxu0 %v324
    %v502 = vpop.f32.mrf.mxu0
    %v503 = vadd.f32 0.0, %v502
    %v504 = vpop.f32.mrf.mxu0
    %v505 = vpop.f32.mrf.mxu0
    %v506 = vadd.f32 0.0, %v505
    %v507 = vpop.f32.mrf.mxu0
    %508 = vmatprep.mubr.bf16.mxu0 0
    %509 = vmatmul.mubr.bf16.gmra.mxu0 %v327
    %v510 = vpop.f32.mrf.mxu0
    %v511 = vadd.f32 0.0, %v510
    %v512 = vpop.f32.mrf.mxu0
    %v513 = vpop.f32.mrf.mxu0
    %v514 = vadd.f32 0.0, %v513
    %v515 = vpop.f32.mrf.mxu0
    %516 = vmatprep.mubr.bf16.mxu0 0
    %517 = vmatmul.mubr.bf16.gmra.mxu0 %v330
    %v518 = vpop.f32.mrf.mxu0
    %v519 = vadd.f32 0.0, %v518
    %v520 = vpop.f32.mrf.mxu0
    %v521 = vpop.f32.mrf.mxu0
    %v522 = vadd.f32 0.0, %v521
    %v523 = vpop.f32.mrf.mxu0
    %524 = vmatprep.mubr.bf16.mxu0 0
    %525 = vmatmul.mubr.bf16.gmra.mxu0 %v333
    %v526 = vpop.f32.mrf.mxu0
    %v527 = vadd.f32 0.0, %v526
    %v528 = vpop.f32.mrf.mxu0
    %v529 = vpop.f32.mrf.mxu0
    %v530 = vadd.f32 0.0, %v529
    %v531 = vpop.f32.mrf.mxu0
    %532 = vmatprep.mubr.bf16.mxu0 0
    %533 = vmatmul.mubr.bf16.gmra.mxu0 %v336
    %v534 = vpop.f32.mrf.mxu0
    %v535 = vadd.f32 0.0, %v534
    %v536 = vpop.f32.mrf.mxu0
    %v537 = vpop.f32.mrf.mxu0
    %v538 = vadd.f32 0.0, %v537
    %v539 = vpop.f32.mrf.mxu0
    %540 = vmatprep.mubr.bf16.mxu0 0
    %541 = vmatmul.mubr.bf16.gmra.mxu0 %v339
    %v542 = vpop.f32.mrf.mxu0
    %v543 = vadd.f32 0.0, %v542
    %v544 = vpop.f32.mrf.mxu0
    %v545 = vpop.f32.mrf.mxu0
    %v546 = vadd.f32 0.0, %v545
    %v547 = vpop.f32.mrf.mxu0
    %548 = vmatprep.mubr.bf16.mxu0 0
    %549 = vmatmul.mubr.bf16.gmra.mxu0 %v342
    %v550 = vpop.f32.mrf.mxu0
    %v551 = vadd.f32 0.0, %v550
    %v552 = vpop.f32.mrf.mxu0
    %v553 = vpop.f32.mrf.mxu0
    %v554 = vadd.f32 0.0, %v553
    %v555 = vpop.f32.mrf.mxu0
    %556 = vmatprep.mubr.bf16.mxu0 0
    %557 = vmatmul.mubr.bf16.gmra.mxu0 %v345
    %v558 = vpop.f32.mrf.mxu0
    %v559 = vadd.f32 0.0, %v558
    %v560 = vpop.f32.mrf.mxu0
    %v561 = vpop.f32.mrf.mxu0
    %v562 = vadd.f32 0.0, %v561
    %v563 = vpop.f32.mrf.mxu0
    %564 = vmatprep.mubr.bf16.mxu0 0
    %565 = vmatmul.mubr.bf16.gmra.mxu0 %v348
    %v566 = vpop.f32.mrf.mxu0
    %v567 = vadd.f32 0.0, %v566
    %v568 = vpop.f32.mrf.mxu0
    %v569 = vpop.f32.mrf.mxu0
    %v570 = vadd.f32 0.0, %v569
    %v571 = vpop.f32.mrf.mxu0
    %572 = vmatprep.mubr.bf16.mxu0 0
    %573 = vmatmul.mubr.bf16.gmra.mxu0 %v351
    %v574 = vpop.f32.mrf.mxu0
    %v575 = vadd.f32 0.0, %v574
    %v576 = vpop.f32.mrf.mxu0
    %v577 = vpop.f32.mrf.mxu0
    %v578 = vadd.f32 0.0, %v577
    %v579 = vpop.f32.mrf.mxu0
    %580 = vmatprep.mubr.bf16.mxu0 0
    %581 = vmatmul.mubr.bf16.gmra.mxu0 %v354
    %v582 = vpop.f32.mrf.mxu0
    %v583 = vadd.f32 0.0, %v582
    %v584 = vpop.f32.mrf.mxu0
    %v585 = vpop.f32.mrf.mxu0
    %v586 = vadd.f32 0.0, %v585
    %v587 = vpop.f32.mrf.mxu0
    %588 = vmatprep.mubr.bf16.mxu0 0
    %589 = vmatmul.mubr.bf16.gmra.mxu0 %v357
    %v590 = vpop.f32.mrf.mxu0
    %v591 = vadd.f32 0.0, %v590
    %v592 = vpop.f32.mrf.mxu0
    %v593 = vpop.f32.mrf.mxu0
    %v594 = vadd.f32 0.0, %v593
    %v595 = vpop.f32.mrf.mxu0
    %596 = vmatprep.mubr.bf16.mxu0 0
    %597 = vmatmul.mubr.bf16.gmra.mxu0 %v360
    %v598 = vpop.f32.mrf.mxu0
    %v599 = vadd.f32 0.0, %v598
    %v600 = vpop.f32.mrf.mxu0
    %v601 = vpop.f32.mrf.mxu0
    %v602 = vadd.f32 0.0, %v601
    %v603 = vpop.f32.mrf.mxu0
    %604 = vmatprep.mubr.bf16.mxu0 0
    %605 = vmatmul.mubr.bf16.gmra.mxu0 %v363
    %v606 = vpop.f32.mrf.mxu0
    %v607 = vadd.f32 0.0, %v606
    %v608 = vpop.f32.mrf.mxu0
    %v609 = vpop.f32.mrf.mxu0
    %v610 = vadd.f32 0.0, %v609
    %v611 = vpop.f32.mrf.mxu0
    %612 = vmatprep.mubr.bf16.mxu0 0
    %613 = vmatmul.mubr.bf16.gmra.mxu0 %v366
    %v614 = vpop.f32.mrf.mxu0
    %v615 = vadd.f32 0.0, %v614
    %v616 = vpop.f32.mrf.mxu0
    %v617 = vpop.f32.mrf.mxu0
    %v618 = vadd.f32 0.0, %v617
    %v619 = vpop.f32.mrf.mxu0
    %620 = vmatprep.mubr.bf16.mxu0 0
    %621 = vmatmul.mubr.bf16.gmra.mxu0 %v369
    %v622 = vpop.f32.mrf.mxu0
    %v623 = vadd.f32 0.0, %v622
    %v624 = vpop.f32.mrf.mxu0
    %v625 = vpop.f32.mrf.mxu0
    %v626 = vadd.f32 0.0, %v625
    %v627 = vpop.f32.mrf.mxu0
    %628 = vmatprep.mubr.bf16.mxu0 0
    %629 = vmatmul.mubr.bf16.gmra.mxu0 %v372
    %v630 = vpop.f32.mrf.mxu0
    %v631 = vadd.f32 0.0, %v630
    %v632 = vpop.f32.mrf.mxu0
    %v633 = vpop.f32.mrf.mxu0
    %v634 = vadd.f32 0.0, %v633
    %v635 = vpop.f32.mrf.mxu0
    %636 = vmatprep.mubr.bf16.mxu0 0
    %637 = vmatmul.mubr.bf16.gmra.mxu0 %v375
    %v638 = vpop.f32.mrf.mxu0
    %v639 = vadd.f32 0.0, %v638
    %v640 = vpop.f32.mrf.mxu0
    %v641 = vpop.f32.mrf.mxu0
    %v642 = vadd.f32 0.0, %v641
    %v643 = vpop.f32.mrf.mxu0
    %644 = vmatprep.mubr.bf16.mxu0 0
    %645 = vmatmul.mubr.bf16.gmra.mxu0 %v378
    %v646 = vpop.f32.mrf.mxu0
    %v647 = vadd.f32 0.0, %v646
    %v648 = vpop.f32.mrf.mxu0
    %v649 = vpop.f32.mrf.mxu0
    %v650 = vadd.f32 0.0, %v649
    %v651 = vpop.f32.mrf.mxu0
    %652 = vmatprep.mubr.bf16.mxu0 0
    %653 = vmatmul.mubr.bf16.gmra.mxu0 %v381
    %v654 = vpop.f32.mrf.mxu0
    %v655 = vadd.f32 0.0, %v654
    %v656 = vpop.f32.mrf.mxu0
    %v657 = vpop.f32.mrf.mxu0
    %v658 = vadd.f32 0.0, %v657
    %v659 = vpop.f32.mrf.mxu0
    %660 = vmatprep.mubr.bf16.mxu0 0
    %661 = vmatmul.mubr.bf16.gmra.mxu0 %v384
    %v662 = vpop.f32.mrf.mxu0
    %v663 = vadd.f32 0.0, %v662
    %v664 = vpop.f32.mrf.mxu0
    %v665 = vpop.f32.mrf.mxu0
    %v666 = vadd.f32 0.0, %v665
    %v667 = vpop.f32.mrf.mxu0
    %668 = vmatprep.mubr.bf16.mxu0 0
    %669 = vmatmul.mubr.bf16.gmra.mxu0 %v387
    %v670 = vpop.f32.mrf.mxu0
    %v671 = vadd.f32 0.0, %v670
    %v672 = vpop.f32.mrf.mxu0
    %v673 = vpop.f32.mrf.mxu0
    %v674 = vadd.f32 0.0, %v673
    %v675 = vpop.f32.mrf.mxu0
    %676 = vmatprep.mubr.bf16.mxu0 0
    %677 = vmatmul.mubr.bf16.gmra.mxu0 %v390
    %v678 = vpop.f32.mrf.mxu0
    %v679 = vadd.f32 0.0, %v678
    %v680 = vpop.f32.mrf.mxu0
    %v681 = vpop.f32.mrf.mxu0
    %v682 = vadd.f32 0.0, %v681
    %v683 = vpop.f32.mrf.mxu0
    %684 = vdwg.mxu0
    %v685 = vld [vmem:[%s2] sm:$0x1]
    %v687 = vlaneseq
    %v688 = vshrl.u32 %v687, 7
    %v689 = vsub.s32 0, %v688
    %v690 = vrot.slane %v685, %v689
    %v692 = vmul.f32 %v431, %v690
    %v693 = vmul.f32 %v434, %v690
    %v694 = vmul.f32 %v439, %v690
    %v695 = vmul.f32 %v442, %v690
    %v696 = vmul.f32 %v447, %v690
    %v697 = vmul.f32 %v450, %v690
    %v698 = vmul.f32 %v455, %v690
    %v699 = vmul.f32 %v458, %v690
    %v700 = vmul.f32 %v463, %v690
    %v701 = vmul.f32 %v466, %v690
    %v702 = vmul.f32 %v471, %v690
    %v703 = vmul.f32 %v474, %v690
    %v704 = vmul.f32 %v479, %v690
    %v705 = vmul.f32 %v482, %v690
    %v706 = vmul.f32 %v487, %v690
    %v707 = vmul.f32 %v490, %v690
    %v708 = vmul.f32 %v495, %v690
    %v709 = vmul.f32 %v498, %v690
    %v710 = vmul.f32 %v503, %v690
    %v711 = vmul.f32 %v506, %v690
    %v712 = vmul.f32 %v511, %v690
    %v713 = vmul.f32 %v514, %v690
    %v714 = vmul.f32 %v519, %v690
    %v715 = vmul.f32 %v522, %v690
    %v716 = vmul.f32 %v527, %v690
    %v717 = vmul.f32 %v530, %v690
    %v718 = vmul.f32 %v535, %v690
    %v719 = vmul.f32 %v538, %v690
    %v720 = vmul.f32 %v543, %v690
    %v721 = vmul.f32 %v546, %v690
    %v722 = vmul.f32 %v551, %v690
    %v723 = vmul.f32 %v554, %v690
    %v724 = vmul.f32 %v559, %v690
    %v725 = vmul.f32 %v562, %v690
    %v726 = vmul.f32 %v567, %v690
    %v727 = vmul.f32 %v570, %v690
    %v728 = vmul.f32 %v575, %v690
    %v729 = vmul.f32 %v578, %v690
    %v730 = vmul.f32 %v583, %v690
    %v731 = vmul.f32 %v586, %v690
    %v732 = vmul.f32 %v591, %v690
    %v733 = vmul.f32 %v594, %v690
    %v734 = vmul.f32 %v599, %v690
    %v735 = vmul.f32 %v602, %v690
    %v736 = vmul.f32 %v607, %v690
    %v737 = vmul.f32 %v610, %v690
    %v738 = vmul.f32 %v615, %v690
    %v739 = vmul.f32 %v618, %v690
    %v740 = vmul.f32 %v623, %v690
    %v741 = vmul.f32 %v626, %v690
    %v742 = vmul.f32 %v631, %v690
    %v743 = vmul.f32 %v634, %v690
    %v744 = vmul.f32 %v639, %v690
    %v745 = vmul.f32 %v642, %v690
    %v746 = vmul.f32 %v647, %v690
    %v747 = vmul.f32 %v650, %v690
    %v748 = vmul.f32 %v655, %v690
    %v749 = vmul.f32 %v658, %v690
    %v750 = vmul.f32 %v663, %v690
    %v751 = vmul.f32 %v666, %v690
    %v752 = vmul.f32 %v671, %v690
    %v753 = vmul.f32 %v674, %v690
    %v754 = vmul.f32 %v679, %v690
    %v755 = vmul.f32 %v682, %v690
    %v756 = vld [vmem:[%s3] sm:$0x1]
    %v758 = vlaneseq
    %v759 = vshrl.u32 %v758, 7
    %v760 = vsub.s32 0, %v759
    %v761 = vrot.slane %v756, %v760
    %v763 = vadd.f32 %v692, %v761
    %v764 = vadd.f32 %v693, %v761
    %v765 = vadd.f32 %v694, %v761
    %v766 = vadd.f32 %v695, %v761
    %v767 = vadd.f32 %v696, %v761
    %v768 = vadd.f32 %v697, %v761
    %v769 = vadd.f32 %v698, %v761
    %v770 = vadd.f32 %v699, %v761
    %v771 = vadd.f32 %v700, %v761
    %v772 = vadd.f32 %v701, %v761
    %v773 = vadd.f32 %v702, %v761
    %v774 = vadd.f32 %v703, %v761
    %v775 = vadd.f32 %v704, %v761
    %v776 = vadd.f32 %v705, %v761
    %v777 = vadd.f32 %v706, %v761
    %v778 = vadd.f32 %v707, %v761
    %v779 = vadd.f32 %v708, %v761
    %v780 = vadd.f32 %v709, %v761
    %v781 = vadd.f32 %v710, %v761
    %v782 = vadd.f32 %v711, %v761
    %v783 = vadd.f32 %v712, %v761
    %v784 = vadd.f32 %v713, %v761
    %v785 = vadd.f32 %v714, %v761
    %v786 = vadd.f32 %v715, %v761
    %v787 = vadd.f32 %v716, %v761
    %v788 = vadd.f32 %v717, %v761
    %v789 = vadd.f32 %v718, %v761
    %v790 = vadd.f32 %v719, %v761
    %v791 = vadd.f32 %v720, %v761
    %v792 = vadd.f32 %v721, %v761
    %v793 = vadd.f32 %v722, %v761
    %v794 = vadd.f32 %v723, %v761
    %v795 = vadd.f32 %v724, %v761
    %v796 = vadd.f32 %v725, %v761
    %v797 = vadd.f32 %v726, %v761
    %v798 = vadd.f32 %v727, %v761
    %v799 = vadd.f32 %v728, %v761
    %v800 = vadd.f32 %v729, %v761
    %v801 = vadd.f32 %v730, %v761
    %v802 = vadd.f32 %v731, %v761
    %v803 = vadd.f32 %v732, %v761
    %v804 = vadd.f32 %v733, %v761
    %v805 = vadd.f32 %v734, %v761
    %v806 = vadd.f32 %v735, %v761
    %v807 = vadd.f32 %v736, %v761
    %v808 = vadd.f32 %v737, %v761
    %v809 = vadd.f32 %v738, %v761
    %v810 = vadd.f32 %v739, %v761
    %v811 = vadd.f32 %v740, %v761
    %v812 = vadd.f32 %v741, %v761
    %v813 = vadd.f32 %v742, %v761
    %v814 = vadd.f32 %v743, %v761
    %v815 = vadd.f32 %v744, %v761
    %v816 = vadd.f32 %v745, %v761
    %v817 = vadd.f32 %v746, %v761
    %v818 = vadd.f32 %v747, %v761
    %v819 = vadd.f32 %v748, %v761
    %v820 = vadd.f32 %v749, %v761
    %v821 = vadd.f32 %v750, %v761
    %v822 = vadd.f32 %v751, %v761
    %v823 = vadd.f32 %v752, %v761
    %v824 = vadd.f32 %v753, %v761
    %v825 = vadd.f32 %v754, %v761
    %v826 = vadd.f32 %v755, %v761
    %vm827 = vcmp.gt.f32.partialorder %v763, 0.0
    %vm828 = vcmp.gt.f32.partialorder %v764, 0.0
    %vm829 = vcmp.gt.f32.partialorder %v765, 0.0
    %vm830 = vcmp.gt.f32.partialorder %v766, 0.0
    %vm831 = vcmp.gt.f32.partialorder %v767, 0.0
    %vm832 = vcmp.gt.f32.partialorder %v768, 0.0
    %vm833 = vcmp.gt.f32.partialorder %v769, 0.0
    %vm834 = vcmp.gt.f32.partialorder %v770, 0.0
    %vm835 = vcmp.gt.f32.partialorder %v771, 0.0
    %vm836 = vcmp.gt.f32.partialorder %v772, 0.0
    %vm837 = vcmp.gt.f32.partialorder %v773, 0.0
    %vm838 = vcmp.gt.f32.partialorder %v774, 0.0
    %vm839 = vcmp.gt.f32.partialorder %v775, 0.0
    %vm840 = vcmp.gt.f32.partialorder %v776, 0.0
    %vm841 = vcmp.gt.f32.partialorder %v777, 0.0
    %vm842 = vcmp.gt.f32.partialorder %v778, 0.0
    %vm843 = vcmp.gt.f32.partialorder %v779, 0.0
    %vm844 = vcmp.gt.f32.partialorder %v780, 0.0
    %vm845 = vcmp.gt.f32.partialorder %v781, 0.0
    %vm846 = vcmp.gt.f32.partialorder %v782, 0.0
    %vm847 = vcmp.gt.f32.partialorder %v783, 0.0
    %vm848 = vcmp.gt.f32.partialorder %v784, 0.0
    %vm849 = vcmp.gt.f32.partialorder %v785, 0.0
    %vm850 = vcmp.gt.f32.partialorder %v786, 0.0
    %vm851 = vcmp.gt.f32.partialorder %v787, 0.0
    %vm852 = vcmp.gt.f32.partialorder %v788, 0.0
    %vm853 = vcmp.gt.f32.partialorder %v789, 0.0
    %vm854 = vcmp.gt.f32.partialorder %v790, 0.0
    %vm855 = vcmp.gt.f32.partialorder %v791, 0.0
    %vm856 = vcmp.gt.f32.partialorder %v792, 0.0
    %vm857 = vcmp.gt.f32.partialorder %v793, 0.0
    %vm858 = vcmp.gt.f32.partialorder %v794, 0.0
    %vm859 = vcmp.gt.f32.partialorder %v795, 0.0
    %vm860 = vcmp.gt.f32.partialorder %v796, 0.0
    %vm861 = vcmp.gt.f32.partialorder %v797, 0.0
    %vm862 = vcmp.gt.f32.partialorder %v798, 0.0
    %vm863 = vcmp.gt.f32.partialorder %v799, 0.0
    %vm864 = vcmp.gt.f32.partialorder %v800, 0.0
    %vm865 = vcmp.gt.f32.partialorder %v801, 0.0
    %vm866 = vcmp.gt.f32.partialorder %v802, 0.0
    %vm867 = vcmp.gt.f32.partialorder %v803, 0.0
    %vm868 = vcmp.gt.f32.partialorder %v804, 0.0
    %vm869 = vcmp.gt.f32.partialorder %v805, 0.0
    %vm870 = vcmp.gt.f32.partialorder %v806, 0.0
    %vm871 = vcmp.gt.f32.partialorder %v807, 0.0
    %vm872 = vcmp.gt.f32.partialorder %v808, 0.0
    %vm873 = vcmp.gt.f32.partialorder %v809, 0.0
    %vm874 = vcmp.gt.f32.partialorder %v810, 0.0
    %vm875 = vcmp.gt.f32.partialorder %v811, 0.0
    %vm876 = vcmp.gt.f32.partialorder %v812, 0.0
    %vm877 = vcmp.gt.f32.partialorder %v813, 0.0
    %vm878 = vcmp.gt.f32.partialorder %v814, 0.0
    %vm879 = vcmp.gt.f32.partialorder %v815, 0.0
    %vm880 = vcmp.gt.f32.partialorder %v816, 0.0
    %vm881 = vcmp.gt.f32.partialorder %v817, 0.0
    %vm882 = vcmp.gt.f32.partialorder %v818, 0.0
    %vm883 = vcmp.gt.f32.partialorder %v819, 0.0
    %vm884 = vcmp.gt.f32.partialorder %v820, 0.0
    %vm885 = vcmp.gt.f32.partialorder %v821, 0.0
    %vm886 = vcmp.gt.f32.partialorder %v822, 0.0
    %vm887 = vcmp.gt.f32.partialorder %v823, 0.0
    %vm888 = vcmp.gt.f32.partialorder %v824, 0.0
    %vm889 = vcmp.gt.f32.partialorder %v825, 0.0
    %vm890 = vcmp.gt.f32.partialorder %v826, 0.0
    %v891 = vmul.f32 %v763, 0.01
    %v892 = vmul.f32 %v764, 0.01
    %v893 = vmul.f32 %v765, 0.01
    %v894 = vmul.f32 %v766, 0.01
    %v895 = vmul.f32 %v767, 0.01
    %v896 = vmul.f32 %v768, 0.01
    %v897 = vmul.f32 %v769, 0.01
    %v898 = vmul.f32 %v770, 0.01
    %v899 = vmul.f32 %v771, 0.01
    %v900 = vmul.f32 %v772, 0.01
    %v901 = vmul.f32 %v773, 0.01
    %v902 = vmul.f32 %v774, 0.01
    %v903 = vmul.f32 %v775, 0.01
    %v904 = vmul.f32 %v776, 0.01
    %v905 = vmul.f32 %v777, 0.01
    %v906 = vmul.f32 %v778, 0.01
    %v907 = vmul.f32 %v779, 0.01
    %v908 = vmul.f32 %v780, 0.01
    %v909 = vmul.f32 %v781, 0.01
    %v910 = vmul.f32 %v782, 0.01
    %v911 = vmul.f32 %v783, 0.01
    %v912 = vmul.f32 %v784, 0.01
    %v913 = vmul.f32 %v785, 0.01
    %v914 = vmul.f32 %v786, 0.01
    %v915 = vmul.f32 %v787, 0.01
    %v916 = vmul.f32 %v788, 0.01
    %v917 = vmul.f32 %v789, 0.01
    %v918 = vmul.f32 %v790, 0.01
    %v919 = vmul.f32 %v791, 0.01
    %v920 = vmul.f32 %v792, 0.01
    %v921 = vmul.f32 %v793, 0.01
    %v922 = vmul.f32 %v794, 0.01
    %v923 = vmul.f32 %v795, 0.01
    %v924 = vmul.f32 %v796, 0.01
    %v925 = vmul.f32 %v797, 0.01
    %v926 = vmul.f32 %v798, 0.01
    %v927 = vmul.f32 %v799, 0.01
    %v928 = vmul.f32 %v800, 0.01
    %v929 = vmul.f32 %v801, 0.01
    %v930 = vmul.f32 %v802, 0.01
    %v931 = vmul.f32 %v803, 0.01
    %v932 = vmul.f32 %v804, 0.01
    %v933 = vmul.f32 %v805, 0.01
    %v934 = vmul.f32 %v806, 0.01
    %v935 = vmul.f32 %v807, 0.01
    %v936 = vmul.f32 %v808, 0.01
    %v937 = vmul.f32 %v809, 0.01
    %v938 = vmul.f32 %v810, 0.01
    %v939 = vmul.f32 %v811, 0.01
    %v940 = vmul.f32 %v812, 0.01
    %v941 = vmul.f32 %v813, 0.01
    %v942 = vmul.f32 %v814, 0.01
    %v943 = vmul.f32 %v815, 0.01
    %v944 = vmul.f32 %v816, 0.01
    %v945 = vmul.f32 %v817, 0.01
    %v946 = vmul.f32 %v818, 0.01
    %v947 = vmul.f32 %v819, 0.01
    %v948 = vmul.f32 %v820, 0.01
    %v949 = vmul.f32 %v821, 0.01
    %v950 = vmul.f32 %v822, 0.01
    %v951 = vmul.f32 %v823, 0.01
    %v952 = vmul.f32 %v824, 0.01
    %v953 = vmul.f32 %v825, 0.01
    %v954 = vmul.f32 %v826, 0.01
    %v955 = vsel %vm827, %v763, %v891
    %v956 = vsel %vm828, %v764, %v892
    %v957 = vsel %vm829, %v765, %v893
    %v958 = vsel %vm830, %v766, %v894
    %v959 = vsel %vm831, %v767, %v895
    %v960 = vsel %vm832, %v768, %v896
    %v961 = vsel %vm833, %v769, %v897
    %v962 = vsel %vm834, %v770, %v898
    %v963 = vsel %vm835, %v771, %v899
    %v964 = vsel %vm836, %v772, %v900
    %v965 = vsel %vm837, %v773, %v901
    %v966 = vsel %vm838, %v774, %v902
    %v967 = vsel %vm839, %v775, %v903
    %v968 = vsel %vm840, %v776, %v904
    %v969 = vsel %vm841, %v777, %v905
    %v970 = vsel %vm842, %v778, %v906
    %v971 = vsel %vm843, %v779, %v907
    %v972 = vsel %vm844, %v780, %v908
    %v973 = vsel %vm845, %v781, %v909
    %v974 = vsel %vm846, %v782, %v910
    %v975 = vsel %vm847, %v783, %v911
    %v976 = vsel %vm848, %v784, %v912
    %v977 = vsel %vm849, %v785, %v913
    %v978 = vsel %vm850, %v786, %v914
    %v979 = vsel %vm851, %v787, %v915
    %v980 = vsel %vm852, %v788, %v916
    %v981 = vsel %vm853, %v789, %v917
    %v982 = vsel %vm854, %v790, %v918
    %v983 = vsel %vm855, %v791, %v919
    %v984 = vsel %vm856, %v792, %v920
    %v985 = vsel %vm857, %v793, %v921
    %v986 = vsel %vm858, %v794, %v922
    %v987 = vsel %vm859, %v795, %v923
    %v988 = vsel %vm860, %v796, %v924
    %v989 = vsel %vm861, %v797, %v925
    %v990 = vsel %vm862, %v798, %v926
    %v991 = vsel %vm863, %v799, %v927
    %v992 = vsel %vm864, %v800, %v928
    %v993 = vsel %vm865, %v801, %v929
    %v994 = vsel %vm866, %v802, %v930
    %v995 = vsel %vm867, %v803, %v931
    %v996 = vsel %vm868, %v804, %v932
    %v997 = vsel %vm869, %v805, %v933
    %v998 = vsel %vm870, %v806, %v934
    %v999 = vsel %vm871, %v807, %v935
    %v1000 = vsel %vm872, %v808, %v936
    %v1001 = vsel %vm873, %v809, %v937
    %v1002 = vsel %vm874, %v810, %v938
    %v1003 = vsel %vm875, %v811, %v939
    %v1004 = vsel %vm876, %v812, %v940
    %v1005 = vsel %vm877, %v813, %v941
    %v1006 = vsel %vm878, %v814, %v942
    %v1007 = vsel %vm879, %v815, %v943
    %v1008 = vsel %vm880, %v816, %v944
    %v1009 = vsel %vm881, %v817, %v945
    %v1010 = vsel %vm882, %v818, %v946
    %v1011 = vsel %vm883, %v819, %v947
    %v1012 = vsel %vm884, %v820, %v948
    %v1013 = vsel %vm885, %v821, %v949
    %v1014 = vsel %vm886, %v822, %v950
    %v1015 = vsel %vm887, %v823, %v951
    %v1016 = vsel %vm888, %v824, %v952
    %v1017 = vsel %vm889, %v825, %v953
    %v1018 = vsel %vm890, %v826, %v954
    %1019 = vst [vmem:[#allocation2] sm:$0x3] 0.0
    %1020 = vst [vmem:[#allocation2 + $0x28] sm:$0x3] 0.0
    %1021 = vst [vmem:[#allocation2 + $0x50] sm:$0x3] 0.0
    %1022 = vst [vmem:[#allocation2 + $0x78] sm:$0x3] 0.0
    %1023 = vst [vmem:[#allocation2 + $0xa0] sm:$0x3] 0.0
    %1024 = vst [vmem:[#allocation2 + $0xc8] sm:$0x3] 0.0
    %1025 = vst [vmem:[#allocation2 + $0xf0] sm:$0x3] 0.0
    %1026 = vst [vmem:[#allocation2 + $0x118] sm:$0x3] 0.0
    %1027 = vst [vmem:[#allocation2 + $0x140] sm:$0x3] 0.0
    %1028 = vst [vmem:[#allocation2 + $0x168] sm:$0x3] 0.0
    %1029 = vst [vmem:[#allocation2 + $0x190] sm:$0x3] 0.0
    %1030 = vst [vmem:[#allocation2 + $0x1b8] sm:$0x3] 0.0
    %1031 = vst [vmem:[#allocation2 + $0x1e0] sm:$0x3] 0.0
    %1032 = vst [vmem:[#allocation2 + $0x208] sm:$0x3] 0.0
    %1033 = vst [vmem:[#allocation2 + $0x230] sm:$0x3] 0.0
    %1034 = vst [vmem:[#allocation2 + $0x258] sm:$0x3] 0.0
    %1035 = vst [vmem:[#allocation2 + $0x2] sm:$0xff] %v955
    %1036 = vst [vmem:[#allocation2 + $0xa] sm:$0xff] %v956
    %1037 = vst [vmem:[#allocation2 + $0x12] sm:$0xff] %v957
    %1038 = vst [vmem:[#allocation2 + $0x1a] sm:$0xff] %v958
    %1039 = vst [vmem:[#allocation2 + $0x2a] sm:$0xff] %v959
    %1040 = vst [vmem:[#allocation2 + $0x32] sm:$0xff] %v960
    %1041 = vst [vmem:[#allocation2 + $0x3a] sm:$0xff] %v961
    %1042 = vst [vmem:[#allocation2 + $0x42] sm:$0xff] %v962
    %1043 = vst [vmem:[#allocation2 + $0x52] sm:$0xff] %v963
    %1044 = vst [vmem:[#allocation2 + $0x5a] sm:$0xff] %v964
    %1045 = vst [vmem:[#allocation2 + $0x62] sm:$0xff] %v965
    %1046 = vst [vmem:[#allocation2 + $0x6a] sm:$0xff] %v966
    %1047 = vst [vmem:[#allocation2 + $0x7a] sm:$0xff] %v967
    %1048 = vst [vmem:[#allocation2 + $0x82] sm:$0xff] %v968
    %1049 = vst [vmem:[#allocation2 + $0x8a] sm:$0xff] %v969
    %1050 = vst [vmem:[#allocation2 + $0x92] sm:$0xff] %v970
    %1051 = vst [vmem:[#allocation2 + $0xa2] sm:$0xff] %v971
    %1052 = vst [vmem:[#allocation2 + $0xaa] sm:$0xff] %v972
    %1053 = vst [vmem:[#allocation2 + $0xb2] sm:$0xff] %v973
    %1054 = vst [vmem:[#allocation2 + $0xba] sm:$0xff] %v974
    %1055 = vst [vmem:[#allocation2 + $0xca] sm:$0xff] %v975
    %1056 = vst [vmem:[#allocation2 + $0xd2] sm:$0xff] %v976
    %1057 = vst [vmem:[#allocation2 + $0xda] sm:$0xff] %v977
    %1058 = vst [vmem:[#allocation2 + $0xe2] sm:$0xff] %v978
    %1059 = vst [vmem:[#allocation2 + $0xf2] sm:$0xff] %v979
    %1060 = vst [vmem:[#allocation2 + $0xfa] sm:$0xff] %v980
    %1061 = vst [vmem:[#allocation2 + $0x102] sm:$0xff] %v981
    %1062 = vst [vmem:[#allocation2 + $0x10a] sm:$0xff] %v982
    %1063 = vst [vmem:[#allocation2 + $0x11a] sm:$0xff] %v983
    %1064 = vst [vmem:[#allocation2 + $0x122] sm:$0xff] %v984
    %1065 = vst [vmem:[#allocation2 + $0x12a] sm:$0xff] %v985
    %1066 = vst [vmem:[#allocation2 + $0x132] sm:$0xff] %v986
    %1067 = vst [vmem:[#allocation2 + $0x142] sm:$0xff] %v987
    %1068 = vst [vmem:[#allocation2 + $0x14a] sm:$0xff] %v988
    %1069 = vst [vmem:[#allocation2 + $0x152] sm:$0xff] %v989
    %1070 = vst [vmem:[#allocation2 + $0x15a] sm:$0xff] %v990
    %1071 = vst [vmem:[#allocation2 + $0x16a] sm:$0xff] %v991
    %1072 = vst [vmem:[#allocation2 + $0x172] sm:$0xff] %v992
    %1073 = vst [vmem:[#allocation2 + $0x17a] sm:$0xff] %v993
    %1074 = vst [vmem:[#allocation2 + $0x182] sm:$0xff] %v994
    %1075 = vst [vmem:[#allocation2 + $0x192] sm:$0xff] %v995
    %1076 = vst [vmem:[#allocation2 + $0x19a] sm:$0xff] %v996
    %1077 = vst [vmem:[#allocation2 + $0x1a2] sm:$0xff] %v997
    %1078 = vst [vmem:[#allocation2 + $0x1aa] sm:$0xff] %v998
    %1079 = vst [vmem:[#allocation2 + $0x1ba] sm:$0xff] %v999
    %1080 = vst [vmem:[#allocation2 + $0x1c2] sm:$0xff] %v1000
    %1081 = vst [vmem:[#allocation2 + $0x1ca] sm:$0xff] %v1001
    %1082 = vst [vmem:[#allocation2 + $0x1d2] sm:$0xff] %v1002
    %1083 = vst [vmem:[#allocation2 + $0x1e2] sm:$0xff] %v1003
    %1084 = vst [vmem:[#allocation2 + $0x1ea] sm:$0xff] %v1004
    %1085 = vst [vmem:[#allocation2 + $0x1f2] sm:$0xff] %v1005
    %1086 = vst [vmem:[#allocation2 + $0x1fa] sm:$0xff] %v1006
    %1087 = vst [vmem:[#allocation2 + $0x20a] sm:$0xff] %v1007
    %1088 = vst [vmem:[#allocation2 + $0x212] sm:$0xff] %v1008
    %1089 = vst [vmem:[#allocation2 + $0x21a] sm:$0xff] %v1009
    %1090 = vst [vmem:[#allocation2 + $0x222] sm:$0xff] %v1010
    %1091 = vst [vmem:[#allocation2 + $0x232] sm:$0xff] %v1011
    %1092 = vst [vmem:[#allocation2 + $0x23a] sm:$0xff] %v1012
    %1093 = vst [vmem:[#allocation2 + $0x242] sm:$0xff] %v1013
    %1094 = vst [vmem:[#allocation2 + $0x24a] sm:$0xff] %v1014
    %1095 = vst [vmem:[#allocation2 + $0x25a] sm:$0xff] %v1015
    %1096 = vst [vmem:[#allocation2 + $0x262] sm:$0xff] %v1016
    %1097 = vst [vmem:[#allocation2 + $0x26a] sm:$0xff] %v1017
    %1098 = vst [vmem:[#allocation2 + $0x272] sm:$0xff] %v1018
    %1099 = vst [vmem:[#allocation2 + $0x22] sm:$0x1] 0.0
    %1100 = vst [vmem:[#allocation2 + $0x4a] sm:$0x1] 0.0
    %1101 = vst [vmem:[#allocation2 + $0x72] sm:$0x1] 0.0
    %1102 = vst [vmem:[#allocation2 + $0x9a] sm:$0x1] 0.0
    %1103 = vst [vmem:[#allocation2 + $0xc2] sm:$0x1] 0.0
    %1104 = vst [vmem:[#allocation2 + $0xea] sm:$0x1] 0.0
    %1105 = vst [vmem:[#allocation2 + $0x112] sm:$0x1] 0.0
    %1106 = vst [vmem:[#allocation2 + $0x13a] sm:$0x1] 0.0
    %1107 = vst [vmem:[#allocation2 + $0x162] sm:$0x1] 0.0
    %1108 = vst [vmem:[#allocation2 + $0x18a] sm:$0x1] 0.0
    %1109 = vst [vmem:[#allocation2 + $0x1b2] sm:$0x1] 0.0
    %1110 = vst [vmem:[#allocation2 + $0x1da] sm:$0x1] 0.0
    %1111 = vst [vmem:[#allocation2 + $0x202] sm:$0x1] 0.0
    %1112 = vst [vmem:[#allocation2 + $0x22a] sm:$0x1] 0.0
    %1113 = vst [vmem:[#allocation2 + $0x252] sm:$0x1] 0.0
    %1114 = vst [vmem:[#allocation2 + $0x27a] sm:$0x1] 0.0
    %v1115 = vld [vmem:[#allocation2] ss:$2 sm:$0xff]
    %s1116 = scalar_lea.vmem [#allocation2], 16
    %v1117 = vld [vmem:[%s1116] ss:$2 sm:$0xff]
    %s1118 = scalar_lea.vmem [#allocation2], 40
    %v1119 = vld [vmem:[%s1118] ss:$2 sm:$0xff]
    %s1120 = scalar_lea.vmem [#allocation2], 56
    %v1121 = vld [vmem:[%s1120] ss:$2 sm:$0xff]
    %s1122 = scalar_lea.vmem [#allocation2], 80
    %v1123 = vld [vmem:[%s1122] ss:$2 sm:$0xff]
    %s1124 = scalar_lea.vmem [#allocation2], 96
    %v1125 = vld [vmem:[%s1124] ss:$2 sm:$0xff]
    %s1126 = scalar_lea.vmem [#allocation2], 120
    %v1127 = vld [vmem:[%s1126] ss:$2 sm:$0xff]
    %s1128 = scalar_lea.vmem [#allocation2], 136
    %v1129 = vld [vmem:[%s1128] ss:$2 sm:$0xff]
    %s1130 = scalar_lea.vmem [#allocation2], 160
    %v1131 = vld [vmem:[%s1130] ss:$2 sm:$0xff]
    %s1132 = scalar_lea.vmem [#allocation2], 176
    %v1133 = vld [vmem:[%s1132] ss:$2 sm:$0xff]
    %s1134 = scalar_lea.vmem [#allocation2], 200
    %v1135 = vld [vmem:[%s1134] ss:$2 sm:$0xff]
    %s1136 = scalar_lea.vmem [#allocation2], 216
    %v1137 = vld [vmem:[%s1136] ss:$2 sm:$0xff]
    %s1138 = scalar_lea.vmem [#allocation2], 240
    %v1139 = vld [vmem:[%s1138] ss:$2 sm:$0xff]
    %s1140 = scalar_lea.vmem [#allocation2], 256
    %v1141 = vld [vmem:[%s1140] ss:$2 sm:$0xff]
    %s1142 = scalar_lea.vmem [#allocation2], 280
    %v1143 = vld [vmem:[%s1142] ss:$2 sm:$0xff]
    %s1144 = scalar_lea.vmem [#allocation2], 296
    %v1145 = vld [vmem:[%s1144] ss:$2 sm:$0xff]
    %s1146 = scalar_lea.vmem [#allocation2], 320
    %v1147 = vld [vmem:[%s1146] ss:$2 sm:$0xff]
    %s1148 = scalar_lea.vmem [#allocation2], 336
    %v1149 = vld [vmem:[%s1148] ss:$2 sm:$0xff]
    %s1150 = scalar_lea.vmem [#allocation2], 360
    %v1151 = vld [vmem:[%s1150] ss:$2 sm:$0xff]
    %s1152 = scalar_lea.vmem [#allocation2], 376
    %v1153 = vld [vmem:[%s1152] ss:$2 sm:$0xff]
    %s1154 = scalar_lea.vmem [#allocation2], 400
    %v1155 = vld [vmem:[%s1154] ss:$2 sm:$0xff]
    %s1156 = scalar_lea.vmem [#allocation2], 416
    %v1157 = vld [vmem:[%s1156] ss:$2 sm:$0xff]
    %s1158 = scalar_lea.vmem [#allocation2], 440
    %v1159 = vld [vmem:[%s1158] ss:$2 sm:$0xff]
    %s1160 = scalar_lea.vmem [#allocation2], 456
    %v1161 = vld [vmem:[%s1160] ss:$2 sm:$0xff]
    %s1162 = scalar_lea.vmem [#allocation2], 480
    %v1163 = vld [vmem:[%s1162] ss:$2 sm:$0xff]
    %s1164 = scalar_lea.vmem [#allocation2], 496
    %v1165 = vld [vmem:[%s1164] ss:$2 sm:$0xff]
    %s1166 = scalar_lea.vmem [#allocation2], 520
    %v1167 = vld [vmem:[%s1166] ss:$2 sm:$0xff]
    %s1168 = scalar_lea.vmem [#allocation2], 536
    %v1169 = vld [vmem:[%s1168] ss:$2 sm:$0xff]
    %s1170 = scalar_lea.vmem [#allocation2], 560
    %v1171 = vld [vmem:[%s1170] ss:$2 sm:$0xff]
    %s1172 = scalar_lea.vmem [#allocation2], 576
    %v1173 = vld [vmem:[%s1172] ss:$2 sm:$0xff]
    %s1174 = scalar_lea.vmem [#allocation2], 600
    %v1175 = vld [vmem:[%s1174] ss:$2 sm:$0xff]
    %s1176 = scalar_lea.vmem [#allocation2], 616
    %v1177 = vld [vmem:[%s1176] ss:$2 sm:$0xff]
    %v1178 = vpack.c.bf16 %v1117, %v1115
    %v1179 = vpack.c.bf16 %v1121, %v1119
    %v1180 = vpack.c.bf16 %v1125, %v1123
    %v1181 = vpack.c.bf16 %v1129, %v1127
    %v1182 = vpack.c.bf16 %v1133, %v1131
    %v1183 = vpack.c.bf16 %v1137, %v1135
    %v1184 = vpack.c.bf16 %v1141, %v1139
    %v1185 = vpack.c.bf16 %v1145, %v1143
    %v1186 = vpack.c.bf16 %v1149, %v1147
    %v1187 = vpack.c.bf16 %v1153, %v1151
    %v1188 = vpack.c.bf16 %v1157, %v1155
    %v1189 = vpack.c.bf16 %v1161, %v1159
    %v1190 = vpack.c.bf16 %v1165, %v1163
    %v1191 = vpack.c.bf16 %v1169, %v1167
    %v1192 = vpack.c.bf16 %v1173, %v1171
    %v1193 = vpack.c.bf16 %v1177, %v1175
    %v1194 = vld [vmem:[%s4] sm:$0xf]
    %v1195 = vld [vmem:[%s4 + $0x4] sm:$0xf]
    %v1196 = vld [vmem:[%s4 + $0x8] sm:$0xf]
    %v1197 = vld [vmem:[%s4 + $0xc] sm:$0xf]
    %v1198 = vld [vmem:[%s4 + $0x10] sm:$0xf]
    %v1199 = vld [vmem:[%s4 + $0x14] sm:$0xf]
    %v1200 = vld [vmem:[%s4 + $0x18] sm:$0xf]
    %v1201 = vld [vmem:[%s4 + $0x1c] sm:$0xf]
    %v1202 = vld [vmem:[%s4 + $0x20] sm:$0xf]
    %v1203 = vld [vmem:[%s4 + $0x24] sm:$0xf]
    %v1204 = vld [vmem:[%s4 + $0x28] sm:$0xf]
    %v1205 = vld [vmem:[%s4 + $0x2c] sm:$0xf]
    %v1206 = vld [vmem:[%s4 + $0x30] sm:$0xf]
    %v1207 = vld [vmem:[%s4 + $0x34] sm:$0xf]
    %v1208 = vld [vmem:[%s4 + $0x38] sm:$0xf]
    %v1209 = vld [vmem:[%s4 + $0x3c] sm:$0xf]
    %s1210 = scalar_lea.vmem [#allocation2], 1
    %v1211 = vld [vmem:[%s1210] ss:$2 sm:$0xff]
    %s1212 = scalar_lea.vmem [#allocation2], 17
    %v1213 = vld [vmem:[%s1212] ss:$2 sm:$0xff]
    %s1214 = scalar_lea.vmem [#allocation2], 41
    %v1215 = vld [vmem:[%s1214] ss:$2 sm:$0xff]
    %s1216 = scalar_lea.vmem [#allocation2], 57
    %v1217 = vld [vmem:[%s1216] ss:$2 sm:$0xff]
    %s1218 = scalar_lea.vmem [#allocation2], 81
    %v1219 = vld [vmem:[%s1218] ss:$2 sm:$0xff]
    %s1220 = scalar_lea.vmem [#allocation2], 97
    %v1221 = vld [vmem:[%s1220] ss:$2 sm:$0xff]
    %s1222 = scalar_lea.vmem [#allocation2], 121
    %v1223 = vld [vmem:[%s1222] ss:$2 sm:$0xff]
    %s1224 = scalar_lea.vmem [#allocation2], 137
    %v1225 = vld [vmem:[%s1224] ss:$2 sm:$0xff]
    %s1226 = scalar_lea.vmem [#allocation2], 161
    %v1227 = vld [vmem:[%s1226] ss:$2 sm:$0xff]
    %s1228 = scalar_lea.vmem [#allocation2], 177
    %v1229 = vld [vmem:[%s1228] ss:$2 sm:$0xff]
    %s1230 = scalar_lea.vmem [#allocation2], 201
    %v1231 = vld [vmem:[%s1230] ss:$2 sm:$0xff]
    %s1232 = scalar_lea.vmem [#allocation2], 217
    %v1233 = vld [vmem:[%s1232] ss:$2 sm:$0xff]
    %s1234 = scalar_lea.vmem [#allocation2], 241
    %v1235 = vld [vmem:[%s1234] ss:$2 sm:$0xff]
    %s1236 = scalar_lea.vmem [#allocation2], 257
    %v1237 = vld [vmem:[%s1236] ss:$2 sm:$0xff]
    %s1238 = scalar_lea.vmem [#allocation2], 281
    %v1239 = vld [vmem:[%s1238] ss:$2 sm:$0xff]
    %s1240 = scalar_lea.vmem [#allocation2], 297
    %v1241 = vld [vmem:[%s1240] ss:$2 sm:$0xff]
    %s1242 = scalar_lea.vmem [#allocation2], 321
    %v1243 = vld [vmem:[%s1242] ss:$2 sm:$0xff]
    %s1244 = scalar_lea.vmem [#allocation2], 337
    %v1245 = vld [vmem:[%s1244] ss:$2 sm:$0xff]
    %s1246 = scalar_lea.vmem [#allocation2], 361
    %v1247 = vld [vmem:[%s1246] ss:$2 sm:$0xff]
    %s1248 = scalar_lea.vmem [#allocation2], 377
    %v1249 = vld [vmem:[%s1248] ss:$2 sm:$0xff]
    %s1250 = scalar_lea.vmem [#allocation2], 401
    %v1251 = vld [vmem:[%s1250] ss:$2 sm:$0xff]
    %s1252 = scalar_lea.vmem [#allocation2], 417
    %v1253 = vld [vmem:[%s1252] ss:$2 sm:$0xff]
    %s1254 = scalar_lea.vmem [#allocation2], 441
    %v1255 = vld [vmem:[%s1254] ss:$2 sm:$0xff]
    %s1256 = scalar_lea.vmem [#allocation2], 457
    %v1257 = vld [vmem:[%s1256] ss:$2 sm:$0xff]
    %s1258 = scalar_lea.vmem [#allocation2], 481
    %v1259 = vld [vmem:[%s1258] ss:$2 sm:$0xff]
    %s1260 = scalar_lea.vmem [#allocation2], 497
    %v1261 = vld [vmem:[%s1260] ss:$2 sm:$0xff]
    %s1262 = scalar_lea.vmem [#allocation2], 521
    %v1263 = vld [vmem:[%s1262] ss:$2 sm:$0xff]
    %s1264 = scalar_lea.vmem [#allocation2], 537
    %v1265 = vld [vmem:[%s1264] ss:$2 sm:$0xff]
    %s1266 = scalar_lea.vmem [#allocation2], 561
    %v1267 = vld [vmem:[%s1266] ss:$2 sm:$0xff]
    %s1268 = scalar_lea.vmem [#allocation2], 577
    %v1269 = vld [vmem:[%s1268] ss:$2 sm:$0xff]
    %s1270 = scalar_lea.vmem [#allocation2], 601
    %v1271 = vld [vmem:[%s1270] ss:$2 sm:$0xff]
    %s1272 = scalar_lea.vmem [#allocation2], 617
    %v1273 = vld [vmem:[%s1272] ss:$2 sm:$0xff]
    %v1274 = vpack.c.bf16 %v1213, %v1211
    %v1275 = vpack.c.bf16 %v1217, %v1215
    %v1276 = vpack.c.bf16 %v1221, %v1219
    %v1277 = vpack.c.bf16 %v1225, %v1223
    %v1278 = vpack.c.bf16 %v1229, %v1227
    %v1279 = vpack.c.bf16 %v1233, %v1231
    %v1280 = vpack.c.bf16 %v1237, %v1235
    %v1281 = vpack.c.bf16 %v1241, %v1239
    %v1282 = vpack.c.bf16 %v1245, %v1243
    %v1283 = vpack.c.bf16 %v1249, %v1247
    %v1284 = vpack.c.bf16 %v1253, %v1251
    %v1285 = vpack.c.bf16 %v1257, %v1255
    %v1286 = vpack.c.bf16 %v1261, %v1259
    %v1287 = vpack.c.bf16 %v1265, %v1263
    %v1288 = vpack.c.bf16 %v1269, %v1267
    %v1289 = vpack.c.bf16 %v1273, %v1271
    %s1290 = scalar_lea.vmem %s4, 64
    %v1291 = vld [vmem:[%s1290] sm:$0xf]
    %v1292 = vld [vmem:[%s1290 + $0x4] sm:$0xf]
    %v1293 = vld [vmem:[%s1290 + $0x8] sm:$0xf]
    %v1294 = vld [vmem:[%s1290 + $0xc] sm:$0xf]
    %v1295 = vld [vmem:[%s1290 + $0x10] sm:$0xf]
    %v1296 = vld [vmem:[%s1290 + $0x14] sm:$0xf]
    %v1297 = vld [vmem:[%s1290 + $0x18] sm:$0xf]
    %v1298 = vld [vmem:[%s1290 + $0x1c] sm:$0xf]
    %v1299 = vld [vmem:[%s1290 + $0x20] sm:$0xf]
    %v1300 = vld [vmem:[%s1290 + $0x24] sm:$0xf]
    %v1301 = vld [vmem:[%s1290 + $0x28] sm:$0xf]
    %v1302 = vld [vmem:[%s1290 + $0x2c] sm:$0xf]
    %v1303 = vld [vmem:[%s1290 + $0x30] sm:$0xf]
    %v1304 = vld [vmem:[%s1290 + $0x34] sm:$0xf]
    %v1305 = vld [vmem:[%s1290 + $0x38] sm:$0xf]
    %v1306 = vld [vmem:[%s1290 + $0x3c] sm:$0xf]
    %v1323 = vunpack.c.l.b16 %v1291
    %v1324 = vunpack.c.l.b16 %v1292
    %v1325 = vunpack.c.l.b16 %v1293
    %v1326 = vunpack.c.l.b16 %v1294
    %v1327 = vunpack.c.l.b16 %v1295
    %v1328 = vunpack.c.l.b16 %v1296
    %v1329 = vunpack.c.l.b16 %v1297
    %v1330 = vunpack.c.l.b16 %v1298
    %v1331 = vunpack.c.l.b16 %v1299
    %v1332 = vunpack.c.l.b16 %v1300
    %v1333 = vunpack.c.l.b16 %v1301
    %v1334 = vunpack.c.l.b16 %v1302
    %v1335 = vunpack.c.l.b16 %v1303
    %v1336 = vunpack.c.l.b16 %v1304
    %v1337 = vunpack.c.l.b16 %v1305
    %v1338 = vunpack.c.l.b16 %v1306
    %v1339 = vpack.c.b16 %v1324, %v1323
    %v1340 = vpack.c.b16 %v1326, %v1325
    %v1341 = vpack.c.b16 %v1328, %v1327
    %v1342 = vpack.c.b16 %v1330, %v1329
    %v1343 = vpack.c.b16 %v1332, %v1331
    %v1344 = vpack.c.b16 %v1334, %v1333
    %v1345 = vpack.c.b16 %v1336, %v1335
    %v1346 = vpack.c.b16 %v1338, %v1337
    %1355 = vmatprep.subr.bf16.mxu0 0
    %1356 = vmatpush1.bf16.msra.mxu0 %v1346
    %1357 = vmatprep.subr.bf16.mxu0 0
    %1358 = vmatpush1.bf16.msra.mxu0 %v1345
    %1359 = vmatprep.subr.bf16.mxu0 0
    %1360 = vmatpush1.bf16.msra.mxu0 %v1344
    %1361 = vmatprep.subr.bf16.mxu0 0
    %1362 = vmatpush1.bf16.msra.mxu0 %v1343
    %1363 = vmatprep.subr.bf16.mxu0 0
    %1364 = vmatpush1.bf16.msra.mxu0 %v1342
    %1365 = vmatprep.subr.bf16.mxu0 0
    %1366 = vmatpush1.bf16.msra.mxu0 %v1341
    %1367 = vmatprep.subr.bf16.mxu0 0
    %1368 = vmatpush1.bf16.msra.mxu0 %v1340
    %1369 = vmatprep.subr.bf16.mxu0 0
    %1370 = vmatpush1.bf16.msra.mxu0 %v1339
    %1371 = vmatprep.subr.bf16.mxu0 0
    %1372 = vmatpush2.bf16.msra.mxu0 0
    %1373 = vmatprep.subr.bf16.mxu0 0
    %1374 = vmatpush2.bf16.msra.mxu0 0
    %1375 = vmatprep.subr.bf16.mxu0 0
    %1376 = vmatpush2.bf16.msra.mxu0 0
    %1377 = vmatprep.subr.bf16.mxu0 0
    %1378 = vmatpush2.bf16.msra.mxu0 0
    %1379 = vmatprep.subr.bf16.mxu0 0
    %1380 = vmatpush2.bf16.msra.mxu0 0
    %1381 = vmatprep.subr.bf16.mxu0 0
    %1382 = vmatpush2.bf16.msra.mxu0 0
    %1383 = vmatprep.subr.bf16.mxu0 0
    %1384 = vmatpush2.bf16.msra.mxu0 0
    %1385 = vmatprep.subr.bf16.mxu0 0
    %1386 = vmatpush2.bf16.msra.mxu0 0
    %1387 = vmatprep.mubr.bf16.mxu0 0
    %1388 = vmatmul.mubr.bf16.gmra.mxu0 %v1274
    %v1389 = vpop.f32.mrf.mxu0
    %v1390 = vadd.f32 0.0, %v1389
    %v1391 = vpop.f32.mrf.mxu0
    %v1392 = vpop.f32.mrf.mxu0
    %v1393 = vadd.f32 0.0, %v1392
    %v1394 = vpop.f32.mrf.mxu0
    %1395 = vmatprep.mubr.bf16.mxu0 0
    %1396 = vmatmul.mubr.bf16.gmra.mxu0 %v1275
    %v1397 = vpop.f32.mrf.mxu0
    %v1398 = vadd.f32 0.0, %v1397
    %v1399 = vpop.f32.mrf.mxu0
    %v1400 = vpop.f32.mrf.mxu0
    %v1401 = vadd.f32 0.0, %v1400
    %v1402 = vpop.f32.mrf.mxu0
    %1403 = vmatprep.mubr.bf16.mxu0 0
    %1404 = vmatmul.mubr.bf16.gmra.mxu0 %v1276
    %v1405 = vpop.f32.mrf.mxu0
    %v1406 = vadd.f32 0.0, %v1405
    %v1407 = vpop.f32.mrf.mxu0
    %v1408 = vpop.f32.mrf.mxu0
    %v1409 = vadd.f32 0.0, %v1408
    %v1410 = vpop.f32.mrf.mxu0
    %1411 = vmatprep.mubr.bf16.mxu0 0
    %1412 = vmatmul.mubr.bf16.gmra.mxu0 %v1277
    %v1413 = vpop.f32.mrf.mxu0
    %v1414 = vadd.f32 0.0, %v1413
    %v1415 = vpop.f32.mrf.mxu0
    %v1416 = vpop.f32.mrf.mxu0
    %v1417 = vadd.f32 0.0, %v1416
    %v1418 = vpop.f32.mrf.mxu0
    %1419 = vmatprep.mubr.bf16.mxu0 0
    %1420 = vmatmul.mubr.bf16.gmra.mxu0 %v1278
    %v1421 = vpop.f32.mrf.mxu0
    %v1422 = vadd.f32 0.0, %v1421
    %v1423 = vpop.f32.mrf.mxu0
    %v1424 = vpop.f32.mrf.mxu0
    %v1425 = vadd.f32 0.0, %v1424
    %v1426 = vpop.f32.mrf.mxu0
    %1427 = vmatprep.mubr.bf16.mxu0 0
    %1428 = vmatmul.mubr.bf16.gmra.mxu0 %v1279
    %v1429 = vpop.f32.mrf.mxu0
    %v1430 = vadd.f32 0.0, %v1429
    %v1431 = vpop.f32.mrf.mxu0
    %v1432 = vpop.f32.mrf.mxu0
    %v1433 = vadd.f32 0.0, %v1432
    %v1434 = vpop.f32.mrf.mxu0
    %1435 = vmatprep.mubr.bf16.mxu0 0
    %1436 = vmatmul.mubr.bf16.gmra.mxu0 %v1280
    %v1437 = vpop.f32.mrf.mxu0
    %v1438 = vadd.f32 0.0, %v1437
    %v1439 = vpop.f32.mrf.mxu0
    %v1440 = vpop.f32.mrf.mxu0
    %v1441 = vadd.f32 0.0, %v1440
    %v1442 = vpop.f32.mrf.mxu0
    %1443 = vmatprep.mubr.bf16.mxu0 0
    %1444 = vmatmul.mubr.bf16.gmra.mxu0 %v1281
    %v1445 = vpop.f32.mrf.mxu0
    %v1446 = vadd.f32 0.0, %v1445
    %v1447 = vpop.f32.mrf.mxu0
    %v1448 = vpop.f32.mrf.mxu0
    %v1449 = vadd.f32 0.0, %v1448
    %v1450 = vpop.f32.mrf.mxu0
    %1451 = vmatprep.mubr.bf16.mxu0 0
    %1452 = vmatmul.mubr.bf16.gmra.mxu0 %v1282
    %v1453 = vpop.f32.mrf.mxu0
    %v1454 = vadd.f32 0.0, %v1453
    %v1455 = vpop.f32.mrf.mxu0
    %v1456 = vpop.f32.mrf.mxu0
    %v1457 = vadd.f32 0.0, %v1456
    %v1458 = vpop.f32.mrf.mxu0
    %1459 = vmatprep.mubr.bf16.mxu0 0
    %1460 = vmatmul.mubr.bf16.gmra.mxu0 %v1283
    %v1461 = vpop.f32.mrf.mxu0
    %v1462 = vadd.f32 0.0, %v1461
    %v1463 = vpop.f32.mrf.mxu0
    %v1464 = vpop.f32.mrf.mxu0
    %v1465 = vadd.f32 0.0, %v1464
    %v1466 = vpop.f32.mrf.mxu0
    %1467 = vmatprep.mubr.bf16.mxu0 0
    %1468 = vmatmul.mubr.bf16.gmra.mxu0 %v1284
    %v1469 = vpop.f32.mrf.mxu0
    %v1470 = vadd.f32 0.0, %v1469
    %v1471 = vpop.f32.mrf.mxu0
    %v1472 = vpop.f32.mrf.mxu0
    %v1473 = vadd.f32 0.0, %v1472
    %v1474 = vpop.f32.mrf.mxu0
    %1475 = vmatprep.mubr.bf16.mxu0 0
    %1476 = vmatmul.mubr.bf16.gmra.mxu0 %v1285
    %v1477 = vpop.f32.mrf.mxu0
    %v1478 = vadd.f32 0.0, %v1477
    %v1479 = vpop.f32.mrf.mxu0
    %v1480 = vpop.f32.mrf.mxu0
    %v1481 = vadd.f32 0.0, %v1480
    %v1482 = vpop.f32.mrf.mxu0
    %1483 = vmatprep.mubr.bf16.mxu0 0
    %1484 = vmatmul.mubr.bf16.gmra.mxu0 %v1286
    %v1485 = vpop.f32.mrf.mxu0
    %v1486 = vadd.f32 0.0, %v1485
    %v1487 = vpop.f32.mrf.mxu0
    %v1488 = vpop.f32.mrf.mxu0
    %v1489 = vadd.f32 0.0, %v1488
    %v1490 = vpop.f32.mrf.mxu0
    %1491 = vmatprep.mubr.bf16.mxu0 0
    %1492 = vmatmul.mubr.bf16.gmra.mxu0 %v1287
    %v1493 = vpop.f32.mrf.mxu0
    %v1494 = vadd.f32 0.0, %v1493
    %v1495 = vpop.f32.mrf.mxu0
    %v1496 = vpop.f32.mrf.mxu0
    %v1497 = vadd.f32 0.0, %v1496
    %v1498 = vpop.f32.mrf.mxu0
    %1499 = vmatprep.mubr.bf16.mxu0 0
    %1500 = vmatmul.mubr.bf16.gmra.mxu0 %v1288
    %v1501 = vpop.f32.mrf.mxu0
    %v1502 = vadd.f32 0.0, %v1501
    %v1503 = vpop.f32.mrf.mxu0
    %v1504 = vpop.f32.mrf.mxu0
    %v1505 = vadd.f32 0.0, %v1504
    %v1506 = vpop.f32.mrf.mxu0
    %1507 = vmatprep.mubr.bf16.mxu0 0
    %1508 = vmatmul.mubr.bf16.gmra.mxu0 %v1289
    %v1509 = vpop.f32.mrf.mxu0
    %v1510 = vadd.f32 0.0, %v1509
    %v1511 = vpop.f32.mrf.mxu0
    %v1512 = vpop.f32.mrf.mxu0
    %v1513 = vadd.f32 0.0, %v1512
    %v1514 = vpop.f32.mrf.mxu0
    %1515 = vdwg.mxu0
    %v1532 = vunpack.c.l.b16 %v1194
    %v1533 = vunpack.c.l.b16 %v1195
    %v1534 = vunpack.c.l.b16 %v1196
    %v1535 = vunpack.c.l.b16 %v1197
    %v1536 = vunpack.c.l.b16 %v1198
    %v1537 = vunpack.c.l.b16 %v1199
    %v1538 = vunpack.c.l.b16 %v1200
    %v1539 = vunpack.c.l.b16 %v1201
    %v1540 = vunpack.c.l.b16 %v1202
    %v1541 = vunpack.c.l.b16 %v1203
    %v1542 = vunpack.c.l.b16 %v1204
    %v1543 = vunpack.c.l.b16 %v1205
    %v1544 = vunpack.c.l.b16 %v1206
    %v1545 = vunpack.c.l.b16 %v1207
    %v1546 = vunpack.c.l.b16 %v1208
    %v1547 = vunpack.c.l.b16 %v1209
    %v1548 = vpack.c.b16 %v1533, %v1532
    %v1549 = vpack.c.b16 %v1535, %v1534
    %v1550 = vpack.c.b16 %v1537, %v1536
    %v1551 = vpack.c.b16 %v1539, %v1538
    %v1552 = vpack.c.b16 %v1541, %v1540
    %v1553 = vpack.c.b16 %v1543, %v1542
    %v1554 = vpack.c.b16 %v1545, %v1544
    %v1555 = vpack.c.b16 %v1547, %v1546
    %1564 = vmatprep.subr.bf16.mxu0 0
    %1565 = vmatpush1.bf16.msra.mxu0 %v1555
    %1566 = vmatprep.subr.bf16.mxu0 0
    %1567 = vmatpush1.bf16.msra.mxu0 %v1554
    %1568 = vmatprep.subr.bf16.mxu0 0
    %1569 = vmatpush1.bf16.msra.mxu0 %v1553
    %1570 = vmatprep.subr.bf16.mxu0 0
    %1571 = vmatpush1.bf16.msra.mxu0 %v1552
    %1572 = vmatprep.subr.bf16.mxu0 0
    %1573 = vmatpush1.bf16.msra.mxu0 %v1551
    %1574 = vmatprep.subr.bf16.mxu0 0
    %1575 = vmatpush1.bf16.msra.mxu0 %v1550
    %1576 = vmatprep.subr.bf16.mxu0 0
    %1577 = vmatpush1.bf16.msra.mxu0 %v1549
    %1578 = vmatprep.subr.bf16.mxu0 0
    %1579 = vmatpush1.bf16.msra.mxu0 %v1548
    %1580 = vmatprep.subr.bf16.mxu0 0
    %1581 = vmatpush2.bf16.msra.mxu0 0
    %1582 = vmatprep.subr.bf16.mxu0 0
    %1583 = vmatpush2.bf16.msra.mxu0 0
    %1584 = vmatprep.subr.bf16.mxu0 0
    %1585 = vmatpush2.bf16.msra.mxu0 0
    %1586 = vmatprep.subr.bf16.mxu0 0
    %1587 = vmatpush2.bf16.msra.mxu0 0
    %1588 = vmatprep.subr.bf16.mxu0 0
    %1589 = vmatpush2.bf16.msra.mxu0 0
    %1590 = vmatprep.subr.bf16.mxu0 0
    %1591 = vmatpush2.bf16.msra.mxu0 0
    %1592 = vmatprep.subr.bf16.mxu0 0
    %1593 = vmatpush2.bf16.msra.mxu0 0
    %1594 = vmatprep.subr.bf16.mxu0 0
    %1595 = vmatpush2.bf16.msra.mxu0 0
    %1596 = vmatprep.mubr.bf16.mxu0 0
    %1597 = vmatmul.mubr.bf16.gmra.mxu0 %v1178
    %v1598 = vpop.f32.mrf.mxu0
    %v1599 = vadd.f32 %v1390, %v1598
    %v1600 = vpop.f32.mrf.mxu0
    %v1601 = vpop.f32.mrf.mxu0
    %v1602 = vadd.f32 %v1393, %v1601
    %v1603 = vpop.f32.mrf.mxu0
    %1604 = vmatprep.mubr.bf16.mxu0 0
    %1605 = vmatmul.mubr.bf16.gmra.mxu0 %v1179
    %v1606 = vpop.f32.mrf.mxu0
    %v1607 = vadd.f32 %v1398, %v1606
    %v1608 = vpop.f32.mrf.mxu0
    %v1609 = vpop.f32.mrf.mxu0
    %v1610 = vadd.f32 %v1401, %v1609
    %v1611 = vpop.f32.mrf.mxu0
    %1612 = vmatprep.mubr.bf16.mxu0 0
    %1613 = vmatmul.mubr.bf16.gmra.mxu0 %v1180
    %v1614 = vpop.f32.mrf.mxu0
    %v1615 = vadd.f32 %v1406, %v1614
    %v1616 = vpop.f32.mrf.mxu0
    %v1617 = vpop.f32.mrf.mxu0
    %v1618 = vadd.f32 %v1409, %v1617
    %v1619 = vpop.f32.mrf.mxu0
    %1620 = vmatprep.mubr.bf16.mxu0 0
    %1621 = vmatmul.mubr.bf16.gmra.mxu0 %v1181
    %v1622 = vpop.f32.mrf.mxu0
    %v1623 = vadd.f32 %v1414, %v1622
    %v1624 = vpop.f32.mrf.mxu0
    %v1625 = vpop.f32.mrf.mxu0
    %v1626 = vadd.f32 %v1417, %v1625
    %v1627 = vpop.f32.mrf.mxu0
    %1628 = vmatprep.mubr.bf16.mxu0 0
    %1629 = vmatmul.mubr.bf16.gmra.mxu0 %v1182
    %v1630 = vpop.f32.mrf.mxu0
    %v1631 = vadd.f32 %v1422, %v1630
    %v1632 = vpop.f32.mrf.mxu0
    %v1633 = vpop.f32.mrf.mxu0
    %v1634 = vadd.f32 %v1425, %v1633
    %v1635 = vpop.f32.mrf.mxu0
    %1636 = vmatprep.mubr.bf16.mxu0 0
    %1637 = vmatmul.mubr.bf16.gmra.mxu0 %v1183
    %v1638 = vpop.f32.mrf.mxu0
    %v1639 = vadd.f32 %v1430, %v1638
    %v1640 = vpop.f32.mrf.mxu0
    %v1641 = vpop.f32.mrf.mxu0
    %v1642 = vadd.f32 %v1433, %v1641
    %v1643 = vpop.f32.mrf.mxu0
    %1644 = vmatprep.mubr.bf16.mxu0 0
    %1645 = vmatmul.mubr.bf16.gmra.mxu0 %v1184
    %v1646 = vpop.f32.mrf.mxu0
    %v1647 = vadd.f32 %v1438, %v1646
    %v1648 = vpop.f32.mrf.mxu0
    %v1649 = vpop.f32.mrf.mxu0
    %v1650 = vadd.f32 %v1441, %v1649
    %v1651 = vpop.f32.mrf.mxu0
    %1652 = vmatprep.mubr.bf16.mxu0 0
    %1653 = vmatmul.mubr.bf16.gmra.mxu0 %v1185
    %v1654 = vpop.f32.mrf.mxu0
    %v1655 = vadd.f32 %v1446, %v1654
    %v1656 = vpop.f32.mrf.mxu0
    %v1657 = vpop.f32.mrf.mxu0
    %v1658 = vadd.f32 %v1449, %v1657
    %v1659 = vpop.f32.mrf.mxu0
    %1660 = vmatprep.mubr.bf16.mxu0 0
    %1661 = vmatmul.mubr.bf16.gmra.mxu0 %v1186
    %v1662 = vpop.f32.mrf.mxu0
    %v1663 = vadd.f32 %v1454, %v1662
    %v1664 = vpop.f32.mrf.mxu0
    %v1665 = vpop.f32.mrf.mxu0
    %v1666 = vadd.f32 %v1457, %v1665
    %v1667 = vpop.f32.mrf.mxu0
    %1668 = vmatprep.mubr.bf16.mxu0 0
    %1669 = vmatmul.mubr.bf16.gmra.mxu0 %v1187
    %v1670 = vpop.f32.mrf.mxu0
    %v1671 = vadd.f32 %v1462, %v1670
    %v1672 = vpop.f32.mrf.mxu0
    %v1673 = vpop.f32.mrf.mxu0
    %v1674 = vadd.f32 %v1465, %v1673
    %v1675 = vpop.f32.mrf.mxu0
    %1676 = vmatprep.mubr.bf16.mxu0 0
    %1677 = vmatmul.mubr.bf16.gmra.mxu0 %v1188
    %v1678 = vpop.f32.mrf.mxu0
    %v1679 = vadd.f32 %v1470, %v1678
    %v1680 = vpop.f32.mrf.mxu0
    %v1681 = vpop.f32.mrf.mxu0
    %v1682 = vadd.f32 %v1473, %v1681
    %v1683 = vpop.f32.mrf.mxu0
    %1684 = vmatprep.mubr.bf16.mxu0 0
    %1685 = vmatmul.mubr.bf16.gmra.mxu0 %v1189
    %v1686 = vpop.f32.mrf.mxu0
    %v1687 = vadd.f32 %v1478, %v1686
    %v1688 = vpop.f32.mrf.mxu0
    %v1689 = vpop.f32.mrf.mxu0
    %v1690 = vadd.f32 %v1481, %v1689
    %v1691 = vpop.f32.mrf.mxu0
    %1692 = vmatprep.mubr.bf16.mxu0 0
    %1693 = vmatmul.mubr.bf16.gmra.mxu0 %v1190
    %v1694 = vpop.f32.mrf.mxu0
    %v1695 = vadd.f32 %v1486, %v1694
    %v1696 = vpop.f32.mrf.mxu0
    %v1697 = vpop.f32.mrf.mxu0
    %v1698 = vadd.f32 %v1489, %v1697
    %v1699 = vpop.f32.mrf.mxu0
    %1700 = vmatprep.mubr.bf16.mxu0 0
    %1701 = vmatmul.mubr.bf16.gmra.mxu0 %v1191
    %v1702 = vpop.f32.mrf.mxu0
    %v1703 = vadd.f32 %v1494, %v1702
    %v1704 = vpop.f32.mrf.mxu0
    %v1705 = vpop.f32.mrf.mxu0
    %v1706 = vadd.f32 %v1497, %v1705
    %v1707 = vpop.f32.mrf.mxu0
    %1708 = vmatprep.mubr.bf16.mxu0 0
    %1709 = vmatmul.mubr.bf16.gmra.mxu0 %v1192
    %v1710 = vpop.f32.mrf.mxu0
    %v1711 = vadd.f32 %v1502, %v1710
    %v1712 = vpop.f32.mrf.mxu0
    %v1713 = vpop.f32.mrf.mxu0
    %v1714 = vadd.f32 %v1505, %v1713
    %v1715 = vpop.f32.mrf.mxu0
    %1716 = vmatprep.mubr.bf16.mxu0 0
    %1717 = vmatmul.mubr.bf16.gmra.mxu0 %v1193
    %v1718 = vpop.f32.mrf.mxu0
    %v1719 = vadd.f32 %v1510, %v1718
    %v1720 = vpop.f32.mrf.mxu0
    %v1721 = vpop.f32.mrf.mxu0
    %v1722 = vadd.f32 %v1513, %v1721
    %v1723 = vpop.f32.mrf.mxu0
    %1724 = vdwg.mxu0
    %s1725 = scalar_lea.vmem [#allocation2], 2
    %v1726 = vld [vmem:[%s1725] ss:$2 sm:$0xff]
    %s1727 = scalar_lea.vmem [#allocation2], 18
    %v1728 = vld [vmem:[%s1727] ss:$2 sm:$0xff]
    %s1729 = scalar_lea.vmem [#allocation2], 42
    %v1730 = vld [vmem:[%s1729] ss:$2 sm:$0xff]
    %s1731 = scalar_lea.vmem [#allocation2], 58
    %v1732 = vld [vmem:[%s1731] ss:$2 sm:$0xff]
    %s1733 = scalar_lea.vmem [#allocation2], 82
    %v1734 = vld [vmem:[%s1733] ss:$2 sm:$0xff]
    %s1735 = scalar_lea.vmem [#allocation2], 98
    %v1736 = vld [vmem:[%s1735] ss:$2 sm:$0xff]
    %s1737 = scalar_lea.vmem [#allocation2], 122
    %v1738 = vld [vmem:[%s1737] ss:$2 sm:$0xff]
    %s1739 = scalar_lea.vmem [#allocation2], 138
    %v1740 = vld [vmem:[%s1739] ss:$2 sm:$0xff]
    %s1741 = scalar_lea.vmem [#allocation2], 162
    %v1742 = vld [vmem:[%s1741] ss:$2 sm:$0xff]
    %s1743 = scalar_lea.vmem [#allocation2], 178
    %v1744 = vld [vmem:[%s1743] ss:$2 sm:$0xff]
    %s1745 = scalar_lea.vmem [#allocation2], 202
    %v1746 = vld [vmem:[%s1745] ss:$2 sm:$0xff]
    %s1747 = scalar_lea.vmem [#allocation2], 218
    %v1748 = vld [vmem:[%s1747] ss:$2 sm:$0xff]
    %s1749 = scalar_lea.vmem [#allocation2], 242
    %v1750 = vld [vmem:[%s1749] ss:$2 sm:$0xff]
    %s1751 = scalar_lea.vmem [#allocation2], 258
    %v1752 = vld [vmem:[%s1751] ss:$2 sm:$0xff]
    %s1753 = scalar_lea.vmem [#allocation2], 282
    %v1754 = vld [vmem:[%s1753] ss:$2 sm:$0xff]
    %s1755 = scalar_lea.vmem [#allocation2], 298
    %v1756 = vld [vmem:[%s1755] ss:$2 sm:$0xff]
    %s1757 = scalar_lea.vmem [#allocation2], 322
    %v1758 = vld [vmem:[%s1757] ss:$2 sm:$0xff]
    %s1759 = scalar_lea.vmem [#allocation2], 338
    %v1760 = vld [vmem:[%s1759] ss:$2 sm:$0xff]
    %s1761 = scalar_lea.vmem [#allocation2], 362
    %v1762 = vld [vmem:[%s1761] ss:$2 sm:$0xff]
    %s1763 = scalar_lea.vmem [#allocation2], 378
    %v1764 = vld [vmem:[%s1763] ss:$2 sm:$0xff]
    %s1765 = scalar_lea.vmem [#allocation2], 402
    %v1766 = vld [vmem:[%s1765] ss:$2 sm:$0xff]
    %s1767 = scalar_lea.vmem [#allocation2], 418
    %v1768 = vld [vmem:[%s1767] ss:$2 sm:$0xff]
    %s1769 = scalar_lea.vmem [#allocation2], 442
    %v1770 = vld [vmem:[%s1769] ss:$2 sm:$0xff]
    %s1771 = scalar_lea.vmem [#allocation2], 458
    %v1772 = vld [vmem:[%s1771] ss:$2 sm:$0xff]
    %s1773 = scalar_lea.vmem [#allocation2], 482
    %v1774 = vld [vmem:[%s1773] ss:$2 sm:$0xff]
    %s1775 = scalar_lea.vmem [#allocation2], 498
    %v1776 = vld [vmem:[%s1775] ss:$2 sm:$0xff]
    %s1777 = scalar_lea.vmem [#allocation2], 522
    %v1778 = vld [vmem:[%s1777] ss:$2 sm:$0xff]
    %s1779 = scalar_lea.vmem [#allocation2], 538
    %v1780 = vld [vmem:[%s1779] ss:$2 sm:$0xff]
    %s1781 = scalar_lea.vmem [#allocation2], 562
    %v1782 = vld [vmem:[%s1781] ss:$2 sm:$0xff]
    %s1783 = scalar_lea.vmem [#allocation2], 578
    %v1784 = vld [vmem:[%s1783] ss:$2 sm:$0xff]
    %s1785 = scalar_lea.vmem [#allocation2], 602
    %v1786 = vld [vmem:[%s1785] ss:$2 sm:$0xff]
    %s1787 = scalar_lea.vmem [#allocation2], 618
    %v1788 = vld [vmem:[%s1787] ss:$2 sm:$0xff]
    %v1789 = vpack.c.bf16 %v1728, %v1726
    %v1790 = vpack.c.bf16 %v1732, %v1730
    %v1791 = vpack.c.bf16 %v1736, %v1734
    %v1792 = vpack.c.bf16 %v1740, %v1738
    %v1793 = vpack.c.bf16 %v1744, %v1742
    %v1794 = vpack.c.bf16 %v1748, %v1746
    %v1795 = vpack.c.bf16 %v1752, %v1750
    %v1796 = vpack.c.bf16 %v1756, %v1754
    %v1797 = vpack.c.bf16 %v1760, %v1758
    %v1798 = vpack.c.bf16 %v1764, %v1762
    %v1799 = vpack.c.bf16 %v1768, %v1766
    %v1800 = vpack.c.bf16 %v1772, %v1770
    %v1801 = vpack.c.bf16 %v1776, %v1774
    %v1802 = vpack.c.bf16 %v1780, %v1778
    %v1803 = vpack.c.bf16 %v1784, %v1782
    %v1804 = vpack.c.bf16 %v1788, %v1786
    %s1805 = scalar_lea.vmem %s4, 128
    %v1806 = vld [vmem:[%s1805] sm:$0xf]
    %v1807 = vld [vmem:[%s1805 + $0x4] sm:$0xf]
    %v1808 = vld [vmem:[%s1805 + $0x8] sm:$0xf]
    %v1809 = vld [vmem:[%s1805 + $0xc] sm:$0xf]
    %v1810 = vld [vmem:[%s1805 + $0x10] sm:$0xf]
    %v1811 = vld [vmem:[%s1805 + $0x14] sm:$0xf]
    %v1812 = vld [vmem:[%s1805 + $0x18] sm:$0xf]
    %v1813 = vld [vmem:[%s1805 + $0x1c] sm:$0xf]
    %v1814 = vld [vmem:[%s1805 + $0x20] sm:$0xf]
    %v1815 = vld [vmem:[%s1805 + $0x24] sm:$0xf]
    %v1816 = vld [vmem:[%s1805 + $0x28] sm:$0xf]
    %v1817 = vld [vmem:[%s1805 + $0x2c] sm:$0xf]
    %v1818 = vld [vmem:[%s1805 + $0x30] sm:$0xf]
    %v1819 = vld [vmem:[%s1805 + $0x34] sm:$0xf]
    %v1820 = vld [vmem:[%s1805 + $0x38] sm:$0xf]
    %v1821 = vld [vmem:[%s1805 + $0x3c] sm:$0xf]
    %v1838 = vunpack.c.l.b16 %v1806
    %v1839 = vunpack.c.l.b16 %v1807
    %v1840 = vunpack.c.l.b16 %v1808
    %v1841 = vunpack.c.l.b16 %v1809
    %v1842 = vunpack.c.l.b16 %v1810
    %v1843 = vunpack.c.l.b16 %v1811
    %v1844 = vunpack.c.l.b16 %v1812
    %v1845 = vunpack.c.l.b16 %v1813
    %v1846 = vunpack.c.l.b16 %v1814
    %v1847 = vunpack.c.l.b16 %v1815
    %v1848 = vunpack.c.l.b16 %v1816
    %v1849 = vunpack.c.l.b16 %v1817
    %v1850 = vunpack.c.l.b16 %v1818
    %v1851 = vunpack.c.l.b16 %v1819
    %v1852 = vunpack.c.l.b16 %v1820
    %v1853 = vunpack.c.l.b16 %v1821
    %v1854 = vpack.c.b16 %v1839, %v1838
    %v1855 = vpack.c.b16 %v1841, %v1840
    %v1856 = vpack.c.b16 %v1843, %v1842
    %v1857 = vpack.c.b16 %v1845, %v1844
    %v1858 = vpack.c.b16 %v1847, %v1846
    %v1859 = vpack.c.b16 %v1849, %v1848
    %v1860 = vpack.c.b16 %v1851, %v1850
    %v1861 = vpack.c.b16 %v1853, %v1852
    %1870 = vmatprep.subr.bf16.mxu0 0
    %1871 = vmatpush1.bf16.msra.mxu0 %v1861
    %1872 = vmatprep.subr.bf16.mxu0 0
    %1873 = vmatpush1.bf16.msra.mxu0 %v1860
    %1874 = vmatprep.subr.bf16.mxu0 0
    %1875 = vmatpush1.bf16.msra.mxu0 %v1859
    %1876 = vmatprep.subr.bf16.mxu0 0
    %1877 = vmatpush1.bf16.msra.mxu0 %v1858
    %1878 = vmatprep.subr.bf16.mxu0 0
    %1879 = vmatpush1.bf16.msra.mxu0 %v1857
    %1880 = vmatprep.subr.bf16.mxu0 0
    %1881 = vmatpush1.bf16.msra.mxu0 %v1856
    %1882 = vmatprep.subr.bf16.mxu0 0
    %1883 = vmatpush1.bf16.msra.mxu0 %v1855
    %1884 = vmatprep.subr.bf16.mxu0 0
    %1885 = vmatpush1.bf16.msra.mxu0 %v1854
    %1886 = vmatprep.subr.bf16.mxu0 0
    %1887 = vmatpush2.bf16.msra.mxu0 0
    %1888 = vmatprep.subr.bf16.mxu0 0
    %1889 = vmatpush2.bf16.msra.mxu0 0
    %1890 = vmatprep.subr.bf16.mxu0 0
    %1891 = vmatpush2.bf16.msra.mxu0 0
    %1892 = vmatprep.subr.bf16.mxu0 0
    %1893 = vmatpush2.bf16.msra.mxu0 0
    %1894 = vmatprep.subr.bf16.mxu0 0
    %1895 = vmatpush2.bf16.msra.mxu0 0
    %1896 = vmatprep.subr.bf16.mxu0 0
    %1897 = vmatpush2.bf16.msra.mxu0 0
    %1898 = vmatprep.subr.bf16.mxu0 0
    %1899 = vmatpush2.bf16.msra.mxu0 0
    %1900 = vmatprep.subr.bf16.mxu0 0
    %1901 = vmatpush2.bf16.msra.mxu0 0
    %1902 = vmatprep.mubr.bf16.mxu0 0
    %1903 = vmatmul.mubr.bf16.gmra.mxu0 %v1789
    %v1904 = vpop.f32.mrf.mxu0
    %v1905 = vadd.f32 0.0, %v1904
    %v1906 = vpop.f32.mrf.mxu0
    %v1907 = vpop.f32.mrf.mxu0
    %v1908 = vadd.f32 0.0, %v1907
    %v1909 = vpop.f32.mrf.mxu0
    %1910 = vmatprep.mubr.bf16.mxu0 0
    %1911 = vmatmul.mubr.bf16.gmra.mxu0 %v1790
    %v1912 = vpop.f32.mrf.mxu0
    %v1913 = vadd.f32 0.0, %v1912
    %v1914 = vpop.f32.mrf.mxu0
    %v1915 = vpop.f32.mrf.mxu0
    %v1916 = vadd.f32 0.0, %v1915
    %v1917 = vpop.f32.mrf.mxu0
    %1918 = vmatprep.mubr.bf16.mxu0 0
    %1919 = vmatmul.mubr.bf16.gmra.mxu0 %v1791
    %v1920 = vpop.f32.mrf.mxu0
    %v1921 = vadd.f32 0.0, %v1920
    %v1922 = vpop.f32.mrf.mxu0
    %v1923 = vpop.f32.mrf.mxu0
    %v1924 = vadd.f32 0.0, %v1923
    %v1925 = vpop.f32.mrf.mxu0
    %1926 = vmatprep.mubr.bf16.mxu0 0
    %1927 = vmatmul.mubr.bf16.gmra.mxu0 %v1792
    %v1928 = vpop.f32.mrf.mxu0
    %v1929 = vadd.f32 0.0, %v1928
    %v1930 = vpop.f32.mrf.mxu0
    %v1931 = vpop.f32.mrf.mxu0
    %v1932 = vadd.f32 0.0, %v1931
    %v1933 = vpop.f32.mrf.mxu0
    %1934 = vmatprep.mubr.bf16.mxu0 0
    %1935 = vmatmul.mubr.bf16.gmra.mxu0 %v1793
    %v1936 = vpop.f32.mrf.mxu0
    %v1937 = vadd.f32 0.0, %v1936
    %v1938 = vpop.f32.mrf.mxu0
    %v1939 = vpop.f32.mrf.mxu0
    %v1940 = vadd.f32 0.0, %v1939
    %v1941 = vpop.f32.mrf.mxu0
    %1942 = vmatprep.mubr.bf16.mxu0 0
    %1943 = vmatmul.mubr.bf16.gmra.mxu0 %v1794
    %v1944 = vpop.f32.mrf.mxu0
    %v1945 = vadd.f32 0.0, %v1944
    %v1946 = vpop.f32.mrf.mxu0
    %v1947 = vpop.f32.mrf.mxu0
    %v1948 = vadd.f32 0.0, %v1947
    %v1949 = vpop.f32.mrf.mxu0
    %1950 = vmatprep.mubr.bf16.mxu0 0
    %1951 = vmatmul.mubr.bf16.gmra.mxu0 %v1795
    %v1952 = vpop.f32.mrf.mxu0
    %v1953 = vadd.f32 0.0, %v1952
    %v1954 = vpop.f32.mrf.mxu0
    %v1955 = vpop.f32.mrf.mxu0
    %v1956 = vadd.f32 0.0, %v1955
    %v1957 = vpop.f32.mrf.mxu0
    %1958 = vmatprep.mubr.bf16.mxu0 0
    %1959 = vmatmul.mubr.bf16.gmra.mxu0 %v1796
    %v1960 = vpop.f32.mrf.mxu0
    %v1961 = vadd.f32 0.0, %v1960
    %v1962 = vpop.f32.mrf.mxu0
    %v1963 = vpop.f32.mrf.mxu0
    %v1964 = vadd.f32 0.0, %v1963
    %v1965 = vpop.f32.mrf.mxu0
    %1966 = vmatprep.mubr.bf16.mxu0 0
    %1967 = vmatmul.mubr.bf16.gmra.mxu0 %v1797
    %v1968 = vpop.f32.mrf.mxu0
    %v1969 = vadd.f32 0.0, %v1968
    %v1970 = vpop.f32.mrf.mxu0
    %v1971 = vpop.f32.mrf.mxu0
    %v1972 = vadd.f32 0.0, %v1971
    %v1973 = vpop.f32.mrf.mxu0
    %1974 = vmatprep.mubr.bf16.mxu0 0
    %1975 = vmatmul.mubr.bf16.gmra.mxu0 %v1798
    %v1976 = vpop.f32.mrf.mxu0
    %v1977 = vadd.f32 0.0, %v1976
    %v1978 = vpop.f32.mrf.mxu0
    %v1979 = vpop.f32.mrf.mxu0
    %v1980 = vadd.f32 0.0, %v1979
    %v1981 = vpop.f32.mrf.mxu0
    %1982 = vmatprep.mubr.bf16.mxu0 0
    %1983 = vmatmul.mubr.bf16.gmra.mxu0 %v1799
    %v1984 = vpop.f32.mrf.mxu0
    %v1985 = vadd.f32 0.0, %v1984
    %v1986 = vpop.f32.mrf.mxu0
    %v1987 = vpop.f32.mrf.mxu0
    %v1988 = vadd.f32 0.0, %v1987
    %v1989 = vpop.f32.mrf.mxu0
    %1990 = vmatprep.mubr.bf16.mxu0 0
    %1991 = vmatmul.mubr.bf16.gmra.mxu0 %v1800
    %v1992 = vpop.f32.mrf.mxu0
    %v1993 = vadd.f32 0.0, %v1992
    %v1994 = vpop.f32.mrf.mxu0
    %v1995 = vpop.f32.mrf.mxu0
    %v1996 = vadd.f32 0.0, %v1995
    %v1997 = vpop.f32.mrf.mxu0
    %1998 = vmatprep.mubr.bf16.mxu0 0
    %1999 = vmatmul.mubr.bf16.gmra.mxu0 %v1801
    %v2000 = vpop.f32.mrf.mxu0
    %v2001 = vadd.f32 0.0, %v2000
    %v2002 = vpop.f32.mrf.mxu0
    %v2003 = vpop.f32.mrf.mxu0
    %v2004 = vadd.f32 0.0, %v2003
    %v2005 = vpop.f32.mrf.mxu0
    %2006 = vmatprep.mubr.bf16.mxu0 0
    %2007 = vmatmul.mubr.bf16.gmra.mxu0 %v1802
    %v2008 = vpop.f32.mrf.mxu0
    %v2009 = vadd.f32 0.0, %v2008
    %v2010 = vpop.f32.mrf.mxu0
    %v2011 = vpop.f32.mrf.mxu0
    %v2012 = vadd.f32 0.0, %v2011
    %v2013 = vpop.f32.mrf.mxu0
    %2014 = vmatprep.mubr.bf16.mxu0 0
    %2015 = vmatmul.mubr.bf16.gmra.mxu0 %v1803
    %v2016 = vpop.f32.mrf.mxu0
    %v2017 = vadd.f32 0.0, %v2016
    %v2018 = vpop.f32.mrf.mxu0
    %v2019 = vpop.f32.mrf.mxu0
    %v2020 = vadd.f32 0.0, %v2019
    %v2021 = vpop.f32.mrf.mxu0
    %2022 = vmatprep.mubr.bf16.mxu0 0
    %2023 = vmatmul.mubr.bf16.gmra.mxu0 %v1804
    %v2024 = vpop.f32.mrf.mxu0
    %v2025 = vadd.f32 0.0, %v2024
    %v2026 = vpop.f32.mrf.mxu0
    %v2027 = vpop.f32.mrf.mxu0
    %v2028 = vadd.f32 0.0, %v2027
    %v2029 = vpop.f32.mrf.mxu0
    %2030 = vdwg.mxu0
    %v2031 = vadd.f32 %v1599, %v1905
    %v2032 = vadd.f32 %v1602, %v1908
    %v2033 = vadd.f32 %v1607, %v1913
    %v2034 = vadd.f32 %v1610, %v1916
    %v2035 = vadd.f32 %v1615, %v1921
    %v2036 = vadd.f32 %v1618, %v1924
    %v2037 = vadd.f32 %v1623, %v1929
    %v2038 = vadd.f32 %v1626, %v1932
    %v2039 = vadd.f32 %v1631, %v1937
    %v2040 = vadd.f32 %v1634, %v1940
    %v2041 = vadd.f32 %v1639, %v1945
    %v2042 = vadd.f32 %v1642, %v1948
    %v2043 = vadd.f32 %v1647, %v1953
    %v2044 = vadd.f32 %v1650, %v1956
    %v2045 = vadd.f32 %v1655, %v1961
    %v2046 = vadd.f32 %v1658, %v1964
    %v2047 = vadd.f32 %v1663, %v1969
    %v2048 = vadd.f32 %v1666, %v1972
    %v2049 = vadd.f32 %v1671, %v1977
    %v2050 = vadd.f32 %v1674, %v1980
    %v2051 = vadd.f32 %v1679, %v1985
    %v2052 = vadd.f32 %v1682, %v1988
    %v2053 = vadd.f32 %v1687, %v1993
    %v2054 = vadd.f32 %v1690, %v1996
    %v2055 = vadd.f32 %v1695, %v2001
    %v2056 = vadd.f32 %v1698, %v2004
    %v2057 = vadd.f32 %v1703, %v2009
    %v2058 = vadd.f32 %v1706, %v2012
    %v2059 = vadd.f32 %v1711, %v2017
    %v2060 = vadd.f32 %v1714, %v2020
    %v2061 = vadd.f32 %v1719, %v2025
    %v2062 = vadd.f32 %v1722, %v2028
    %s2063 = scalar_lea.vmem [#allocation2], 3
    %v2064 = vld [vmem:[%s2063] ss:$2 sm:$0xff]
    %s2065 = scalar_lea.vmem [#allocation2], 19
    %v2066 = vld [vmem:[%s2065] ss:$2 sm:$0xff]
    %s2067 = scalar_lea.vmem [#allocation2], 43
    %v2068 = vld [vmem:[%s2067] ss:$2 sm:$0xff]
    %s2069 = scalar_lea.vmem [#allocation2], 59
    %v2070 = vld [vmem:[%s2069] ss:$2 sm:$0xff]
    %s2071 = scalar_lea.vmem [#allocation2], 83
    %v2072 = vld [vmem:[%s2071] ss:$2 sm:$0xff]
    %s2073 = scalar_lea.vmem [#allocation2], 99
    %v2074 = vld [vmem:[%s2073] ss:$2 sm:$0xff]
    %s2075 = scalar_lea.vmem [#allocation2], 123
    %v2076 = vld [vmem:[%s2075] ss:$2 sm:$0xff]
    %s2077 = scalar_lea.vmem [#allocation2], 139
    %v2078 = vld [vmem:[%s2077] ss:$2 sm:$0xff]
    %s2079 = scalar_lea.vmem [#allocation2], 163
    %v2080 = vld [vmem:[%s2079] ss:$2 sm:$0xff]
    %s2081 = scalar_lea.vmem [#allocation2], 179
    %v2082 = vld [vmem:[%s2081] ss:$2 sm:$0xff]
    %s2083 = scalar_lea.vmem [#allocation2], 203
    %v2084 = vld [vmem:[%s2083] ss:$2 sm:$0xff]
    %s2085 = scalar_lea.vmem [#allocation2], 219
    %v2086 = vld [vmem:[%s2085] ss:$2 sm:$0xff]
    %s2087 = scalar_lea.vmem [#allocation2], 243
    %v2088 = vld [vmem:[%s2087] ss:$2 sm:$0xff]
    %s2089 = scalar_lea.vmem [#allocation2], 259
    %v2090 = vld [vmem:[%s2089] ss:$2 sm:$0xff]
    %s2091 = scalar_lea.vmem [#allocation2], 283
    %v2092 = vld [vmem:[%s2091] ss:$2 sm:$0xff]
    %s2093 = scalar_lea.vmem [#allocation2], 299
    %v2094 = vld [vmem:[%s2093] ss:$2 sm:$0xff]
    %s2095 = scalar_lea.vmem [#allocation2], 323
    %v2096 = vld [vmem:[%s2095] ss:$2 sm:$0xff]
    %s2097 = scalar_lea.vmem [#allocation2], 339
    %v2098 = vld [vmem:[%s2097] ss:$2 sm:$0xff]
    %s2099 = scalar_lea.vmem [#allocation2], 363
    %v2100 = vld [vmem:[%s2099] ss:$2 sm:$0xff]
    %s2101 = scalar_lea.vmem [#allocation2], 379
    %v2102 = vld [vmem:[%s2101] ss:$2 sm:$0xff]
    %s2103 = scalar_lea.vmem [#allocation2], 403
    %v2104 = vld [vmem:[%s2103] ss:$2 sm:$0xff]
    %s2105 = scalar_lea.vmem [#allocation2], 419
    %v2106 = vld [vmem:[%s2105] ss:$2 sm:$0xff]
    %s2107 = scalar_lea.vmem [#allocation2], 443
    %v2108 = vld [vmem:[%s2107] ss:$2 sm:$0xff]
    %s2109 = scalar_lea.vmem [#allocation2], 459
    %v2110 = vld [vmem:[%s2109] ss:$2 sm:$0xff]
    %s2111 = scalar_lea.vmem [#allocation2], 483
    %v2112 = vld [vmem:[%s2111] ss:$2 sm:$0xff]
    %s2113 = scalar_lea.vmem [#allocation2], 499
    %v2114 = vld [vmem:[%s2113] ss:$2 sm:$0xff]
    %s2115 = scalar_lea.vmem [#allocation2], 523
    %v2116 = vld [vmem:[%s2115] ss:$2 sm:$0xff]
    %s2117 = scalar_lea.vmem [#allocation2], 539
    %v2118 = vld [vmem:[%s2117] ss:$2 sm:$0xff]
    %s2119 = scalar_lea.vmem [#allocation2], 563
    %v2120 = vld [vmem:[%s2119] ss:$2 sm:$0xff]
    %s2121 = scalar_lea.vmem [#allocation2], 579
    %v2122 = vld [vmem:[%s2121] ss:$2 sm:$0xff]
    %s2123 = scalar_lea.vmem [#allocation2], 603
    %v2124 = vld [vmem:[%s2123] ss:$2 sm:$0xff]
    %s2125 = scalar_lea.vmem [#allocation2], 619
    %v2126 = vld [vmem:[%s2125] ss:$2 sm:$0xff]
    %v2127 = vpack.c.bf16 %v2066, %v2064
    %v2128 = vpack.c.bf16 %v2070, %v2068
    %v2129 = vpack.c.bf16 %v2074, %v2072
    %v2130 = vpack.c.bf16 %v2078, %v2076
    %v2131 = vpack.c.bf16 %v2082, %v2080
    %v2132 = vpack.c.bf16 %v2086, %v2084
    %v2133 = vpack.c.bf16 %v2090, %v2088
    %v2134 = vpack.c.bf16 %v2094, %v2092
    %v2135 = vpack.c.bf16 %v2098, %v2096
    %v2136 = vpack.c.bf16 %v2102, %v2100
    %v2137 = vpack.c.bf16 %v2106, %v2104
    %v2138 = vpack.c.bf16 %v2110, %v2108
    %v2139 = vpack.c.bf16 %v2114, %v2112
    %v2140 = vpack.c.bf16 %v2118, %v2116
    %v2141 = vpack.c.bf16 %v2122, %v2120
    %v2142 = vpack.c.bf16 %v2126, %v2124
    %s2143 = scalar_lea.vmem %s4, 192
    %v2144 = vld [vmem:[%s2143] sm:$0xf]
    %v2145 = vld [vmem:[%s2143 + $0x4] sm:$0xf]
    %v2146 = vld [vmem:[%s2143 + $0x8] sm:$0xf]
    %v2147 = vld [vmem:[%s2143 + $0xc] sm:$0xf]
    %v2148 = vld [vmem:[%s2143 + $0x10] sm:$0xf]
    %v2149 = vld [vmem:[%s2143 + $0x14] sm:$0xf]
    %v2150 = vld [vmem:[%s2143 + $0x18] sm:$0xf]
    %v2151 = vld [vmem:[%s2143 + $0x1c] sm:$0xf]
    %v2152 = vld [vmem:[%s2143 + $0x20] sm:$0xf]
    %v2153 = vld [vmem:[%s2143 + $0x24] sm:$0xf]
    %v2154 = vld [vmem:[%s2143 + $0x28] sm:$0xf]
    %v2155 = vld [vmem:[%s2143 + $0x2c] sm:$0xf]
    %v2156 = vld [vmem:[%s2143 + $0x30] sm:$0xf]
    %v2157 = vld [vmem:[%s2143 + $0x34] sm:$0xf]
    %v2158 = vld [vmem:[%s2143 + $0x38] sm:$0xf]
    %v2159 = vld [vmem:[%s2143 + $0x3c] sm:$0xf]
    %v2176 = vunpack.c.l.b16 %v2144
    %v2177 = vunpack.c.l.b16 %v2145
    %v2178 = vunpack.c.l.b16 %v2146
    %v2179 = vunpack.c.l.b16 %v2147
    %v2180 = vunpack.c.l.b16 %v2148
    %v2181 = vunpack.c.l.b16 %v2149
    %v2182 = vunpack.c.l.b16 %v2150
    %v2183 = vunpack.c.l.b16 %v2151
    %v2184 = vunpack.c.l.b16 %v2152
    %v2185 = vunpack.c.l.b16 %v2153
    %v2186 = vunpack.c.l.b16 %v2154
    %v2187 = vunpack.c.l.b16 %v2155
    %v2188 = vunpack.c.l.b16 %v2156
    %v2189 = vunpack.c.l.b16 %v2157
    %v2190 = vunpack.c.l.b16 %v2158
    %v2191 = vunpack.c.l.b16 %v2159
    %v2192 = vpack.c.b16 %v2177, %v2176
    %v2193 = vpack.c.b16 %v2179, %v2178
    %v2194 = vpack.c.b16 %v2181, %v2180
    %v2195 = vpack.c.b16 %v2183, %v2182
    %v2196 = vpack.c.b16 %v2185, %v2184
    %v2197 = vpack.c.b16 %v2187, %v2186
    %v2198 = vpack.c.b16 %v2189, %v2188
    %v2199 = vpack.c.b16 %v2191, %v2190
    %2208 = vmatprep.subr.bf16.mxu0 0
    %2209 = vmatpush1.bf16.msra.mxu0 %v2199
    %2210 = vmatprep.subr.bf16.mxu0 0
    %2211 = vmatpush1.bf16.msra.mxu0 %v2198
    %2212 = vmatprep.subr.bf16.mxu0 0
    %2213 = vmatpush1.bf16.msra.mxu0 %v2197
    %2214 = vmatprep.subr.bf16.mxu0 0
    %2215 = vmatpush1.bf16.msra.mxu0 %v2196
    %2216 = vmatprep.subr.bf16.mxu0 0
    %2217 = vmatpush1.bf16.msra.mxu0 %v2195
    %2218 = vmatprep.subr.bf16.mxu0 0
    %2219 = vmatpush1.bf16.msra.mxu0 %v2194
    %2220 = vmatprep.subr.bf16.mxu0 0
    %2221 = vmatpush1.bf16.msra.mxu0 %v2193
    %2222 = vmatprep.subr.bf16.mxu0 0
    %2223 = vmatpush1.bf16.msra.mxu0 %v2192
    %2224 = vmatprep.subr.bf16.mxu0 0
    %2225 = vmatpush2.bf16.msra.mxu0 0
    %2226 = vmatprep.subr.bf16.mxu0 0
    %2227 = vmatpush2.bf16.msra.mxu0 0
    %2228 = vmatprep.subr.bf16.mxu0 0
    %2229 = vmatpush2.bf16.msra.mxu0 0
    %2230 = vmatprep.subr.bf16.mxu0 0
    %2231 = vmatpush2.bf16.msra.mxu0 0
    %2232 = vmatprep.subr.bf16.mxu0 0
    %2233 = vmatpush2.bf16.msra.mxu0 0
    %2234 = vmatprep.subr.bf16.mxu0 0
    %2235 = vmatpush2.bf16.msra.mxu0 0
    %2236 = vmatprep.subr.bf16.mxu0 0
    %2237 = vmatpush2.bf16.msra.mxu0 0
    %2238 = vmatprep.subr.bf16.mxu0 0
    %2239 = vmatpush2.bf16.msra.mxu0 0
    %2240 = vmatprep.mubr.bf16.mxu0 0
    %2241 = vmatmul.mubr.bf16.gmra.mxu0 %v2127
    %v2242 = vpop.f32.mrf.mxu0
    %v2243 = vadd.f32 0.0, %v2242
    %v2244 = vpop.f32.mrf.mxu0
    %v2245 = vpop.f32.mrf.mxu0
    %v2246 = vadd.f32 0.0, %v2245
    %v2247 = vpop.f32.mrf.mxu0
    %2248 = vmatprep.mubr.bf16.mxu0 0
    %2249 = vmatmul.mubr.bf16.gmra.mxu0 %v2128
    %v2250 = vpop.f32.mrf.mxu0
    %v2251 = vadd.f32 0.0, %v2250
    %v2252 = vpop.f32.mrf.mxu0
    %v2253 = vpop.f32.mrf.mxu0
    %v2254 = vadd.f32 0.0, %v2253
    %v2255 = vpop.f32.mrf.mxu0
    %2256 = vmatprep.mubr.bf16.mxu0 0
    %2257 = vmatmul.mubr.bf16.gmra.mxu0 %v2129
    %v2258 = vpop.f32.mrf.mxu0
    %v2259 = vadd.f32 0.0, %v2258
    %v2260 = vpop.f32.mrf.mxu0
    %v2261 = vpop.f32.mrf.mxu0
    %v2262 = vadd.f32 0.0, %v2261
    %v2263 = vpop.f32.mrf.mxu0
    %2264 = vmatprep.mubr.bf16.mxu0 0
    %2265 = vmatmul.mubr.bf16.gmra.mxu0 %v2130
    %v2266 = vpop.f32.mrf.mxu0
    %v2267 = vadd.f32 0.0, %v2266
    %v2268 = vpop.f32.mrf.mxu0
    %v2269 = vpop.f32.mrf.mxu0
    %v2270 = vadd.f32 0.0, %v2269
    %v2271 = vpop.f32.mrf.mxu0
    %2272 = vmatprep.mubr.bf16.mxu0 0
    %2273 = vmatmul.mubr.bf16.gmra.mxu0 %v2131
    %v2274 = vpop.f32.mrf.mxu0
    %v2275 = vadd.f32 0.0, %v2274
    %v2276 = vpop.f32.mrf.mxu0
    %v2277 = vpop.f32.mrf.mxu0
    %v2278 = vadd.f32 0.0, %v2277
    %v2279 = vpop.f32.mrf.mxu0
    %2280 = vmatprep.mubr.bf16.mxu0 0
    %2281 = vmatmul.mubr.bf16.gmra.mxu0 %v2132
    %v2282 = vpop.f32.mrf.mxu0
    %v2283 = vadd.f32 0.0, %v2282
    %v2284 = vpop.f32.mrf.mxu0
    %v2285 = vpop.f32.mrf.mxu0
    %v2286 = vadd.f32 0.0, %v2285
    %v2287 = vpop.f32.mrf.mxu0
    %2288 = vmatprep.mubr.bf16.mxu0 0
    %2289 = vmatmul.mubr.bf16.gmra.mxu0 %v2133
    %v2290 = vpop.f32.mrf.mxu0
    %v2291 = vadd.f32 0.0, %v2290
    %v2292 = vpop.f32.mrf.mxu0
    %v2293 = vpop.f32.mrf.mxu0
    %v2294 = vadd.f32 0.0, %v2293
    %v2295 = vpop.f32.mrf.mxu0
    %2296 = vmatprep.mubr.bf16.mxu0 0
    %2297 = vmatmul.mubr.bf16.gmra.mxu0 %v2134
    %v2298 = vpop.f32.mrf.mxu0
    %v2299 = vadd.f32 0.0, %v2298
    %v2300 = vpop.f32.mrf.mxu0
    %v2301 = vpop.f32.mrf.mxu0
    %v2302 = vadd.f32 0.0, %v2301
    %v2303 = vpop.f32.mrf.mxu0
    %2304 = vmatprep.mubr.bf16.mxu0 0
    %2305 = vmatmul.mubr.bf16.gmra.mxu0 %v2135
    %v2306 = vpop.f32.mrf.mxu0
    %v2307 = vadd.f32 0.0, %v2306
    %v2308 = vpop.f32.mrf.mxu0
    %v2309 = vpop.f32.mrf.mxu0
    %v2310 = vadd.f32 0.0, %v2309
    %v2311 = vpop.f32.mrf.mxu0
    %2312 = vmatprep.mubr.bf16.mxu0 0
    %2313 = vmatmul.mubr.bf16.gmra.mxu0 %v2136
    %v2314 = vpop.f32.mrf.mxu0
    %v2315 = vadd.f32 0.0, %v2314
    %v2316 = vpop.f32.mrf.mxu0
    %v2317 = vpop.f32.mrf.mxu0
    %v2318 = vadd.f32 0.0, %v2317
    %v2319 = vpop.f32.mrf.mxu0
    %2320 = vmatprep.mubr.bf16.mxu0 0
    %2321 = vmatmul.mubr.bf16.gmra.mxu0 %v2137
    %v2322 = vpop.f32.mrf.mxu0
    %v2323 = vadd.f32 0.0, %v2322
    %v2324 = vpop.f32.mrf.mxu0
    %v2325 = vpop.f32.mrf.mxu0
    %v2326 = vadd.f32 0.0, %v2325
    %v2327 = vpop.f32.mrf.mxu0
    %2328 = vmatprep.mubr.bf16.mxu0 0
    %2329 = vmatmul.mubr.bf16.gmra.mxu0 %v2138
    %v2330 = vpop.f32.mrf.mxu0
    %v2331 = vadd.f32 0.0, %v2330
    %v2332 = vpop.f32.mrf.mxu0
    %v2333 = vpop.f32.mrf.mxu0
    %v2334 = vadd.f32 0.0, %v2333
    %v2335 = vpop.f32.mrf.mxu0
    %2336 = vmatprep.mubr.bf16.mxu0 0
    %2337 = vmatmul.mubr.bf16.gmra.mxu0 %v2139
    %v2338 = vpop.f32.mrf.mxu0
    %v2339 = vadd.f32 0.0, %v2338
    %v2340 = vpop.f32.mrf.mxu0
    %v2341 = vpop.f32.mrf.mxu0
    %v2342 = vadd.f32 0.0, %v2341
    %v2343 = vpop.f32.mrf.mxu0
    %2344 = vmatprep.mubr.bf16.mxu0 0
    %2345 = vmatmul.mubr.bf16.gmra.mxu0 %v2140
    %v2346 = vpop.f32.mrf.mxu0
    %v2347 = vadd.f32 0.0, %v2346
    %v2348 = vpop.f32.mrf.mxu0
    %v2349 = vpop.f32.mrf.mxu0
    %v2350 = vadd.f32 0.0, %v2349
    %v2351 = vpop.f32.mrf.mxu0
    %2352 = vmatprep.mubr.bf16.mxu0 0
    %2353 = vmatmul.mubr.bf16.gmra.mxu0 %v2141
    %v2354 = vpop.f32.mrf.mxu0
    %v2355 = vadd.f32 0.0, %v2354
    %v2356 = vpop.f32.mrf.mxu0
    %v2357 = vpop.f32.mrf.mxu0
    %v2358 = vadd.f32 0.0, %v2357
    %v2359 = vpop.f32.mrf.mxu0
    %2360 = vmatprep.mubr.bf16.mxu0 0
    %2361 = vmatmul.mubr.bf16.gmra.mxu0 %v2142
    %v2362 = vpop.f32.mrf.mxu0
    %v2363 = vadd.f32 0.0, %v2362
    %v2364 = vpop.f32.mrf.mxu0
    %v2365 = vpop.f32.mrf.mxu0
    %v2366 = vadd.f32 0.0, %v2365
    %v2367 = vpop.f32.mrf.mxu0
    %2368 = vdwg.mxu0
    %v2369 = vadd.f32 %v2031, %v2243
    %v2370 = vadd.f32 %v2032, %v2246
    %v2371 = vadd.f32 %v2033, %v2251
    %v2372 = vadd.f32 %v2034, %v2254
    %v2373 = vadd.f32 %v2035, %v2259
    %v2374 = vadd.f32 %v2036, %v2262
    %v2375 = vadd.f32 %v2037, %v2267
    %v2376 = vadd.f32 %v2038, %v2270
    %v2377 = vadd.f32 %v2039, %v2275
    %v2378 = vadd.f32 %v2040, %v2278
    %v2379 = vadd.f32 %v2041, %v2283
    %v2380 = vadd.f32 %v2042, %v2286
    %v2381 = vadd.f32 %v2043, %v2291
    %v2382 = vadd.f32 %v2044, %v2294
    %v2383 = vadd.f32 %v2045, %v2299
    %v2384 = vadd.f32 %v2046, %v2302
    %v2385 = vadd.f32 %v2047, %v2307
    %v2386 = vadd.f32 %v2048, %v2310
    %v2387 = vadd.f32 %v2049, %v2315
    %v2388 = vadd.f32 %v2050, %v2318
    %v2389 = vadd.f32 %v2051, %v2323
    %v2390 = vadd.f32 %v2052, %v2326
    %v2391 = vadd.f32 %v2053, %v2331
    %v2392 = vadd.f32 %v2054, %v2334
    %v2393 = vadd.f32 %v2055, %v2339
    %v2394 = vadd.f32 %v2056, %v2342
    %v2395 = vadd.f32 %v2057, %v2347
    %v2396 = vadd.f32 %v2058, %v2350
    %v2397 = vadd.f32 %v2059, %v2355
    %v2398 = vadd.f32 %v2060, %v2358
    %v2399 = vadd.f32 %v2061, %v2363
    %v2400 = vadd.f32 %v2062, %v2366
    %s2401 = scalar_lea.vmem [#allocation2], 4
    %v2402 = vld [vmem:[%s2401] ss:$2 sm:$0xff]
    %s2403 = scalar_lea.vmem [#allocation2], 20
    %v2404 = vld [vmem:[%s2403] ss:$2 sm:$0xff]
    %s2405 = scalar_lea.vmem [#allocation2], 44
    %v2406 = vld [vmem:[%s2405] ss:$2 sm:$0xff]
    %s2407 = scalar_lea.vmem [#allocation2], 60
    %v2408 = vld [vmem:[%s2407] ss:$2 sm:$0xff]
    %s2409 = scalar_lea.vmem [#allocation2], 84
    %v2410 = vld [vmem:[%s2409] ss:$2 sm:$0xff]
    %s2411 = scalar_lea.vmem [#allocation2], 100
    %v2412 = vld [vmem:[%s2411] ss:$2 sm:$0xff]
    %s2413 = scalar_lea.vmem [#allocation2], 124
    %v2414 = vld [vmem:[%s2413] ss:$2 sm:$0xff]
    %s2415 = scalar_lea.vmem [#allocation2], 140
    %v2416 = vld [vmem:[%s2415] ss:$2 sm:$0xff]
    %s2417 = scalar_lea.vmem [#allocation2], 164
    %v2418 = vld [vmem:[%s2417] ss:$2 sm:$0xff]
    %s2419 = scalar_lea.vmem [#allocation2], 180
    %v2420 = vld [vmem:[%s2419] ss:$2 sm:$0xff]
    %s2421 = scalar_lea.vmem [#allocation2], 204
    %v2422 = vld [vmem:[%s2421] ss:$2 sm:$0xff]
    %s2423 = scalar_lea.vmem [#allocation2], 220
    %v2424 = vld [vmem:[%s2423] ss:$2 sm:$0xff]
    %s2425 = scalar_lea.vmem [#allocation2], 244
    %v2426 = vld [vmem:[%s2425] ss:$2 sm:$0xff]
    %s2427 = scalar_lea.vmem [#allocation2], 260
    %v2428 = vld [vmem:[%s2427] ss:$2 sm:$0xff]
    %s2429 = scalar_lea.vmem [#allocation2], 284
    %v2430 = vld [vmem:[%s2429] ss:$2 sm:$0xff]
    %s2431 = scalar_lea.vmem [#allocation2], 300
    %v2432 = vld [vmem:[%s2431] ss:$2 sm:$0xff]
    %s2433 = scalar_lea.vmem [#allocation2], 324
    %v2434 = vld [vmem:[%s2433] ss:$2 sm:$0xff]
    %s2435 = scalar_lea.vmem [#allocation2], 340
    %v2436 = vld [vmem:[%s2435] ss:$2 sm:$0xff]
    %s2437 = scalar_lea.vmem [#allocation2], 364
    %v2438 = vld [vmem:[%s2437] ss:$2 sm:$0xff]
    %s2439 = scalar_lea.vmem [#allocation2], 380
    %v2440 = vld [vmem:[%s2439] ss:$2 sm:$0xff]
    %s2441 = scalar_lea.vmem [#allocation2], 404
    %v2442 = vld [vmem:[%s2441] ss:$2 sm:$0xff]
    %s2443 = scalar_lea.vmem [#allocation2], 420
    %v2444 = vld [vmem:[%s2443] ss:$2 sm:$0xff]
    %s2445 = scalar_lea.vmem [#allocation2], 444
    %v2446 = vld [vmem:[%s2445] ss:$2 sm:$0xff]
    %s2447 = scalar_lea.vmem [#allocation2], 460
    %v2448 = vld [vmem:[%s2447] ss:$2 sm:$0xff]
    %s2449 = scalar_lea.vmem [#allocation2], 484
    %v2450 = vld [vmem:[%s2449] ss:$2 sm:$0xff]
    %s2451 = scalar_lea.vmem [#allocation2], 500
    %v2452 = vld [vmem:[%s2451] ss:$2 sm:$0xff]
    %s2453 = scalar_lea.vmem [#allocation2], 524
    %v2454 = vld [vmem:[%s2453] ss:$2 sm:$0xff]
    %s2455 = scalar_lea.vmem [#allocation2], 540
    %v2456 = vld [vmem:[%s2455] ss:$2 sm:$0xff]
    %s2457 = scalar_lea.vmem [#allocation2], 564
    %v2458 = vld [vmem:[%s2457] ss:$2 sm:$0xff]
    %s2459 = scalar_lea.vmem [#allocation2], 580
    %v2460 = vld [vmem:[%s2459] ss:$2 sm:$0xff]
    %s2461 = scalar_lea.vmem [#allocation2], 604
    %v2462 = vld [vmem:[%s2461] ss:$2 sm:$0xff]
    %s2463 = scalar_lea.vmem [#allocation2], 620
    %v2464 = vld [vmem:[%s2463] ss:$2 sm:$0xff]
    %v2465 = vpack.c.bf16 %v2404, %v2402
    %v2466 = vpack.c.bf16 %v2408, %v2406
    %v2467 = vpack.c.bf16 %v2412, %v2410
    %v2468 = vpack.c.bf16 %v2416, %v2414
    %v2469 = vpack.c.bf16 %v2420, %v2418
    %v2470 = vpack.c.bf16 %v2424, %v2422
    %v2471 = vpack.c.bf16 %v2428, %v2426
    %v2472 = vpack.c.bf16 %v2432, %v2430
    %v2473 = vpack.c.bf16 %v2436, %v2434
    %v2474 = vpack.c.bf16 %v2440, %v2438
    %v2475 = vpack.c.bf16 %v2444, %v2442
    %v2476 = vpack.c.bf16 %v2448, %v2446
    %v2477 = vpack.c.bf16 %v2452, %v2450
    %v2478 = vpack.c.bf16 %v2456, %v2454
    %v2479 = vpack.c.bf16 %v2460, %v2458
    %v2480 = vpack.c.bf16 %v2464, %v2462
    %s2481 = scalar_lea.vmem %s4, 256
    %v2482 = vld [vmem:[%s2481] sm:$0xf]
    %v2483 = vld [vmem:[%s2481 + $0x4] sm:$0xf]
    %v2484 = vld [vmem:[%s2481 + $0x8] sm:$0xf]
    %v2485 = vld [vmem:[%s2481 + $0xc] sm:$0xf]
    %v2486 = vld [vmem:[%s2481 + $0x10] sm:$0xf]
    %v2487 = vld [vmem:[%s2481 + $0x14] sm:$0xf]
    %v2488 = vld [vmem:[%s2481 + $0x18] sm:$0xf]
    %v2489 = vld [vmem:[%s2481 + $0x1c] sm:$0xf]
    %v2490 = vld [vmem:[%s2481 + $0x20] sm:$0xf]
    %v2491 = vld [vmem:[%s2481 + $0x24] sm:$0xf]
    %v2492 = vld [vmem:[%s2481 + $0x28] sm:$0xf]
    %v2493 = vld [vmem:[%s2481 + $0x2c] sm:$0xf]
    %v2494 = vld [vmem:[%s2481 + $0x30] sm:$0xf]
    %v2495 = vld [vmem:[%s2481 + $0x34] sm:$0xf]
    %v2496 = vld [vmem:[%s2481 + $0x38] sm:$0xf]
    %v2497 = vld [vmem:[%s2481 + $0x3c] sm:$0xf]
    %v2514 = vunpack.c.l.b16 %v2482
    %v2515 = vunpack.c.l.b16 %v2483
    %v2516 = vunpack.c.l.b16 %v2484
    %v2517 = vunpack.c.l.b16 %v2485
    %v2518 = vunpack.c.l.b16 %v2486
    %v2519 = vunpack.c.l.b16 %v2487
    %v2520 = vunpack.c.l.b16 %v2488
    %v2521 = vunpack.c.l.b16 %v2489
    %v2522 = vunpack.c.l.b16 %v2490
    %v2523 = vunpack.c.l.b16 %v2491
    %v2524 = vunpack.c.l.b16 %v2492
    %v2525 = vunpack.c.l.b16 %v2493
    %v2526 = vunpack.c.l.b16 %v2494
    %v2527 = vunpack.c.l.b16 %v2495
    %v2528 = vunpack.c.l.b16 %v2496
    %v2529 = vunpack.c.l.b16 %v2497
    %v2530 = vpack.c.b16 %v2515, %v2514
    %v2531 = vpack.c.b16 %v2517, %v2516
    %v2532 = vpack.c.b16 %v2519, %v2518
    %v2533 = vpack.c.b16 %v2521, %v2520
    %v2534 = vpack.c.b16 %v2523, %v2522
    %v2535 = vpack.c.b16 %v2525, %v2524
    %v2536 = vpack.c.b16 %v2527, %v2526
    %v2537 = vpack.c.b16 %v2529, %v2528
    %2546 = vmatprep.subr.bf16.mxu0 0
    %2547 = vmatpush1.bf16.msra.mxu0 %v2537
    %2548 = vmatprep.subr.bf16.mxu0 0
    %2549 = vmatpush1.bf16.msra.mxu0 %v2536
    %2550 = vmatprep.subr.bf16.mxu0 0
    %2551 = vmatpush1.bf16.msra.mxu0 %v2535
    %2552 = vmatprep.subr.bf16.mxu0 0
    %2553 = vmatpush1.bf16.msra.mxu0 %v2534
    %2554 = vmatprep.subr.bf16.mxu0 0
    %2555 = vmatpush1.bf16.msra.mxu0 %v2533
    %2556 = vmatprep.subr.bf16.mxu0 0
    %2557 = vmatpush1.bf16.msra.mxu0 %v2532
    %2558 = vmatprep.subr.bf16.mxu0 0
    %2559 = vmatpush1.bf16.msra.mxu0 %v2531
    %2560 = vmatprep.subr.bf16.mxu0 0
    %2561 = vmatpush1.bf16.msra.mxu0 %v2530
    %2562 = vmatprep.subr.bf16.mxu0 0
    %2563 = vmatpush2.bf16.msra.mxu0 0
    %2564 = vmatprep.subr.bf16.mxu0 0
    %2565 = vmatpush2.bf16.msra.mxu0 0
    %2566 = vmatprep.subr.bf16.mxu0 0
    %2567 = vmatpush2.bf16.msra.mxu0 0
    %2568 = vmatprep.subr.bf16.mxu0 0
    %2569 = vmatpush2.bf16.msra.mxu0 0
    %2570 = vmatprep.subr.bf16.mxu0 0
    %2571 = vmatpush2.bf16.msra.mxu0 0
    %2572 = vmatprep.subr.bf16.mxu0 0
    %2573 = vmatpush2.bf16.msra.mxu0 0
    %2574 = vmatprep.subr.bf16.mxu0 0
    %2575 = vmatpush2.bf16.msra.mxu0 0
    %2576 = vmatprep.subr.bf16.mxu0 0
    %2577 = vmatpush2.bf16.msra.mxu0 0
    %2578 = vmatprep.mubr.bf16.mxu0 0
    %2579 = vmatmul.mubr.bf16.gmra.mxu0 %v2465
    %v2580 = vpop.f32.mrf.mxu0
    %v2581 = vadd.f32 0.0, %v2580
    %v2582 = vpop.f32.mrf.mxu0
    %v2583 = vpop.f32.mrf.mxu0
    %v2584 = vadd.f32 0.0, %v2583
    %v2585 = vpop.f32.mrf.mxu0
    %2586 = vmatprep.mubr.bf16.mxu0 0
    %2587 = vmatmul.mubr.bf16.gmra.mxu0 %v2466
    %v2588 = vpop.f32.mrf.mxu0
    %v2589 = vadd.f32 0.0, %v2588
    %v2590 = vpop.f32.mrf.mxu0
    %v2591 = vpop.f32.mrf.mxu0
    %v2592 = vadd.f32 0.0, %v2591
    %v2593 = vpop.f32.mrf.mxu0
    %2594 = vmatprep.mubr.bf16.mxu0 0
    %2595 = vmatmul.mubr.bf16.gmra.mxu0 %v2467
    %v2596 = vpop.f32.mrf.mxu0
    %v2597 = vadd.f32 0.0, %v2596
    %v2598 = vpop.f32.mrf.mxu0
    %v2599 = vpop.f32.mrf.mxu0
    %v2600 = vadd.f32 0.0, %v2599
    %v2601 = vpop.f32.mrf.mxu0
    %2602 = vmatprep.mubr.bf16.mxu0 0
    %2603 = vmatmul.mubr.bf16.gmra.mxu0 %v2468
    %v2604 = vpop.f32.mrf.mxu0
    %v2605 = vadd.f32 0.0, %v2604
    %v2606 = vpop.f32.mrf.mxu0
    %v2607 = vpop.f32.mrf.mxu0
    %v2608 = vadd.f32 0.0, %v2607
    %v2609 = vpop.f32.mrf.mxu0
    %2610 = vmatprep.mubr.bf16.mxu0 0
    %2611 = vmatmul.mubr.bf16.gmra.mxu0 %v2469
    %v2612 = vpop.f32.mrf.mxu0
    %v2613 = vadd.f32 0.0, %v2612
    %v2614 = vpop.f32.mrf.mxu0
    %v2615 = vpop.f32.mrf.mxu0
    %v2616 = vadd.f32 0.0, %v2615
    %v2617 = vpop.f32.mrf.mxu0
    %2618 = vmatprep.mubr.bf16.mxu0 0
    %2619 = vmatmul.mubr.bf16.gmra.mxu0 %v2470
    %v2620 = vpop.f32.mrf.mxu0
    %v2621 = vadd.f32 0.0, %v2620
    %v2622 = vpop.f32.mrf.mxu0
    %v2623 = vpop.f32.mrf.mxu0
    %v2624 = vadd.f32 0.0, %v2623
    %v2625 = vpop.f32.mrf.mxu0
    %2626 = vmatprep.mubr.bf16.mxu0 0
    %2627 = vmatmul.mubr.bf16.gmra.mxu0 %v2471
    %v2628 = vpop.f32.mrf.mxu0
    %v2629 = vadd.f32 0.0, %v2628
    %v2630 = vpop.f32.mrf.mxu0
    %v2631 = vpop.f32.mrf.mxu0
    %v2632 = vadd.f32 0.0, %v2631
    %v2633 = vpop.f32.mrf.mxu0
    %2634 = vmatprep.mubr.bf16.mxu0 0
    %2635 = vmatmul.mubr.bf16.gmra.mxu0 %v2472
    %v2636 = vpop.f32.mrf.mxu0
    %v2637 = vadd.f32 0.0, %v2636
    %v2638 = vpop.f32.mrf.mxu0
    %v2639 = vpop.f32.mrf.mxu0
    %v2640 = vadd.f32 0.0, %v2639
    %v2641 = vpop.f32.mrf.mxu0
    %2642 = vmatprep.mubr.bf16.mxu0 0
    %2643 = vmatmul.mubr.bf16.gmra.mxu0 %v2473
    %v2644 = vpop.f32.mrf.mxu0
    %v2645 = vadd.f32 0.0, %v2644
    %v2646 = vpop.f32.mrf.mxu0
    %v2647 = vpop.f32.mrf.mxu0
    %v2648 = vadd.f32 0.0, %v2647
    %v2649 = vpop.f32.mrf.mxu0
    %2650 = vmatprep.mubr.bf16.mxu0 0
    %2651 = vmatmul.mubr.bf16.gmra.mxu0 %v2474
    %v2652 = vpop.f32.mrf.mxu0
    %v2653 = vadd.f32 0.0, %v2652
    %v2654 = vpop.f32.mrf.mxu0
    %v2655 = vpop.f32.mrf.mxu0
    %v2656 = vadd.f32 0.0, %v2655
    %v2657 = vpop.f32.mrf.mxu0
    %2658 = vmatprep.mubr.bf16.mxu0 0
    %2659 = vmatmul.mubr.bf16.gmra.mxu0 %v2475
    %v2660 = vpop.f32.mrf.mxu0
    %v2661 = vadd.f32 0.0, %v2660
    %v2662 = vpop.f32.mrf.mxu0
    %v2663 = vpop.f32.mrf.mxu0
    %v2664 = vadd.f32 0.0, %v2663
    %v2665 = vpop.f32.mrf.mxu0
    %2666 = vmatprep.mubr.bf16.mxu0 0
    %2667 = vmatmul.mubr.bf16.gmra.mxu0 %v2476
    %v2668 = vpop.f32.mrf.mxu0
    %v2669 = vadd.f32 0.0, %v2668
    %v2670 = vpop.f32.mrf.mxu0
    %v2671 = vpop.f32.mrf.mxu0
    %v2672 = vadd.f32 0.0, %v2671
    %v2673 = vpop.f32.mrf.mxu0
    %2674 = vmatprep.mubr.bf16.mxu0 0
    %2675 = vmatmul.mubr.bf16.gmra.mxu0 %v2477
    %v2676 = vpop.f32.mrf.mxu0
    %v2677 = vadd.f32 0.0, %v2676
    %v2678 = vpop.f32.mrf.mxu0
    %v2679 = vpop.f32.mrf.mxu0
    %v2680 = vadd.f32 0.0, %v2679
    %v2681 = vpop.f32.mrf.mxu0
    %2682 = vmatprep.mubr.bf16.mxu0 0
    %2683 = vmatmul.mubr.bf16.gmra.mxu0 %v2478
    %v2684 = vpop.f32.mrf.mxu0
    %v2685 = vadd.f32 0.0, %v2684
    %v2686 = vpop.f32.mrf.mxu0
    %v2687 = vpop.f32.mrf.mxu0
    %v2688 = vadd.f32 0.0, %v2687
    %v2689 = vpop.f32.mrf.mxu0
    %2690 = vmatprep.mubr.bf16.mxu0 0
    %2691 = vmatmul.mubr.bf16.gmra.mxu0 %v2479
    %v2692 = vpop.f32.mrf.mxu0
    %v2693 = vadd.f32 0.0, %v2692
    %v2694 = vpop.f32.mrf.mxu0
    %v2695 = vpop.f32.mrf.mxu0
    %v2696 = vadd.f32 0.0, %v2695
    %v2697 = vpop.f32.mrf.mxu0
    %2698 = vmatprep.mubr.bf16.mxu0 0
    %2699 = vmatmul.mubr.bf16.gmra.mxu0 %v2480
    %v2700 = vpop.f32.mrf.mxu0
    %v2701 = vadd.f32 0.0, %v2700
    %v2702 = vpop.f32.mrf.mxu0
    %v2703 = vpop.f32.mrf.mxu0
    %v2704 = vadd.f32 0.0, %v2703
    %v2705 = vpop.f32.mrf.mxu0
    %2706 = vdwg.mxu0
    %v2707 = vadd.f32 %v2369, %v2581
    %v2708 = vadd.f32 %v2370, %v2584
    %v2709 = vadd.f32 %v2371, %v2589
    %v2710 = vadd.f32 %v2372, %v2592
    %v2711 = vadd.f32 %v2373, %v2597
    %v2712 = vadd.f32 %v2374, %v2600
    %v2713 = vadd.f32 %v2375, %v2605
    %v2714 = vadd.f32 %v2376, %v2608
    %v2715 = vadd.f32 %v2377, %v2613
    %v2716 = vadd.f32 %v2378, %v2616
    %v2717 = vadd.f32 %v2379, %v2621
    %v2718 = vadd.f32 %v2380, %v2624
    %v2719 = vadd.f32 %v2381, %v2629
    %v2720 = vadd.f32 %v2382, %v2632
    %v2721 = vadd.f32 %v2383, %v2637
    %v2722 = vadd.f32 %v2384, %v2640
    %v2723 = vadd.f32 %v2385, %v2645
    %v2724 = vadd.f32 %v2386, %v2648
    %v2725 = vadd.f32 %v2387, %v2653
    %v2726 = vadd.f32 %v2388, %v2656
    %v2727 = vadd.f32 %v2389, %v2661
    %v2728 = vadd.f32 %v2390, %v2664
    %v2729 = vadd.f32 %v2391, %v2669
    %v2730 = vadd.f32 %v2392, %v2672
    %v2731 = vadd.f32 %v2393, %v2677
    %v2732 = vadd.f32 %v2394, %v2680
    %v2733 = vadd.f32 %v2395, %v2685
    %v2734 = vadd.f32 %v2396, %v2688
    %v2735 = vadd.f32 %v2397, %v2693
    %v2736 = vadd.f32 %v2398, %v2696
    %v2737 = vadd.f32 %v2399, %v2701
    %v2738 = vadd.f32 %v2400, %v2704
    %v2739 = vld [vmem:[%s5] sm:$0x1]
    %v2741 = vlaneseq
    %v2742 = vshrl.u32 %v2741, 7
    %v2743 = vsub.s32 0, %v2742
    %v2744 = vrot.slane %v2739, %v2743
    %v2746 = vmul.f32 %v2707, %v2744
    %v2747 = vmul.f32 %v2708, %v2744
    %v2748 = vmul.f32 %v2709, %v2744
    %v2749 = vmul.f32 %v2710, %v2744
    %v2750 = vmul.f32 %v2711, %v2744
    %v2751 = vmul.f32 %v2712, %v2744
    %v2752 = vmul.f32 %v2713, %v2744
    %v2753 = vmul.f32 %v2714, %v2744
    %v2754 = vmul.f32 %v2715, %v2744
    %v2755 = vmul.f32 %v2716, %v2744
    %v2756 = vmul.f32 %v2717, %v2744
    %v2757 = vmul.f32 %v2718, %v2744
    %v2758 = vmul.f32 %v2719, %v2744
    %v2759 = vmul.f32 %v2720, %v2744
    %v2760 = vmul.f32 %v2721, %v2744
    %v2761 = vmul.f32 %v2722, %v2744
    %v2762 = vmul.f32 %v2723, %v2744
    %v2763 = vmul.f32 %v2724, %v2744
    %v2764 = vmul.f32 %v2725, %v2744
    %v2765 = vmul.f32 %v2726, %v2744
    %v2766 = vmul.f32 %v2727, %v2744
    %v2767 = vmul.f32 %v2728, %v2744
    %v2768 = vmul.f32 %v2729, %v2744
    %v2769 = vmul.f32 %v2730, %v2744
    %v2770 = vmul.f32 %v2731, %v2744
    %v2771 = vmul.f32 %v2732, %v2744
    %v2772 = vmul.f32 %v2733, %v2744
    %v2773 = vmul.f32 %v2734, %v2744
    %v2774 = vmul.f32 %v2735, %v2744
    %v2775 = vmul.f32 %v2736, %v2744
    %v2776 = vmul.f32 %v2737, %v2744
    %v2777 = vmul.f32 %v2738, %v2744
    %v2778 = vld [vmem:[%s6] sm:$0x1]
    %v2780 = vlaneseq
    %v2781 = vshrl.u32 %v2780, 7
    %v2782 = vsub.s32 0, %v2781
    %v2783 = vrot.slane %v2778, %v2782
    %v2785 = vadd.f32 %v2746, %v2783
    %v2786 = vadd.f32 %v2747, %v2783
    %v2787 = vadd.f32 %v2748, %v2783
    %v2788 = vadd.f32 %v2749, %v2783
    %v2789 = vadd.f32 %v2750, %v2783
    %v2790 = vadd.f32 %v2751, %v2783
    %v2791 = vadd.f32 %v2752, %v2783
    %v2792 = vadd.f32 %v2753, %v2783
    %v2793 = vadd.f32 %v2754, %v2783
    %v2794 = vadd.f32 %v2755, %v2783
    %v2795 = vadd.f32 %v2756, %v2783
    %v2796 = vadd.f32 %v2757, %v2783
    %v2797 = vadd.f32 %v2758, %v2783
    %v2798 = vadd.f32 %v2759, %v2783
    %v2799 = vadd.f32 %v2760, %v2783
    %v2800 = vadd.f32 %v2761, %v2783
    %v2801 = vadd.f32 %v2762, %v2783
    %v2802 = vadd.f32 %v2763, %v2783
    %v2803 = vadd.f32 %v2764, %v2783
    %v2804 = vadd.f32 %v2765, %v2783
    %v2805 = vadd.f32 %v2766, %v2783
    %v2806 = vadd.f32 %v2767, %v2783
    %v2807 = vadd.f32 %v2768, %v2783
    %v2808 = vadd.f32 %v2769, %v2783
    %v2809 = vadd.f32 %v2770, %v2783
    %v2810 = vadd.f32 %v2771, %v2783
    %v2811 = vadd.f32 %v2772, %v2783
    %v2812 = vadd.f32 %v2773, %v2783
    %v2813 = vadd.f32 %v2774, %v2783
    %v2814 = vadd.f32 %v2775, %v2783
    %v2815 = vadd.f32 %v2776, %v2783
    %v2816 = vadd.f32 %v2777, %v2783
    %vm2817 = vcmp.gt.f32.partialorder %v2785, 0.0
    %vm2818 = vcmp.gt.f32.partialorder %v2786, 0.0
    %vm2819 = vcmp.gt.f32.partialorder %v2787, 0.0
    %vm2820 = vcmp.gt.f32.partialorder %v2788, 0.0
    %vm2821 = vcmp.gt.f32.partialorder %v2789, 0.0
    %vm2822 = vcmp.gt.f32.partialorder %v2790, 0.0
    %vm2823 = vcmp.gt.f32.partialorder %v2791, 0.0
    %vm2824 = vcmp.gt.f32.partialorder %v2792, 0.0
    %vm2825 = vcmp.gt.f32.partialorder %v2793, 0.0
    %vm2826 = vcmp.gt.f32.partialorder %v2794, 0.0
    %vm2827 = vcmp.gt.f32.partialorder %v2795, 0.0
    %vm2828 = vcmp.gt.f32.partialorder %v2796, 0.0
    %vm2829 = vcmp.gt.f32.partialorder %v2797, 0.0
    %vm2830 = vcmp.gt.f32.partialorder %v2798, 0.0
    %vm2831 = vcmp.gt.f32.partialorder %v2799, 0.0
    %vm2832 = vcmp.gt.f32.partialorder %v2800, 0.0
    %vm2833 = vcmp.gt.f32.partialorder %v2801, 0.0
    %vm2834 = vcmp.gt.f32.partialorder %v2802, 0.0
    %vm2835 = vcmp.gt.f32.partialorder %v2803, 0.0
    %vm2836 = vcmp.gt.f32.partialorder %v2804, 0.0
    %vm2837 = vcmp.gt.f32.partialorder %v2805, 0.0
    %vm2838 = vcmp.gt.f32.partialorder %v2806, 0.0
    %vm2839 = vcmp.gt.f32.partialorder %v2807, 0.0
    %vm2840 = vcmp.gt.f32.partialorder %v2808, 0.0
    %vm2841 = vcmp.gt.f32.partialorder %v2809, 0.0
    %vm2842 = vcmp.gt.f32.partialorder %v2810, 0.0
    %vm2843 = vcmp.gt.f32.partialorder %v2811, 0.0
    %vm2844 = vcmp.gt.f32.partialorder %v2812, 0.0
    %vm2845 = vcmp.gt.f32.partialorder %v2813, 0.0
    %vm2846 = vcmp.gt.f32.partialorder %v2814, 0.0
    %vm2847 = vcmp.gt.f32.partialorder %v2815, 0.0
    %vm2848 = vcmp.gt.f32.partialorder %v2816, 0.0
    %v2849 = vmul.f32 %v2785, 0.01
    %v2850 = vmul.f32 %v2786, 0.01
    %v2851 = vmul.f32 %v2787, 0.01
    %v2852 = vmul.f32 %v2788, 0.01
    %v2853 = vmul.f32 %v2789, 0.01
    %v2854 = vmul.f32 %v2790, 0.01
    %v2855 = vmul.f32 %v2791, 0.01
    %v2856 = vmul.f32 %v2792, 0.01
    %v2857 = vmul.f32 %v2793, 0.01
    %v2858 = vmul.f32 %v2794, 0.01
    %v2859 = vmul.f32 %v2795, 0.01
    %v2860 = vmul.f32 %v2796, 0.01
    %v2861 = vmul.f32 %v2797, 0.01
    %v2862 = vmul.f32 %v2798, 0.01
    %v2863 = vmul.f32 %v2799, 0.01
    %v2864 = vmul.f32 %v2800, 0.01
    %v2865 = vmul.f32 %v2801, 0.01
    %v2866 = vmul.f32 %v2802, 0.01
    %v2867 = vmul.f32 %v2803, 0.01
    %v2868 = vmul.f32 %v2804, 0.01
    %v2869 = vmul.f32 %v2805, 0.01
    %v2870 = vmul.f32 %v2806, 0.01
    %v2871 = vmul.f32 %v2807, 0.01
    %v2872 = vmul.f32 %v2808, 0.01
    %v2873 = vmul.f32 %v2809, 0.01
    %v2874 = vmul.f32 %v2810, 0.01
    %v2875 = vmul.f32 %v2811, 0.01
    %v2876 = vmul.f32 %v2812, 0.01
    %v2877 = vmul.f32 %v2813, 0.01
    %v2878 = vmul.f32 %v2814, 0.01
    %v2879 = vmul.f32 %v2815, 0.01
    %v2880 = vmul.f32 %v2816, 0.01
    %v2881 = vsel %vm2817, %v2785, %v2849
    %v2882 = vsel %vm2818, %v2786, %v2850
    %v2883 = vsel %vm2819, %v2787, %v2851
    %v2884 = vsel %vm2820, %v2788, %v2852
    %v2885 = vsel %vm2821, %v2789, %v2853
    %v2886 = vsel %vm2822, %v2790, %v2854
    %v2887 = vsel %vm2823, %v2791, %v2855
    %v2888 = vsel %vm2824, %v2792, %v2856
    %v2889 = vsel %vm2825, %v2793, %v2857
    %v2890 = vsel %vm2826, %v2794, %v2858
    %v2891 = vsel %vm2827, %v2795, %v2859
    %v2892 = vsel %vm2828, %v2796, %v2860
    %v2893 = vsel %vm2829, %v2797, %v2861
    %v2894 = vsel %vm2830, %v2798, %v2862
    %v2895 = vsel %vm2831, %v2799, %v2863
    %v2896 = vsel %vm2832, %v2800, %v2864
    %v2897 = vsel %vm2833, %v2801, %v2865
    %v2898 = vsel %vm2834, %v2802, %v2866
    %v2899 = vsel %vm2835, %v2803, %v2867
    %v2900 = vsel %vm2836, %v2804, %v2868
    %v2901 = vsel %vm2837, %v2805, %v2869
    %v2902 = vsel %vm2838, %v2806, %v2870
    %v2903 = vsel %vm2839, %v2807, %v2871
    %v2904 = vsel %vm2840, %v2808, %v2872
    %v2905 = vsel %vm2841, %v2809, %v2873
    %v2906 = vsel %vm2842, %v2810, %v2874
    %v2907 = vsel %vm2843, %v2811, %v2875
    %v2908 = vsel %vm2844, %v2812, %v2876
    %v2909 = vsel %vm2845, %v2813, %v2877
    %v2910 = vsel %vm2846, %v2814, %v2878
    %v2911 = vsel %vm2847, %v2815, %v2879
    %v2912 = vsel %vm2848, %v2816, %v2880
    %2913 = vst [vmem:[#allocation2 + $0x2] sm:$0xff] %v2881
    %2914 = vst [vmem:[#allocation2 + $0xa] sm:$0xff] %v2882
    %2915 = vst [vmem:[#allocation2 + $0x2a] sm:$0xff] %v2883
    %2916 = vst [vmem:[#allocation2 + $0x32] sm:$0xff] %v2884
    %2917 = vst [vmem:[#allocation2 + $0x52] sm:$0xff] %v2885
    %2918 = vst [vmem:[#allocation2 + $0x5a] sm:$0xff] %v2886
    %2919 = vst [vmem:[#allocation2 + $0x7a] sm:$0xff] %v2887
    %2920 = vst [vmem:[#allocation2 + $0x82] sm:$0xff] %v2888
    %2921 = vst [vmem:[#allocation2 + $0xa2] sm:$0xff] %v2889
    %2922 = vst [vmem:[#allocation2 + $0xaa] sm:$0xff] %v2890
    %2923 = vst [vmem:[#allocation2 + $0xca] sm:$0xff] %v2891
    %2924 = vst [vmem:[#allocation2 + $0xd2] sm:$0xff] %v2892
    %2925 = vst [vmem:[#allocation2 + $0xf2] sm:$0xff] %v2893
    %2926 = vst [vmem:[#allocation2 + $0xfa] sm:$0xff] %v2894
    %2927 = vst [vmem:[#allocation2 + $0x11a] sm:$0xff] %v2895
    %2928 = vst [vmem:[#allocation2 + $0x122] sm:$0xff] %v2896
    %2929 = vst [vmem:[#allocation2 + $0x142] sm:$0xff] %v2897
    %2930 = vst [vmem:[#allocation2 + $0x14a] sm:$0xff] %v2898
    %2931 = vst [vmem:[#allocation2 + $0x16a] sm:$0xff] %v2899
    %2932 = vst [vmem:[#allocation2 + $0x172] sm:$0xff] %v2900
    %2933 = vst [vmem:[#allocation2 + $0x192] sm:$0xff] %v2901
    %2934 = vst [vmem:[#allocation2 + $0x19a] sm:$0xff] %v2902
    %2935 = vst [vmem:[#allocation2 + $0x1ba] sm:$0xff] %v2903
    %2936 = vst [vmem:[#allocation2 + $0x1c2] sm:$0xff] %v2904
    %2937 = vst [vmem:[#allocation2 + $0x1e2] sm:$0xff] %v2905
    %2938 = vst [vmem:[#allocation2 + $0x1ea] sm:$0xff] %v2906
    %2939 = vst [vmem:[#allocation2 + $0x20a] sm:$0xff] %v2907
    %2940 = vst [vmem:[#allocation2 + $0x212] sm:$0xff] %v2908
    %2941 = vst [vmem:[#allocation2 + $0x232] sm:$0xff] %v2909
    %2942 = vst [vmem:[#allocation2 + $0x23a] sm:$0xff] %v2910
    %2943 = vst [vmem:[#allocation2 + $0x25a] sm:$0xff] %v2911
    %2944 = vst [vmem:[#allocation2 + $0x262] sm:$0xff] %v2912
    %2945 = vst [vmem:[#allocation2 + $0x12] sm:$0x1] 0.0
    %2946 = vst [vmem:[#allocation2 + $0x3a] sm:$0x1] 0.0
    %2947 = vst [vmem:[#allocation2 + $0x62] sm:$0x1] 0.0
    %2948 = vst [vmem:[#allocation2 + $0x8a] sm:$0x1] 0.0
    %2949 = vst [vmem:[#allocation2 + $0xb2] sm:$0x1] 0.0
    %2950 = vst [vmem:[#allocation2 + $0xda] sm:$0x1] 0.0
    %2951 = vst [vmem:[#allocation2 + $0x102] sm:$0x1] 0.0
    %2952 = vst [vmem:[#allocation2 + $0x12a] sm:$0x1] 0.0
    %2953 = vst [vmem:[#allocation2 + $0x152] sm:$0x1] 0.0
    %2954 = vst [vmem:[#allocation2 + $0x17a] sm:$0x1] 0.0
    %2955 = vst [vmem:[#allocation2 + $0x1a2] sm:$0x1] 0.0
    %2956 = vst [vmem:[#allocation2 + $0x1ca] sm:$0x1] 0.0
    %2957 = vst [vmem:[#allocation2 + $0x1f2] sm:$0x1] 0.0
    %2958 = vst [vmem:[#allocation2 + $0x21a] sm:$0x1] 0.0
    %2959 = vst [vmem:[#allocation2 + $0x242] sm:$0x1] 0.0
    %2960 = vst [vmem:[#allocation2 + $0x26a] sm:$0x1] 0.0
    %v2961 = vld [vmem:[#allocation2] ss:$2 sm:$0xff]
    %v2962 = vld [vmem:[%s1118] ss:$2 sm:$0xff]
    %v2963 = vld [vmem:[%s1122] ss:$2 sm:$0xff]
    %v2964 = vld [vmem:[%s1126] ss:$2 sm:$0xff]
    %v2965 = vld [vmem:[%s1130] ss:$2 sm:$0xff]
    %v2966 = vld [vmem:[%s1134] ss:$2 sm:$0xff]
    %v2967 = vld [vmem:[%s1138] ss:$2 sm:$0xff]
    %v2968 = vld [vmem:[%s1142] ss:$2 sm:$0xff]
    %v2969 = vld [vmem:[%s1146] ss:$2 sm:$0xff]
    %v2970 = vld [vmem:[%s1150] ss:$2 sm:$0xff]
    %v2971 = vld [vmem:[%s1154] ss:$2 sm:$0xff]
    %v2972 = vld [vmem:[%s1158] ss:$2 sm:$0xff]
    %v2973 = vld [vmem:[%s1162] ss:$2 sm:$0xff]
    %v2974 = vld [vmem:[%s1166] ss:$2 sm:$0xff]
    %v2975 = vld [vmem:[%s1170] ss:$2 sm:$0xff]
    %v2976 = vld [vmem:[%s1174] ss:$2 sm:$0xff]
    %v2977 = vpack.c.bf16 %v2962, %v2961
    %v2978 = vpack.c.bf16 %v2964, %v2963
    %v2979 = vpack.c.bf16 %v2966, %v2965
    %v2980 = vpack.c.bf16 %v2968, %v2967
    %v2981 = vpack.c.bf16 %v2970, %v2969
    %v2982 = vpack.c.bf16 %v2972, %v2971
    %v2983 = vpack.c.bf16 %v2974, %v2973
    %v2984 = vpack.c.bf16 %v2976, %v2975
    %v2985 = vld [vmem:[#allocation3] sm:$0xf]
    %v2986 = vld [vmem:[#allocation3 + $0x4] sm:$0xf]
    %v2987 = vld [vmem:[#allocation3 + $0x8] sm:$0xf]
    %v2988 = vld [vmem:[#allocation3 + $0xc] sm:$0xf]
    %v2989 = vld [vmem:[#allocation3 + $0x10] sm:$0xf]
    %v2990 = vld [vmem:[#allocation3 + $0x14] sm:$0xf]
    %v2991 = vld [vmem:[#allocation3 + $0x18] sm:$0xf]
    %v2992 = vld [vmem:[#allocation3 + $0x1c] sm:$0xf]
    %v2993 = vld [vmem:[#allocation3 + $0x20] sm:$0xf]
    %v2994 = vld [vmem:[#allocation3 + $0x24] sm:$0xf]
    %v2995 = vld [vmem:[#allocation3 + $0x28] sm:$0xf]
    %v2996 = vld [vmem:[#allocation3 + $0x2c] sm:$0xf]
    %v2997 = vld [vmem:[#allocation3 + $0x30] sm:$0xf]
    %v2998 = vld [vmem:[#allocation3 + $0x34] sm:$0xf]
    %v2999 = vld [vmem:[#allocation3 + $0x38] sm:$0xf]
    %v3000 = vld [vmem:[#allocation3 + $0x3c] sm:$0xf]
    %v3001 = vld [vmem:[%s1210] ss:$2 sm:$0xff]
    %v3002 = vld [vmem:[%s1214] ss:$2 sm:$0xff]
    %v3003 = vld [vmem:[%s1218] ss:$2 sm:$0xff]
    %v3004 = vld [vmem:[%s1222] ss:$2 sm:$0xff]
    %v3005 = vld [vmem:[%s1226] ss:$2 sm:$0xff]
    %v3006 = vld [vmem:[%s1230] ss:$2 sm:$0xff]
    %v3007 = vld [vmem:[%s1234] ss:$2 sm:$0xff]
    %v3008 = vld [vmem:[%s1238] ss:$2 sm:$0xff]
    %v3009 = vld [vmem:[%s1242] ss:$2 sm:$0xff]
    %v3010 = vld [vmem:[%s1246] ss:$2 sm:$0xff]
    %v3011 = vld [vmem:[%s1250] ss:$2 sm:$0xff]
    %v3012 = vld [vmem:[%s1254] ss:$2 sm:$0xff]
    %v3013 = vld [vmem:[%s1258] ss:$2 sm:$0xff]
    %v3014 = vld [vmem:[%s1262] ss:$2 sm:$0xff]
    %v3015 = vld [vmem:[%s1266] ss:$2 sm:$0xff]
    %v3016 = vld [vmem:[%s1270] ss:$2 sm:$0xff]
    %v3017 = vpack.c.bf16 %v3002, %v3001
    %v3018 = vpack.c.bf16 %v3004, %v3003
    %v3019 = vpack.c.bf16 %v3006, %v3005
    %v3020 = vpack.c.bf16 %v3008, %v3007
    %v3021 = vpack.c.bf16 %v3010, %v3009
    %v3022 = vpack.c.bf16 %v3012, %v3011
    %v3023 = vpack.c.bf16 %v3014, %v3013
    %v3024 = vpack.c.bf16 %v3016, %v3015
    %s3025 = scalar_lea.vmem [#allocation3], 64
    %v3026 = vld [vmem:[%s3025] sm:$0xf]
    %v3027 = vld [vmem:[%s3025 + $0x4] sm:$0xf]
    %v3028 = vld [vmem:[%s3025 + $0x8] sm:$0xf]
    %v3029 = vld [vmem:[%s3025 + $0xc] sm:$0xf]
    %v3030 = vld [vmem:[%s3025 + $0x10] sm:$0xf]
    %v3031 = vld [vmem:[%s3025 + $0x14] sm:$0xf]
    %v3032 = vld [vmem:[%s3025 + $0x18] sm:$0xf]
    %v3033 = vld [vmem:[%s3025 + $0x1c] sm:$0xf]
    %v3034 = vld [vmem:[%s3025 + $0x20] sm:$0xf]
    %v3035 = vld [vmem:[%s3025 + $0x24] sm:$0xf]
    %v3036 = vld [vmem:[%s3025 + $0x28] sm:$0xf]
    %v3037 = vld [vmem:[%s3025 + $0x2c] sm:$0xf]
    %v3038 = vld [vmem:[%s3025 + $0x30] sm:$0xf]
    %v3039 = vld [vmem:[%s3025 + $0x34] sm:$0xf]
    %v3040 = vld [vmem:[%s3025 + $0x38] sm:$0xf]
    %v3041 = vld [vmem:[%s3025 + $0x3c] sm:$0xf]
    %v3058 = vunpack.c.l.b16 %v3026
    %v3059 = vunpack.c.l.b16 %v3027
    %v3060 = vunpack.c.l.b16 %v3028
    %v3061 = vunpack.c.l.b16 %v3029
    %v3062 = vunpack.c.l.b16 %v3030
    %v3063 = vunpack.c.l.b16 %v3031
    %v3064 = vunpack.c.l.b16 %v3032
    %v3065 = vunpack.c.l.b16 %v3033
    %v3066 = vunpack.c.l.b16 %v3034
    %v3067 = vunpack.c.l.b16 %v3035
    %v3068 = vunpack.c.l.b16 %v3036
    %v3069 = vunpack.c.l.b16 %v3037
    %v3070 = vunpack.c.l.b16 %v3038
    %v3071 = vunpack.c.l.b16 %v3039
    %v3072 = vunpack.c.l.b16 %v3040
    %v3073 = vunpack.c.l.b16 %v3041
    %v3074 = vpack.c.b16 %v3059, %v3058
    %v3075 = vpack.c.b16 %v3061, %v3060
    %v3076 = vpack.c.b16 %v3063, %v3062
    %v3077 = vpack.c.b16 %v3065, %v3064
    %v3078 = vpack.c.b16 %v3067, %v3066
    %v3079 = vpack.c.b16 %v3069, %v3068
    %v3080 = vpack.c.b16 %v3071, %v3070
    %v3081 = vpack.c.b16 %v3073, %v3072
    %3090 = vmatprep.subr.bf16.mxu0 0
    %3091 = vmatpush1.bf16.msra.mxu0 %v3081
    %3092 = vmatprep.subr.bf16.mxu0 0
    %3093 = vmatpush1.bf16.msra.mxu0 %v3080
    %3094 = vmatprep.subr.bf16.mxu0 0
    %3095 = vmatpush1.bf16.msra.mxu0 %v3079
    %3096 = vmatprep.subr.bf16.mxu0 0
    %3097 = vmatpush1.bf16.msra.mxu0 %v3078
    %3098 = vmatprep.subr.bf16.mxu0 0
    %3099 = vmatpush1.bf16.msra.mxu0 %v3077
    %3100 = vmatprep.subr.bf16.mxu0 0
    %3101 = vmatpush1.bf16.msra.mxu0 %v3076
    %3102 = vmatprep.subr.bf16.mxu0 0
    %3103 = vmatpush1.bf16.msra.mxu0 %v3075
    %3104 = vmatprep.subr.bf16.mxu0 0
    %3105 = vmatpush1.bf16.msra.mxu0 %v3074
    %3106 = vmatprep.subr.bf16.mxu0 0
    %3107 = vmatpush2.bf16.msra.mxu0 0
    %3108 = vmatprep.subr.bf16.mxu0 0
    %3109 = vmatpush2.bf16.msra.mxu0 0
    %3110 = vmatprep.subr.bf16.mxu0 0
    %3111 = vmatpush2.bf16.msra.mxu0 0
    %3112 = vmatprep.subr.bf16.mxu0 0
    %3113 = vmatpush2.bf16.msra.mxu0 0
    %3114 = vmatprep.subr.bf16.mxu0 0
    %3115 = vmatpush2.bf16.msra.mxu0 0
    %3116 = vmatprep.subr.bf16.mxu0 0
    %3117 = vmatpush2.bf16.msra.mxu0 0
    %3118 = vmatprep.subr.bf16.mxu0 0
    %3119 = vmatpush2.bf16.msra.mxu0 0
    %3120 = vmatprep.subr.bf16.mxu0 0
    %3121 = vmatpush2.bf16.msra.mxu0 0
    %3122 = vmatprep.mubr.bf16.mxu0 0
    %3123 = vmatmul.mubr.bf16.gmra.mxu0 %v3017
    %v3124 = vpop.f32.mrf.mxu0
    %v3125 = vadd.f32 0.0, %v3124
    %v3126 = vpop.f32.mrf.mxu0
    %v3127 = vpop.f32.mrf.mxu0
    %v3128 = vadd.f32 0.0, %v3127
    %v3129 = vpop.f32.mrf.mxu0
    %3130 = vmatprep.mubr.bf16.mxu0 0
    %3131 = vmatmul.mubr.bf16.gmra.mxu0 %v3018
    %v3132 = vpop.f32.mrf.mxu0
    %v3133 = vadd.f32 0.0, %v3132
    %v3134 = vpop.f32.mrf.mxu0
    %v3135 = vpop.f32.mrf.mxu0
    %v3136 = vadd.f32 0.0, %v3135
    %v3137 = vpop.f32.mrf.mxu0
    %3138 = vmatprep.mubr.bf16.mxu0 0
    %3139 = vmatmul.mubr.bf16.gmra.mxu0 %v3019
    %v3140 = vpop.f32.mrf.mxu0
    %v3141 = vadd.f32 0.0, %v3140
    %v3142 = vpop.f32.mrf.mxu0
    %v3143 = vpop.f32.mrf.mxu0
    %v3144 = vadd.f32 0.0, %v3143
    %v3145 = vpop.f32.mrf.mxu0
    %3146 = vmatprep.mubr.bf16.mxu0 0
    %3147 = vmatmul.mubr.bf16.gmra.mxu0 %v3020
    %v3148 = vpop.f32.mrf.mxu0
    %v3149 = vadd.f32 0.0, %v3148
    %v3150 = vpop.f32.mrf.mxu0
    %v3151 = vpop.f32.mrf.mxu0
    %v3152 = vadd.f32 0.0, %v3151
    %v3153 = vpop.f32.mrf.mxu0
    %3154 = vmatprep.mubr.bf16.mxu0 0
    %3155 = vmatmul.mubr.bf16.gmra.mxu0 %v3021
    %v3156 = vpop.f32.mrf.mxu0
    %v3157 = vadd.f32 0.0, %v3156
    %v3158 = vpop.f32.mrf.mxu0
    %v3159 = vpop.f32.mrf.mxu0
    %v3160 = vadd.f32 0.0, %v3159
    %v3161 = vpop.f32.mrf.mxu0
    %3162 = vmatprep.mubr.bf16.mxu0 0
    %3163 = vmatmul.mubr.bf16.gmra.mxu0 %v3022
    %v3164 = vpop.f32.mrf.mxu0
    %v3165 = vadd.f32 0.0, %v3164
    %v3166 = vpop.f32.mrf.mxu0
    %v3167 = vpop.f32.mrf.mxu0
    %v3168 = vadd.f32 0.0, %v3167
    %v3169 = vpop.f32.mrf.mxu0
    %3170 = vmatprep.mubr.bf16.mxu0 0
    %3171 = vmatmul.mubr.bf16.gmra.mxu0 %v3023
    %v3172 = vpop.f32.mrf.mxu0
    %v3173 = vadd.f32 0.0, %v3172
    %v3174 = vpop.f32.mrf.mxu0
    %v3175 = vpop.f32.mrf.mxu0
    %v3176 = vadd.f32 0.0, %v3175
    %v3177 = vpop.f32.mrf.mxu0
    %3178 = vmatprep.mubr.bf16.mxu0 0
    %3179 = vmatmul.mubr.bf16.gmra.mxu0 %v3024
    %v3180 = vpop.f32.mrf.mxu0
    %v3181 = vadd.f32 0.0, %v3180
    %v3182 = vpop.f32.mrf.mxu0
    %v3183 = vpop.f32.mrf.mxu0
    %v3184 = vadd.f32 0.0, %v3183
    %v3185 = vpop.f32.mrf.mxu0
    %3186 = vdwg.mxu0
    %v3203 = vunpack.c.l.b16 %v2985
    %v3204 = vunpack.c.l.b16 %v2986
    %v3205 = vunpack.c.l.b16 %v2987
    %v3206 = vunpack.c.l.b16 %v2988
    %v3207 = vunpack.c.l.b16 %v2989
    %v3208 = vunpack.c.l.b16 %v2990
    %v3209 = vunpack.c.l.b16 %v2991
    %v3210 = vunpack.c.l.b16 %v2992
    %v3211 = vunpack.c.l.b16 %v2993
    %v3212 = vunpack.c.l.b16 %v2994
    %v3213 = vunpack.c.l.b16 %v2995
    %v3214 = vunpack.c.l.b16 %v2996
    %v3215 = vunpack.c.l.b16 %v2997
    %v3216 = vunpack.c.l.b16 %v2998
    %v3217 = vunpack.c.l.b16 %v2999
    %v3218 = vunpack.c.l.b16 %v3000
    %v3219 = vpack.c.b16 %v3204, %v3203
    %v3220 = vpack.c.b16 %v3206, %v3205
    %v3221 = vpack.c.b16 %v3208, %v3207
    %v3222 = vpack.c.b16 %v3210, %v3209
    %v3223 = vpack.c.b16 %v3212, %v3211
    %v3224 = vpack.c.b16 %v3214, %v3213
    %v3225 = vpack.c.b16 %v3216, %v3215
    %v3226 = vpack.c.b16 %v3218, %v3217
    %3235 = vmatprep.subr.bf16.mxu0 0
    %3236 = vmatpush1.bf16.msra.mxu0 %v3226
    %3237 = vmatprep.subr.bf16.mxu0 0
    %3238 = vmatpush1.bf16.msra.mxu0 %v3225
    %3239 = vmatprep.subr.bf16.mxu0 0
    %3240 = vmatpush1.bf16.msra.mxu0 %v3224
    %3241 = vmatprep.subr.bf16.mxu0 0
    %3242 = vmatpush1.bf16.msra.mxu0 %v3223
    %3243 = vmatprep.subr.bf16.mxu0 0
    %3244 = vmatpush1.bf16.msra.mxu0 %v3222
    %3245 = vmatprep.subr.bf16.mxu0 0
    %3246 = vmatpush1.bf16.msra.mxu0 %v3221
    %3247 = vmatprep.subr.bf16.mxu0 0
    %3248 = vmatpush1.bf16.msra.mxu0 %v3220
    %3249 = vmatprep.subr.bf16.mxu0 0
    %3250 = vmatpush1.bf16.msra.mxu0 %v3219
    %3251 = vmatprep.subr.bf16.mxu0 0
    %3252 = vmatpush2.bf16.msra.mxu0 0
    %3253 = vmatprep.subr.bf16.mxu0 0
    %3254 = vmatpush2.bf16.msra.mxu0 0
    %3255 = vmatprep.subr.bf16.mxu0 0
    %3256 = vmatpush2.bf16.msra.mxu0 0
    %3257 = vmatprep.subr.bf16.mxu0 0
    %3258 = vmatpush2.bf16.msra.mxu0 0
    %3259 = vmatprep.subr.bf16.mxu0 0
    %3260 = vmatpush2.bf16.msra.mxu0 0
    %3261 = vmatprep.subr.bf16.mxu0 0
    %3262 = vmatpush2.bf16.msra.mxu0 0
    %3263 = vmatprep.subr.bf16.mxu0 0
    %3264 = vmatpush2.bf16.msra.mxu0 0
    %3265 = vmatprep.subr.bf16.mxu0 0
    %3266 = vmatpush2.bf16.msra.mxu0 0
    %3267 = vmatprep.mubr.bf16.mxu0 0
    %3268 = vmatmul.mubr.bf16.gmra.mxu0 %v2977
    %v3269 = vpop.f32.mrf.mxu0
    %v3270 = vadd.f32 %v3125, %v3269
    %v3271 = vpop.f32.mrf.mxu0
    %v3272 = vpop.f32.mrf.mxu0
    %v3273 = vadd.f32 %v3128, %v3272
    %v3274 = vpop.f32.mrf.mxu0
    %3275 = vmatprep.mubr.bf16.mxu0 0
    %3276 = vmatmul.mubr.bf16.gmra.mxu0 %v2978
    %v3277 = vpop.f32.mrf.mxu0
    %v3278 = vadd.f32 %v3133, %v3277
    %v3279 = vpop.f32.mrf.mxu0
    %v3280 = vpop.f32.mrf.mxu0
    %v3281 = vadd.f32 %v3136, %v3280
    %v3282 = vpop.f32.mrf.mxu0
    %3283 = vmatprep.mubr.bf16.mxu0 0
    %3284 = vmatmul.mubr.bf16.gmra.mxu0 %v2979
    %v3285 = vpop.f32.mrf.mxu0
    %v3286 = vadd.f32 %v3141, %v3285
    %v3287 = vpop.f32.mrf.mxu0
    %v3288 = vpop.f32.mrf.mxu0
    %v3289 = vadd.f32 %v3144, %v3288
    %v3290 = vpop.f32.mrf.mxu0
    %3291 = vmatprep.mubr.bf16.mxu0 0
    %3292 = vmatmul.mubr.bf16.gmra.mxu0 %v2980
    %v3293 = vpop.f32.mrf.mxu0
    %v3294 = vadd.f32 %v3149, %v3293
    %v3295 = vpop.f32.mrf.mxu0
    %v3296 = vpop.f32.mrf.mxu0
    %v3297 = vadd.f32 %v3152, %v3296
    %v3298 = vpop.f32.mrf.mxu0
    %3299 = vmatprep.mubr.bf16.mxu0 0
    %3300 = vmatmul.mubr.bf16.gmra.mxu0 %v2981
    %v3301 = vpop.f32.mrf.mxu0
    %v3302 = vadd.f32 %v3157, %v3301
    %v3303 = vpop.f32.mrf.mxu0
    %v3304 = vpop.f32.mrf.mxu0
    %v3305 = vadd.f32 %v3160, %v3304
    %v3306 = vpop.f32.mrf.mxu0
    %3307 = vmatprep.mubr.bf16.mxu0 0
    %3308 = vmatmul.mubr.bf16.gmra.mxu0 %v2982
    %v3309 = vpop.f32.mrf.mxu0
    %v3310 = vadd.f32 %v3165, %v3309
    %v3311 = vpop.f32.mrf.mxu0
    %v3312 = vpop.f32.mrf.mxu0
    %v3313 = vadd.f32 %v3168, %v3312
    %v3314 = vpop.f32.mrf.mxu0
    %3315 = vmatprep.mubr.bf16.mxu0 0
    %3316 = vmatmul.mubr.bf16.gmra.mxu0 %v2983
    %v3317 = vpop.f32.mrf.mxu0
    %v3318 = vadd.f32 %v3173, %v3317
    %v3319 = vpop.f32.mrf.mxu0
    %v3320 = vpop.f32.mrf.mxu0
    %v3321 = vadd.f32 %v3176, %v3320
    %v3322 = vpop.f32.mrf.mxu0
    %3323 = vmatprep.mubr.bf16.mxu0 0
    %3324 = vmatmul.mubr.bf16.gmra.mxu0 %v2984
    %v3325 = vpop.f32.mrf.mxu0
    %v3326 = vadd.f32 %v3181, %v3325
    %v3327 = vpop.f32.mrf.mxu0
    %v3328 = vpop.f32.mrf.mxu0
    %v3329 = vadd.f32 %v3184, %v3328
    %v3330 = vpop.f32.mrf.mxu0
    %3331 = vdwg.mxu0
    %v3332 = vld [vmem:[%s1725] ss:$2 sm:$0xff]
    %v3333 = vld [vmem:[%s1729] ss:$2 sm:$0xff]
    %v3334 = vld [vmem:[%s1733] ss:$2 sm:$0xff]
    %v3335 = vld [vmem:[%s1737] ss:$2 sm:$0xff]
    %v3336 = vld [vmem:[%s1741] ss:$2 sm:$0xff]
    %v3337 = vld [vmem:[%s1745] ss:$2 sm:$0xff]
    %v3338 = vld [vmem:[%s1749] ss:$2 sm:$0xff]
    %v3339 = vld [vmem:[%s1753] ss:$2 sm:$0xff]
    %v3340 = vld [vmem:[%s1757] ss:$2 sm:$0xff]
    %v3341 = vld [vmem:[%s1761] ss:$2 sm:$0xff]
    %v3342 = vld [vmem:[%s1765] ss:$2 sm:$0xff]
    %v3343 = vld [vmem:[%s1769] ss:$2 sm:$0xff]
    %v3344 = vld [vmem:[%s1773] ss:$2 sm:$0xff]
    %v3345 = vld [vmem:[%s1777] ss:$2 sm:$0xff]
    %v3346 = vld [vmem:[%s1781] ss:$2 sm:$0xff]
    %v3347 = vld [vmem:[%s1785] ss:$2 sm:$0xff]
    %v3348 = vpack.c.bf16 %v3333, %v3332
    %v3349 = vpack.c.bf16 %v3335, %v3334
    %v3350 = vpack.c.bf16 %v3337, %v3336
    %v3351 = vpack.c.bf16 %v3339, %v3338
    %v3352 = vpack.c.bf16 %v3341, %v3340
    %v3353 = vpack.c.bf16 %v3343, %v3342
    %v3354 = vpack.c.bf16 %v3345, %v3344
    %v3355 = vpack.c.bf16 %v3347, %v3346
    %s3356 = scalar_lea.vmem [#allocation3], 128
    %v3357 = vld [vmem:[%s3356] sm:$0xf]
    %v3358 = vld [vmem:[%s3356 + $0x4] sm:$0xf]
    %v3359 = vld [vmem:[%s3356 + $0x8] sm:$0xf]
    %v3360 = vld [vmem:[%s3356 + $0xc] sm:$0xf]
    %v3361 = vld [vmem:[%s3356 + $0x10] sm:$0xf]
    %v3362 = vld [vmem:[%s3356 + $0x14] sm:$0xf]
    %v3363 = vld [vmem:[%s3356 + $0x18] sm:$0xf]
    %v3364 = vld [vmem:[%s3356 + $0x1c] sm:$0xf]
    %v3365 = vld [vmem:[%s3356 + $0x20] sm:$0xf]
    %v3366 = vld [vmem:[%s3356 + $0x24] sm:$0xf]
    %v3367 = vld [vmem:[%s3356 + $0x28] sm:$0xf]
    %v3368 = vld [vmem:[%s3356 + $0x2c] sm:$0xf]
    %v3369 = vld [vmem:[%s3356 + $0x30] sm:$0xf]
    %v3370 = vld [vmem:[%s3356 + $0x34] sm:$0xf]
    %v3371 = vld [vmem:[%s3356 + $0x38] sm:$0xf]
    %v3372 = vld [vmem:[%s3356 + $0x3c] sm:$0xf]
    %v3389 = vunpack.c.l.b16 %v3357
    %v3390 = vunpack.c.l.b16 %v3358
    %v3391 = vunpack.c.l.b16 %v3359
    %v3392 = vunpack.c.l.b16 %v3360
    %v3393 = vunpack.c.l.b16 %v3361
    %v3394 = vunpack.c.l.b16 %v3362
    %v3395 = vunpack.c.l.b16 %v3363
    %v3396 = vunpack.c.l.b16 %v3364
    %v3397 = vunpack.c.l.b16 %v3365
    %v3398 = vunpack.c.l.b16 %v3366
    %v3399 = vunpack.c.l.b16 %v3367
    %v3400 = vunpack.c.l.b16 %v3368
    %v3401 = vunpack.c.l.b16 %v3369
    %v3402 = vunpack.c.l.b16 %v3370
    %v3403 = vunpack.c.l.b16 %v3371
    %v3404 = vunpack.c.l.b16 %v3372
    %v3405 = vpack.c.b16 %v3390, %v3389
    %v3406 = vpack.c.b16 %v3392, %v3391
    %v3407 = vpack.c.b16 %v3394, %v3393
    %v3408 = vpack.c.b16 %v3396, %v3395
    %v3409 = vpack.c.b16 %v3398, %v3397
    %v3410 = vpack.c.b16 %v3400, %v3399
    %v3411 = vpack.c.b16 %v3402, %v3401
    %v3412 = vpack.c.b16 %v3404, %v3403
    %3421 = vmatprep.subr.bf16.mxu0 0
    %3422 = vmatpush1.bf16.msra.mxu0 %v3412
    %3423 = vmatprep.subr.bf16.mxu0 0
    %3424 = vmatpush1.bf16.msra.mxu0 %v3411
    %3425 = vmatprep.subr.bf16.mxu0 0
    %3426 = vmatpush1.bf16.msra.mxu0 %v3410
    %3427 = vmatprep.subr.bf16.mxu0 0
    %3428 = vmatpush1.bf16.msra.mxu0 %v3409
    %3429 = vmatprep.subr.bf16.mxu0 0
    %3430 = vmatpush1.bf16.msra.mxu0 %v3408
    %3431 = vmatprep.subr.bf16.mxu0 0
    %3432 = vmatpush1.bf16.msra.mxu0 %v3407
    %3433 = vmatprep.subr.bf16.mxu0 0
    %3434 = vmatpush1.bf16.msra.mxu0 %v3406
    %3435 = vmatprep.subr.bf16.mxu0 0
    %3436 = vmatpush1.bf16.msra.mxu0 %v3405
    %3437 = vmatprep.subr.bf16.mxu0 0
    %3438 = vmatpush2.bf16.msra.mxu0 0
    %3439 = vmatprep.subr.bf16.mxu0 0
    %3440 = vmatpush2.bf16.msra.mxu0 0
    %3441 = vmatprep.subr.bf16.mxu0 0
    %3442 = vmatpush2.bf16.msra.mxu0 0
    %3443 = vmatprep.subr.bf16.mxu0 0
    %3444 = vmatpush2.bf16.msra.mxu0 0
    %3445 = vmatprep.subr.bf16.mxu0 0
    %3446 = vmatpush2.bf16.msra.mxu0 0
    %3447 = vmatprep.subr.bf16.mxu0 0
    %3448 = vmatpush2.bf16.msra.mxu0 0
    %3449 = vmatprep.subr.bf16.mxu0 0
    %3450 = vmatpush2.bf16.msra.mxu0 0
    %3451 = vmatprep.subr.bf16.mxu0 0
    %3452 = vmatpush2.bf16.msra.mxu0 0
    %3453 = vmatprep.mubr.bf16.mxu0 0
    %3454 = vmatmul.mubr.bf16.gmra.mxu0 %v3348
    %v3455 = vpop.f32.mrf.mxu0
    %v3456 = vadd.f32 0.0, %v3455
    %v3457 = vpop.f32.mrf.mxu0
    %v3458 = vpop.f32.mrf.mxu0
    %v3459 = vadd.f32 0.0, %v3458
    %v3460 = vpop.f32.mrf.mxu0
    %3461 = vmatprep.mubr.bf16.mxu0 0
    %3462 = vmatmul.mubr.bf16.gmra.mxu0 %v3349
    %v3463 = vpop.f32.mrf.mxu0
    %v3464 = vadd.f32 0.0, %v3463
    %v3465 = vpop.f32.mrf.mxu0
    %v3466 = vpop.f32.mrf.mxu0
    %v3467 = vadd.f32 0.0, %v3466
    %v3468 = vpop.f32.mrf.mxu0
    %3469 = vmatprep.mubr.bf16.mxu0 0
    %3470 = vmatmul.mubr.bf16.gmra.mxu0 %v3350
    %v3471 = vpop.f32.mrf.mxu0
    %v3472 = vadd.f32 0.0, %v3471
    %v3473 = vpop.f32.mrf.mxu0
    %v3474 = vpop.f32.mrf.mxu0
    %v3475 = vadd.f32 0.0, %v3474
    %v3476 = vpop.f32.mrf.mxu0
    %3477 = vmatprep.mubr.bf16.mxu0 0
    %3478 = vmatmul.mubr.bf16.gmra.mxu0 %v3351
    %v3479 = vpop.f32.mrf.mxu0
    %v3480 = vadd.f32 0.0, %v3479
    %v3481 = vpop.f32.mrf.mxu0
    %v3482 = vpop.f32.mrf.mxu0
    %v3483 = vadd.f32 0.0, %v3482
    %v3484 = vpop.f32.mrf.mxu0
    %3485 = vmatprep.mubr.bf16.mxu0 0
    %3486 = vmatmul.mubr.bf16.gmra.mxu0 %v3352
    %v3487 = vpop.f32.mrf.mxu0
    %v3488 = vadd.f32 0.0, %v3487
    %v3489 = vpop.f32.mrf.mxu0
    %v3490 = vpop.f32.mrf.mxu0
    %v3491 = vadd.f32 0.0, %v3490
    %v3492 = vpop.f32.mrf.mxu0
    %3493 = vmatprep.mubr.bf16.mxu0 0
    %3494 = vmatmul.mubr.bf16.gmra.mxu0 %v3353
    %v3495 = vpop.f32.mrf.mxu0
    %v3496 = vadd.f32 0.0, %v3495
    %v3497 = vpop.f32.mrf.mxu0
    %v3498 = vpop.f32.mrf.mxu0
    %v3499 = vadd.f32 0.0, %v3498
    %v3500 = vpop.f32.mrf.mxu0
    %3501 = vmatprep.mubr.bf16.mxu0 0
    %3502 = vmatmul.mubr.bf16.gmra.mxu0 %v3354
    %v3503 = vpop.f32.mrf.mxu0
    %v3504 = vadd.f32 0.0, %v3503
    %v3505 = vpop.f32.mrf.mxu0
    %v3506 = vpop.f32.mrf.mxu0
    %v3507 = vadd.f32 0.0, %v3506
    %v3508 = vpop.f32.mrf.mxu0
    %3509 = vmatprep.mubr.bf16.mxu0 0
    %3510 = vmatmul.mubr.bf16.gmra.mxu0 %v3355
    %v3511 = vpop.f32.mrf.mxu0
    %v3512 = vadd.f32 0.0, %v3511
    %v3513 = vpop.f32.mrf.mxu0
    %v3514 = vpop.f32.mrf.mxu0
    %v3515 = vadd.f32 0.0, %v3514
    %v3516 = vpop.f32.mrf.mxu0
    %3517 = vdwg.mxu0
    %v3518 = vadd.f32 %v3270, %v3456
    %v3519 = vadd.f32 %v3273, %v3459
    %v3520 = vadd.f32 %v3278, %v3464
    %v3521 = vadd.f32 %v3281, %v3467
    %v3522 = vadd.f32 %v3286, %v3472
    %v3523 = vadd.f32 %v3289, %v3475
    %v3524 = vadd.f32 %v3294, %v3480
    %v3525 = vadd.f32 %v3297, %v3483
    %v3526 = vadd.f32 %v3302, %v3488
    %v3527 = vadd.f32 %v3305, %v3491
    %v3528 = vadd.f32 %v3310, %v3496
    %v3529 = vadd.f32 %v3313, %v3499
    %v3530 = vadd.f32 %v3318, %v3504
    %v3531 = vadd.f32 %v3321, %v3507
    %v3532 = vadd.f32 %v3326, %v3512
    %v3533 = vadd.f32 %v3329, %v3515
    %v3534 = vld [vmem:[%s2063] ss:$2 sm:$0xff]
    %v3535 = vld [vmem:[%s2067] ss:$2 sm:$0xff]
    %v3536 = vld [vmem:[%s2071] ss:$2 sm:$0xff]
    %v3537 = vld [vmem:[%s2075] ss:$2 sm:$0xff]
    %v3538 = vld [vmem:[%s2079] ss:$2 sm:$0xff]
    %v3539 = vld [vmem:[%s2083] ss:$2 sm:$0xff]
    %v3540 = vld [vmem:[%s2087] ss:$2 sm:$0xff]
    %v3541 = vld [vmem:[%s2091] ss:$2 sm:$0xff]
    %v3542 = vld [vmem:[%s2095] ss:$2 sm:$0xff]
    %v3543 = vld [vmem:[%s2099] ss:$2 sm:$0xff]
    %v3544 = vld [vmem:[%s2103] ss:$2 sm:$0xff]
    %v3545 = vld [vmem:[%s2107] ss:$2 sm:$0xff]
    %v3546 = vld [vmem:[%s2111] ss:$2 sm:$0xff]
    %v3547 = vld [vmem:[%s2115] ss:$2 sm:$0xff]
    %v3548 = vld [vmem:[%s2119] ss:$2 sm:$0xff]
    %v3549 = vld [vmem:[%s2123] ss:$2 sm:$0xff]
    %v3550 = vpack.c.bf16 %v3535, %v3534
    %v3551 = vpack.c.bf16 %v3537, %v3536
    %v3552 = vpack.c.bf16 %v3539, %v3538
    %v3553 = vpack.c.bf16 %v3541, %v3540
    %v3554 = vpack.c.bf16 %v3543, %v3542
    %v3555 = vpack.c.bf16 %v3545, %v3544
    %v3556 = vpack.c.bf16 %v3547, %v3546
    %v3557 = vpack.c.bf16 %v3549, %v3548
    %s3558 = scalar_lea.vmem [#allocation3], 192
    %v3559 = vld [vmem:[%s3558] sm:$0xf]
    %v3560 = vld [vmem:[%s3558 + $0x4] sm:$0xf]
    %v3561 = vld [vmem:[%s3558 + $0x8] sm:$0xf]
    %v3562 = vld [vmem:[%s3558 + $0xc] sm:$0xf]
    %v3563 = vld [vmem:[%s3558 + $0x10] sm:$0xf]
    %v3564 = vld [vmem:[%s3558 + $0x14] sm:$0xf]
    %v3565 = vld [vmem:[%s3558 + $0x18] sm:$0xf]
    %v3566 = vld [vmem:[%s3558 + $0x1c] sm:$0xf]
    %v3567 = vld [vmem:[%s3558 + $0x20] sm:$0xf]
    %v3568 = vld [vmem:[%s3558 + $0x24] sm:$0xf]
    %v3569 = vld [vmem:[%s3558 + $0x28] sm:$0xf]
    %v3570 = vld [vmem:[%s3558 + $0x2c] sm:$0xf]
    %v3571 = vld [vmem:[%s3558 + $0x30] sm:$0xf]
    %v3572 = vld [vmem:[%s3558 + $0x34] sm:$0xf]
    %v3573 = vld [vmem:[%s3558 + $0x38] sm:$0xf]
    %v3574 = vld [vmem:[%s3558 + $0x3c] sm:$0xf]
    %v3591 = vunpack.c.l.b16 %v3559
    %v3592 = vunpack.c.l.b16 %v3560
    %v3593 = vunpack.c.l.b16 %v3561
    %v3594 = vunpack.c.l.b16 %v3562
    %v3595 = vunpack.c.l.b16 %v3563
    %v3596 = vunpack.c.l.b16 %v3564
    %v3597 = vunpack.c.l.b16 %v3565
    %v3598 = vunpack.c.l.b16 %v3566
    %v3599 = vunpack.c.l.b16 %v3567
    %v3600 = vunpack.c.l.b16 %v3568
    %v3601 = vunpack.c.l.b16 %v3569
    %v3602 = vunpack.c.l.b16 %v3570
    %v3603 = vunpack.c.l.b16 %v3571
    %v3604 = vunpack.c.l.b16 %v3572
    %v3605 = vunpack.c.l.b16 %v3573
    %v3606 = vunpack.c.l.b16 %v3574
    %v3607 = vpack.c.b16 %v3592, %v3591
    %v3608 = vpack.c.b16 %v3594, %v3593
    %v3609 = vpack.c.b16 %v3596, %v3595
    %v3610 = vpack.c.b16 %v3598, %v3597
    %v3611 = vpack.c.b16 %v3600, %v3599
    %v3612 = vpack.c.b16 %v3602, %v3601
    %v3613 = vpack.c.b16 %v3604, %v3603
    %v3614 = vpack.c.b16 %v3606, %v3605
    %3623 = vmatprep.subr.bf16.mxu0 0
    %3624 = vmatpush1.bf16.msra.mxu0 %v3614
    %3625 = vmatprep.subr.bf16.mxu0 0
    %3626 = vmatpush1.bf16.msra.mxu0 %v3613
    %3627 = vmatprep.subr.bf16.mxu0 0
    %3628 = vmatpush1.bf16.msra.mxu0 %v3612
    %3629 = vmatprep.subr.bf16.mxu0 0
    %3630 = vmatpush1.bf16.msra.mxu0 %v3611
    %3631 = vmatprep.subr.bf16.mxu0 0
    %3632 = vmatpush1.bf16.msra.mxu0 %v3610
    %3633 = vmatprep.subr.bf16.mxu0 0
    %3634 = vmatpush1.bf16.msra.mxu0 %v3609
    %3635 = vmatprep.subr.bf16.mxu0 0
    %3636 = vmatpush1.bf16.msra.mxu0 %v3608
    %3637 = vmatprep.subr.bf16.mxu0 0
    %3638 = vmatpush1.bf16.msra.mxu0 %v3607
    %3639 = vmatprep.subr.bf16.mxu0 0
    %3640 = vmatpush2.bf16.msra.mxu0 0
    %3641 = vmatprep.subr.bf16.mxu0 0
    %3642 = vmatpush2.bf16.msra.mxu0 0
    %3643 = vmatprep.subr.bf16.mxu0 0
    %3644 = vmatpush2.bf16.msra.mxu0 0
    %3645 = vmatprep.subr.bf16.mxu0 0
    %3646 = vmatpush2.bf16.msra.mxu0 0
    %3647 = vmatprep.subr.bf16.mxu0 0
    %3648 = vmatpush2.bf16.msra.mxu0 0
    %3649 = vmatprep.subr.bf16.mxu0 0
    %3650 = vmatpush2.bf16.msra.mxu0 0
    %3651 = vmatprep.subr.bf16.mxu0 0
    %3652 = vmatpush2.bf16.msra.mxu0 0
    %3653 = vmatprep.subr.bf16.mxu0 0
    %3654 = vmatpush2.bf16.msra.mxu0 0
    %3655 = vmatprep.mubr.bf16.mxu0 0
    %3656 = vmatmul.mubr.bf16.gmra.mxu0 %v3550
    %v3657 = vpop.f32.mrf.mxu0
    %v3658 = vadd.f32 0.0, %v3657
    %v3659 = vpop.f32.mrf.mxu0
    %v3660 = vpop.f32.mrf.mxu0
    %v3661 = vadd.f32 0.0, %v3660
    %v3662 = vpop.f32.mrf.mxu0
    %3663 = vmatprep.mubr.bf16.mxu0 0
    %3664 = vmatmul.mubr.bf16.gmra.mxu0 %v3551
    %v3665 = vpop.f32.mrf.mxu0
    %v3666 = vadd.f32 0.0, %v3665
    %v3667 = vpop.f32.mrf.mxu0
    %v3668 = vpop.f32.mrf.mxu0
    %v3669 = vadd.f32 0.0, %v3668
    %v3670 = vpop.f32.mrf.mxu0
    %3671 = vmatprep.mubr.bf16.mxu0 0
    %3672 = vmatmul.mubr.bf16.gmra.mxu0 %v3552
    %v3673 = vpop.f32.mrf.mxu0
    %v3674 = vadd.f32 0.0, %v3673
    %v3675 = vpop.f32.mrf.mxu0
    %v3676 = vpop.f32.mrf.mxu0
    %v3677 = vadd.f32 0.0, %v3676
    %v3678 = vpop.f32.mrf.mxu0
    %3679 = vmatprep.mubr.bf16.mxu0 0
    %3680 = vmatmul.mubr.bf16.gmra.mxu0 %v3553
    %v3681 = vpop.f32.mrf.mxu0
    %v3682 = vadd.f32 0.0, %v3681
    %v3683 = vpop.f32.mrf.mxu0
    %v3684 = vpop.f32.mrf.mxu0
    %v3685 = vadd.f32 0.0, %v3684
    %v3686 = vpop.f32.mrf.mxu0
    %3687 = vmatprep.mubr.bf16.mxu0 0
    %3688 = vmatmul.mubr.bf16.gmra.mxu0 %v3554
    %v3689 = vpop.f32.mrf.mxu0
    %v3690 = vadd.f32 0.0, %v3689
    %v3691 = vpop.f32.mrf.mxu0
    %v3692 = vpop.f32.mrf.mxu0
    %v3693 = vadd.f32 0.0, %v3692
    %v3694 = vpop.f32.mrf.mxu0
    %3695 = vmatprep.mubr.bf16.mxu0 0
    %3696 = vmatmul.mubr.bf16.gmra.mxu0 %v3555
    %v3697 = vpop.f32.mrf.mxu0
    %v3698 = vadd.f32 0.0, %v3697
    %v3699 = vpop.f32.mrf.mxu0
    %v3700 = vpop.f32.mrf.mxu0
    %v3701 = vadd.f32 0.0, %v3700
    %v3702 = vpop.f32.mrf.mxu0
    %3703 = vmatprep.mubr.bf16.mxu0 0
    %3704 = vmatmul.mubr.bf16.gmra.mxu0 %v3556
    %v3705 = vpop.f32.mrf.mxu0
    %v3706 = vadd.f32 0.0, %v3705
    %v3707 = vpop.f32.mrf.mxu0
    %v3708 = vpop.f32.mrf.mxu0
    %v3709 = vadd.f32 0.0, %v3708
    %v3710 = vpop.f32.mrf.mxu0
    %3711 = vmatprep.mubr.bf16.mxu0 0
    %3712 = vmatmul.mubr.bf16.gmra.mxu0 %v3557
    %v3713 = vpop.f32.mrf.mxu0
    %v3714 = vadd.f32 0.0, %v3713
    %v3715 = vpop.f32.mrf.mxu0
    %v3716 = vpop.f32.mrf.mxu0
    %v3717 = vadd.f32 0.0, %v3716
    %v3718 = vpop.f32.mrf.mxu0
    %3719 = vdwg.mxu0
    %v3720 = vadd.f32 %v3518, %v3658
    %v3721 = vadd.f32 %v3519, %v3661
    %v3722 = vadd.f32 %v3520, %v3666
    %v3723 = vadd.f32 %v3521, %v3669
    %v3724 = vadd.f32 %v3522, %v3674
    %v3725 = vadd.f32 %v3523, %v3677
    %v3726 = vadd.f32 %v3524, %v3682
    %v3727 = vadd.f32 %v3525, %v3685
    %v3728 = vadd.f32 %v3526, %v3690
    %v3729 = vadd.f32 %v3527, %v3693
    %v3730 = vadd.f32 %v3528, %v3698
    %v3731 = vadd.f32 %v3529, %v3701
    %v3732 = vadd.f32 %v3530, %v3706
    %v3733 = vadd.f32 %v3531, %v3709
    %v3734 = vadd.f32 %v3532, %v3714
    %v3735 = vadd.f32 %v3533, %v3717
    %s3736 = scalar_lea.vmem [#allocation2], 4
    %v3737 = vld [vmem:[%s3736] ss:$2 sm:$0xff]
    %s3738 = scalar_lea.vmem [#allocation2], 44
    %v3739 = vld [vmem:[%s3738] ss:$2 sm:$0xff]
    %s3740 = scalar_lea.vmem [#allocation2], 84
    %v3741 = vld [vmem:[%s3740] ss:$2 sm:$0xff]
    %s3742 = scalar_lea.vmem [#allocation2], 124
    %v3743 = vld [vmem:[%s3742] ss:$2 sm:$0xff]
    %s3744 = scalar_lea.vmem [#allocation2], 164
    %v3745 = vld [vmem:[%s3744] ss:$2 sm:$0xff]
    %s3746 = scalar_lea.vmem [#allocation2], 204
    %v3747 = vld [vmem:[%s3746] ss:$2 sm:$0xff]
    %s3748 = scalar_lea.vmem [#allocation2], 244
    %v3749 = vld [vmem:[%s3748] ss:$2 sm:$0xff]
    %s3750 = scalar_lea.vmem [#allocation2], 284
    %v3751 = vld [vmem:[%s3750] ss:$2 sm:$0xff]
    %s3752 = scalar_lea.vmem [#allocation2], 324
    %v3753 = vld [vmem:[%s3752] ss:$2 sm:$0xff]
    %s3754 = scalar_lea.vmem [#allocation2], 364
    %v3755 = vld [vmem:[%s3754] ss:$2 sm:$0xff]
    %s3756 = scalar_lea.vmem [#allocation2], 404
    %v3757 = vld [vmem:[%s3756] ss:$2 sm:$0xff]
    %s3758 = scalar_lea.vmem [#allocation2], 444
    %v3759 = vld [vmem:[%s3758] ss:$2 sm:$0xff]
    %s3760 = scalar_lea.vmem [#allocation2], 484
    %v3761 = vld [vmem:[%s3760] ss:$2 sm:$0xff]
    %s3762 = scalar_lea.vmem [#allocation2], 524
    %v3763 = vld [vmem:[%s3762] ss:$2 sm:$0xff]
    %s3764 = scalar_lea.vmem [#allocation2], 564
    %v3765 = vld [vmem:[%s3764] ss:$2 sm:$0xff]
    %s3766 = scalar_lea.vmem [#allocation2], 604
    %v3767 = vld [vmem:[%s3766] ss:$2 sm:$0xff]
    %v3768 = vpack.c.bf16 %v3739, %v3737
    %v3769 = vpack.c.bf16 %v3743, %v3741
    %v3770 = vpack.c.bf16 %v3747, %v3745
    %v3771 = vpack.c.bf16 %v3751, %v3749
    %v3772 = vpack.c.bf16 %v3755, %v3753
    %v3773 = vpack.c.bf16 %v3759, %v3757
    %v3774 = vpack.c.bf16 %v3763, %v3761
    %v3775 = vpack.c.bf16 %v3767, %v3765
    %s3776 = scalar_lea.vmem [#allocation3], 256
    %v3777 = vld [vmem:[%s3776] sm:$0xf]
    %v3778 = vld [vmem:[%s3776 + $0x4] sm:$0xf]
    %v3779 = vld [vmem:[%s3776 + $0x8] sm:$0xf]
    %v3780 = vld [vmem:[%s3776 + $0xc] sm:$0xf]
    %v3781 = vld [vmem:[%s3776 + $0x10] sm:$0xf]
    %v3782 = vld [vmem:[%s3776 + $0x14] sm:$0xf]
    %v3783 = vld [vmem:[%s3776 + $0x18] sm:$0xf]
    %v3784 = vld [vmem:[%s3776 + $0x1c] sm:$0xf]
    %v3785 = vld [vmem:[%s3776 + $0x20] sm:$0xf]
    %v3786 = vld [vmem:[%s3776 + $0x24] sm:$0xf]
    %v3787 = vld [vmem:[%s3776 + $0x28] sm:$0xf]
    %v3788 = vld [vmem:[%s3776 + $0x2c] sm:$0xf]
    %v3789 = vld [vmem:[%s3776 + $0x30] sm:$0xf]
    %v3790 = vld [vmem:[%s3776 + $0x34] sm:$0xf]
    %v3791 = vld [vmem:[%s3776 + $0x38] sm:$0xf]
    %v3792 = vld [vmem:[%s3776 + $0x3c] sm:$0xf]
    %v3809 = vunpack.c.l.b16 %v3777
    %v3810 = vunpack.c.l.b16 %v3778
    %v3811 = vunpack.c.l.b16 %v3779
    %v3812 = vunpack.c.l.b16 %v3780
    %v3813 = vunpack.c.l.b16 %v3781
    %v3814 = vunpack.c.l.b16 %v3782
    %v3815 = vunpack.c.l.b16 %v3783
    %v3816 = vunpack.c.l.b16 %v3784
    %v3817 = vunpack.c.l.b16 %v3785
    %v3818 = vunpack.c.l.b16 %v3786
    %v3819 = vunpack.c.l.b16 %v3787
    %v3820 = vunpack.c.l.b16 %v3788
    %v3821 = vunpack.c.l.b16 %v3789
    %v3822 = vunpack.c.l.b16 %v3790
    %v3823 = vunpack.c.l.b16 %v3791
    %v3824 = vunpack.c.l.b16 %v3792
    %v3825 = vpack.c.b16 %v3810, %v3809
    %v3826 = vpack.c.b16 %v3812, %v3811
    %v3827 = vpack.c.b16 %v3814, %v3813
    %v3828 = vpack.c.b16 %v3816, %v3815
    %v3829 = vpack.c.b16 %v3818, %v3817
    %v3830 = vpack.c.b16 %v3820, %v3819
    %v3831 = vpack.c.b16 %v3822, %v3821
    %v3832 = vpack.c.b16 %v3824, %v3823
    %3841 = vmatprep.subr.bf16.mxu0 0
    %3842 = vmatpush1.bf16.msra.mxu0 %v3832
    %3843 = vmatprep.subr.bf16.mxu0 0
    %3844 = vmatpush1.bf16.msra.mxu0 %v3831
    %3845 = vmatprep.subr.bf16.mxu0 0
    %3846 = vmatpush1.bf16.msra.mxu0 %v3830
    %3847 = vmatprep.subr.bf16.mxu0 0
    %3848 = vmatpush1.bf16.msra.mxu0 %v3829
    %3849 = vmatprep.subr.bf16.mxu0 0
    %3850 = vmatpush1.bf16.msra.mxu0 %v3828
    %3851 = vmatprep.subr.bf16.mxu0 0
    %3852 = vmatpush1.bf16.msra.mxu0 %v3827
    %3853 = vmatprep.subr.bf16.mxu0 0
    %3854 = vmatpush1.bf16.msra.mxu0 %v3826
    %3855 = vmatprep.subr.bf16.mxu0 0
    %3856 = vmatpush1.bf16.msra.mxu0 %v3825
    %3857 = vmatprep.subr.bf16.mxu0 0
    %3858 = vmatpush2.bf16.msra.mxu0 0
    %3859 = vmatprep.subr.bf16.mxu0 0
    %3860 = vmatpush2.bf16.msra.mxu0 0
    %3861 = vmatprep.subr.bf16.mxu0 0
    %3862 = vmatpush2.bf16.msra.mxu0 0
    %3863 = vmatprep.subr.bf16.mxu0 0
    %3864 = vmatpush2.bf16.msra.mxu0 0
    %3865 = vmatprep.subr.bf16.mxu0 0
    %3866 = vmatpush2.bf16.msra.mxu0 0
    %3867 = vmatprep.subr.bf16.mxu0 0
    %3868 = vmatpush2.bf16.msra.mxu0 0
    %3869 = vmatprep.subr.bf16.mxu0 0
    %3870 = vmatpush2.bf16.msra.mxu0 0
    %3871 = vmatprep.subr.bf16.mxu0 0
    %3872 = vmatpush2.bf16.msra.mxu0 0
    %3873 = vmatprep.mubr.bf16.mxu0 0
    %3874 = vmatmul.mubr.bf16.gmra.mxu0 %v3768
    %v3875 = vpop.f32.mrf.mxu0
    %v3876 = vadd.f32 0.0, %v3875
    %v3877 = vpop.f32.mrf.mxu0
    %v3878 = vpop.f32.mrf.mxu0
    %v3879 = vadd.f32 0.0, %v3878
    %v3880 = vpop.f32.mrf.mxu0
    %3881 = vmatprep.mubr.bf16.mxu0 0
    %3882 = vmatmul.mubr.bf16.gmra.mxu0 %v3769
    %v3883 = vpop.f32.mrf.mxu0
    %v3884 = vadd.f32 0.0, %v3883
    %v3885 = vpop.f32.mrf.mxu0
    %v3886 = vpop.f32.mrf.mxu0
    %v3887 = vadd.f32 0.0, %v3886
    %v3888 = vpop.f32.mrf.mxu0
    %3889 = vmatprep.mubr.bf16.mxu0 0
    %3890 = vmatmul.mubr.bf16.gmra.mxu0 %v3770
    %v3891 = vpop.f32.mrf.mxu0
    %v3892 = vadd.f32 0.0, %v3891
    %v3893 = vpop.f32.mrf.mxu0
    %v3894 = vpop.f32.mrf.mxu0
    %v3895 = vadd.f32 0.0, %v3894
    %v3896 = vpop.f32.mrf.mxu0
    %3897 = vmatprep.mubr.bf16.mxu0 0
    %3898 = vmatmul.mubr.bf16.gmra.mxu0 %v3771
    %v3899 = vpop.f32.mrf.mxu0
    %v3900 = vadd.f32 0.0, %v3899
    %v3901 = vpop.f32.mrf.mxu0
    %v3902 = vpop.f32.mrf.mxu0
    %v3903 = vadd.f32 0.0, %v3902
    %v3904 = vpop.f32.mrf.mxu0
    %3905 = vmatprep.mubr.bf16.mxu0 0
    %3906 = vmatmul.mubr.bf16.gmra.mxu0 %v3772
    %v3907 = vpop.f32.mrf.mxu0
    %v3908 = vadd.f32 0.0, %v3907
    %v3909 = vpop.f32.mrf.mxu0
    %v3910 = vpop.f32.mrf.mxu0
    %v3911 = vadd.f32 0.0, %v3910
    %v3912 = vpop.f32.mrf.mxu0
    %3913 = vmatprep.mubr.bf16.mxu0 0
    %3914 = vmatmul.mubr.bf16.gmra.mxu0 %v3773
    %v3915 = vpop.f32.mrf.mxu0
    %v3916 = vadd.f32 0.0, %v3915
    %v3917 = vpop.f32.mrf.mxu0
    %v3918 = vpop.f32.mrf.mxu0
    %v3919 = vadd.f32 0.0, %v3918
    %v3920 = vpop.f32.mrf.mxu0
    %3921 = vmatprep.mubr.bf16.mxu0 0
    %3922 = vmatmul.mubr.bf16.gmra.mxu0 %v3774
    %v3923 = vpop.f32.mrf.mxu0
    %v3924 = vadd.f32 0.0, %v3923
    %v3925 = vpop.f32.mrf.mxu0
    %v3926 = vpop.f32.mrf.mxu0
    %v3927 = vadd.f32 0.0, %v3926
    %v3928 = vpop.f32.mrf.mxu0
    %3929 = vmatprep.mubr.bf16.mxu0 0
    %3930 = vmatmul.mubr.bf16.gmra.mxu0 %v3775
    %v3931 = vpop.f32.mrf.mxu0
    %v3932 = vadd.f32 0.0, %v3931
    %v3933 = vpop.f32.mrf.mxu0
    %v3934 = vpop.f32.mrf.mxu0
    %v3935 = vadd.f32 0.0, %v3934
    %v3936 = vpop.f32.mrf.mxu0
    %3937 = vdwg.mxu0
    %v3938 = vadd.f32 %v3720, %v3876
    %v3939 = vadd.f32 %v3721, %v3879
    %v3940 = vadd.f32 %v3722, %v3884
    %v3941 = vadd.f32 %v3723, %v3887
    %v3942 = vadd.f32 %v3724, %v3892
    %v3943 = vadd.f32 %v3725, %v3895
    %v3944 = vadd.f32 %v3726, %v3900
    %v3945 = vadd.f32 %v3727, %v3903
    %v3946 = vadd.f32 %v3728, %v3908
    %v3947 = vadd.f32 %v3729, %v3911
    %v3948 = vadd.f32 %v3730, %v3916
    %v3949 = vadd.f32 %v3731, %v3919
    %v3950 = vadd.f32 %v3732, %v3924
    %v3951 = vadd.f32 %v3733, %v3927
    %v3952 = vadd.f32 %v3734, %v3932
    %v3953 = vadd.f32 %v3735, %v3935
    %v3954 = vld [vmem:[%s8] sm:$0x1]
    %v3956 = vlaneseq
    %v3957 = vshrl.u32 %v3956, 7
    %v3958 = vsub.s32 0, %v3957
    %v3959 = vrot.slane %v3954, %v3958
    %v3961 = vmul.f32 %v3938, %v3959
    %v3962 = vmul.f32 %v3939, %v3959
    %v3963 = vmul.f32 %v3940, %v3959
    %v3964 = vmul.f32 %v3941, %v3959
    %v3965 = vmul.f32 %v3942, %v3959
    %v3966 = vmul.f32 %v3943, %v3959
    %v3967 = vmul.f32 %v3944, %v3959
    %v3968 = vmul.f32 %v3945, %v3959
    %v3969 = vmul.f32 %v3946, %v3959
    %v3970 = vmul.f32 %v3947, %v3959
    %v3971 = vmul.f32 %v3948, %v3959
    %v3972 = vmul.f32 %v3949, %v3959
    %v3973 = vmul.f32 %v3950, %v3959
    %v3974 = vmul.f32 %v3951, %v3959
    %v3975 = vmul.f32 %v3952, %v3959
    %v3976 = vmul.f32 %v3953, %v3959
    %v3977 = vld [vmem:[%s9] sm:$0x1]
    %v3979 = vlaneseq
    %v3980 = vshrl.u32 %v3979, 7
    %v3981 = vsub.s32 0, %v3980
    %v3982 = vrot.slane %v3977, %v3981
    %v3984 = vadd.f32 %v3961, %v3982
    %v3985 = vadd.f32 %v3962, %v3982
    %v3986 = vadd.f32 %v3963, %v3982
    %v3987 = vadd.f32 %v3964, %v3982
    %v3988 = vadd.f32 %v3965, %v3982
    %v3989 = vadd.f32 %v3966, %v3982
    %v3990 = vadd.f32 %v3967, %v3982
    %v3991 = vadd.f32 %v3968, %v3982
    %v3992 = vadd.f32 %v3969, %v3982
    %v3993 = vadd.f32 %v3970, %v3982
    %v3994 = vadd.f32 %v3971, %v3982
    %v3995 = vadd.f32 %v3972, %v3982
    %v3996 = vadd.f32 %v3973, %v3982
    %v3997 = vadd.f32 %v3974, %v3982
    %v3998 = vadd.f32 %v3975, %v3982
    %v3999 = vadd.f32 %v3976, %v3982
    %vm4000 = vcmp.gt.f32.partialorder %v3984, 0.0
    %vm4001 = vcmp.gt.f32.partialorder %v3985, 0.0
    %vm4002 = vcmp.gt.f32.partialorder %v3986, 0.0
    %vm4003 = vcmp.gt.f32.partialorder %v3987, 0.0
    %vm4004 = vcmp.gt.f32.partialorder %v3988, 0.0
    %vm4005 = vcmp.gt.f32.partialorder %v3989, 0.0
    %vm4006 = vcmp.gt.f32.partialorder %v3990, 0.0
    %vm4007 = vcmp.gt.f32.partialorder %v3991, 0.0
    %vm4008 = vcmp.gt.f32.partialorder %v3992, 0.0
    %vm4009 = vcmp.gt.f32.partialorder %v3993, 0.0
    %vm4010 = vcmp.gt.f32.partialorder %v3994, 0.0
    %vm4011 = vcmp.gt.f32.partialorder %v3995, 0.0
    %vm4012 = vcmp.gt.f32.partialorder %v3996, 0.0
    %vm4013 = vcmp.gt.f32.partialorder %v3997, 0.0
    %vm4014 = vcmp.gt.f32.partialorder %v3998, 0.0
    %vm4015 = vcmp.gt.f32.partialorder %v3999, 0.0
    %v4016 = vmul.f32 %v3984, 0.01
    %v4017 = vmul.f32 %v3985, 0.01
    %v4018 = vmul.f32 %v3986, 0.01
    %v4019 = vmul.f32 %v3987, 0.01
    %v4020 = vmul.f32 %v3988, 0.01
    %v4021 = vmul.f32 %v3989, 0.01
    %v4022 = vmul.f32 %v3990, 0.01
    %v4023 = vmul.f32 %v3991, 0.01
    %v4024 = vmul.f32 %v3992, 0.01
    %v4025 = vmul.f32 %v3993, 0.01
    %v4026 = vmul.f32 %v3994, 0.01
    %v4027 = vmul.f32 %v3995, 0.01
    %v4028 = vmul.f32 %v3996, 0.01
    %v4029 = vmul.f32 %v3997, 0.01
    %v4030 = vmul.f32 %v3998, 0.01
    %v4031 = vmul.f32 %v3999, 0.01
    %v4032 = vsel %vm4000, %v3984, %v4016
    %v4033 = vsel %vm4001, %v3985, %v4017
    %v4034 = vsel %vm4002, %v3986, %v4018
    %v4035 = vsel %vm4003, %v3987, %v4019
    %v4036 = vsel %vm4004, %v3988, %v4020
    %v4037 = vsel %vm4005, %v3989, %v4021
    %v4038 = vsel %vm4006, %v3990, %v4022
    %v4039 = vsel %vm4007, %v3991, %v4023
    %v4040 = vsel %vm4008, %v3992, %v4024
    %v4041 = vsel %vm4009, %v3993, %v4025
    %v4042 = vsel %vm4010, %v3994, %v4026
    %v4043 = vsel %vm4011, %v3995, %v4027
    %v4044 = vsel %vm4012, %v3996, %v4028
    %v4045 = vsel %vm4013, %v3997, %v4029
    %v4046 = vsel %vm4014, %v3998, %v4030
    %v4047 = vsel %vm4015, %v3999, %v4031
    %v4048 = vpack.c.bf16 %v4032, %v4032
    %v4049 = vpack.c.bf16 %v4033, %v4033
    %v4050 = vpack.c.bf16 %v4034, %v4034
    %v4051 = vpack.c.bf16 %v4035, %v4035
    %v4052 = vpack.c.bf16 %v4036, %v4036
    %v4053 = vpack.c.bf16 %v4037, %v4037
    %v4054 = vpack.c.bf16 %v4038, %v4038
    %v4055 = vpack.c.bf16 %v4039, %v4039
    %v4056 = vpack.c.bf16 %v4040, %v4040
    %v4057 = vpack.c.bf16 %v4041, %v4041
    %v4058 = vpack.c.bf16 %v4042, %v4042
    %v4059 = vpack.c.bf16 %v4043, %v4043
    %v4060 = vpack.c.bf16 %v4044, %v4044
    %v4061 = vpack.c.bf16 %v4045, %v4045
    %v4062 = vpack.c.bf16 %v4046, %v4046
    %v4063 = vpack.c.bf16 %v4047, %v4047
    %v4064 = vld [vmem:[#allocation5] sm:$0xf]
    %v4065 = vld [vmem:[#allocation5 + $0x4] sm:$0xf]
    %v4066 = vld [vmem:[#allocation5 + $0x8] sm:$0xf]
    %v4067 = vld [vmem:[#allocation5 + $0xc] sm:$0xf]
    %v4068 = vld [vmem:[#allocation5 + $0x10] sm:$0xf]
    %v4069 = vld [vmem:[#allocation5 + $0x14] sm:$0xf]
    %v4070 = vld [vmem:[#allocation5 + $0x18] sm:$0xf]
    %v4071 = vld [vmem:[#allocation5 + $0x1c] sm:$0xf]
    %v4072 = vld [vmem:[#allocation5 + $0x20] sm:$0xf]
    %v4073 = vld [vmem:[#allocation5 + $0x24] sm:$0xf]
    %v4074 = vld [vmem:[#allocation5 + $0x28] sm:$0xf]
    %v4075 = vld [vmem:[#allocation5 + $0x2c] sm:$0xf]
    %v4076 = vld [vmem:[#allocation5 + $0x30] sm:$0xf]
    %v4077 = vld [vmem:[#allocation5 + $0x34] sm:$0xf]
    %v4078 = vld [vmem:[#allocation5 + $0x38] sm:$0xf]
    %v4079 = vld [vmem:[#allocation5 + $0x3c] sm:$0xf]
    %s4080 = scalar_lea.vmem [#allocation5], 64
    %v4081 = vld [vmem:[%s4080] sm:$0xf]
    %v4082 = vld [vmem:[%s4080 + $0x4] sm:$0xf]
    %v4083 = vld [vmem:[%s4080 + $0x8] sm:$0xf]
    %v4084 = vld [vmem:[%s4080 + $0xc] sm:$0xf]
    %v4085 = vld [vmem:[%s4080 + $0x10] sm:$0xf]
    %v4086 = vld [vmem:[%s4080 + $0x14] sm:$0xf]
    %v4087 = vld [vmem:[%s4080 + $0x18] sm:$0xf]
    %v4088 = vld [vmem:[%s4080 + $0x1c] sm:$0xf]
    %v4089 = vld [vmem:[%s4080 + $0x20] sm:$0xf]
    %v4090 = vld [vmem:[%s4080 + $0x24] sm:$0xf]
    %v4091 = vld [vmem:[%s4080 + $0x28] sm:$0xf]
    %v4092 = vld [vmem:[%s4080 + $0x2c] sm:$0xf]
    %v4093 = vld [vmem:[%s4080 + $0x30] sm:$0xf]
    %v4094 = vld [vmem:[%s4080 + $0x34] sm:$0xf]
    %v4095 = vld [vmem:[%s4080 + $0x38] sm:$0xf]
    %v4096 = vld [vmem:[%s4080 + $0x3c] sm:$0xf]
    %v4113 = vunpack.c.l.b16 %v4048
    %v4114 = vunpack.c.l.b16 %v4049
    %v4115 = vunpack.c.l.b16 %v4050
    %v4116 = vunpack.c.l.b16 %v4051
    %v4117 = vunpack.c.l.b16 %v4052
    %v4118 = vunpack.c.l.b16 %v4053
    %v4119 = vunpack.c.l.b16 %v4054
    %v4120 = vunpack.c.l.b16 %v4055
    %v4121 = vunpack.c.l.b16 %v4056
    %v4122 = vunpack.c.l.b16 %v4057
    %v4123 = vunpack.c.l.b16 %v4058
    %v4124 = vunpack.c.l.b16 %v4059
    %v4125 = vunpack.c.l.b16 %v4060
    %v4126 = vunpack.c.l.b16 %v4061
    %v4127 = vunpack.c.l.b16 %v4062
    %v4128 = vunpack.c.l.b16 %v4063
    %v4129 = vrot.slane %v4113, 1
    %vm4130 = vcmask 1041409
    %v4131 = vsel %vm4130, %v4114, %v4129
    %v4132 = vrot.slane %v4115, 7
    %vm4133 = vcmask 1042434
    %v4134 = vsel %vm4133, %v4132, %v4131
    %v4135 = vrot.slane %v4116, 6
    %vm4136 = vcmask 1043459
    %v4137 = vsel %vm4136, %v4135, %v4134
    %v4138 = vrot.slane %v4117, 5
    %vm4139 = vcmask 1044484
    %v4140 = vsel %vm4139, %v4138, %v4137
    %v4141 = vrot.slane %v4118, 4
    %vm4142 = vcmask 1045509
    %v4143 = vsel %vm4142, %v4141, %v4140
    %v4144 = vrot.slane %v4119, 3
    %vm4145 = vcmask 1046534
    %v4146 = vsel %vm4145, %v4144, %v4143
    %v4147 = vrot.slane %v4120, 2
    %vm4148 = vcmask 1047559
    %v4149 = vsel %vm4148, %v4147, %v4146
    %v4150 = vrot.slane %v4121, 1
    %v4151 = vsel %vm4130, %v4122, %v4150
    %v4152 = vrot.slane %v4123, 7
    %v4153 = vsel %vm4133, %v4152, %v4151
    %v4154 = vrot.slane %v4124, 6
    %v4155 = vsel %vm4136, %v4154, %v4153
    %v4156 = vrot.slane %v4125, 5
    %v4157 = vsel %vm4139, %v4156, %v4155
    %v4158 = vrot.slane %v4126, 4
    %v4159 = vsel %vm4142, %v4158, %v4157
    %v4160 = vrot.slane %v4127, 3
    %v4161 = vsel %vm4145, %v4160, %v4159
    %v4162 = vrot.slane %v4128, 2
    %v4163 = vsel %vm4148, %v4162, %v4161
    %v4164 = vpack.c.b16 %v4163, %v4149
    %v4182 = vunpack.c.l.b16 %v4081
    %v4183 = vunpack.c.l.b16 %v4082
    %v4184 = vunpack.c.l.b16 %v4083
    %v4185 = vunpack.c.l.b16 %v4084
    %v4186 = vunpack.c.l.b16 %v4085
    %v4187 = vunpack.c.l.b16 %v4086
    %v4188 = vunpack.c.l.b16 %v4087
    %v4189 = vunpack.c.l.b16 %v4088
    %v4190 = vunpack.c.l.b16 %v4089
    %v4191 = vunpack.c.l.b16 %v4090
    %v4192 = vunpack.c.l.b16 %v4091
    %v4193 = vunpack.c.l.b16 %v4092
    %v4194 = vunpack.c.l.b16 %v4093
    %v4195 = vunpack.c.l.b16 %v4094
    %v4196 = vunpack.c.l.b16 %v4095
    %v4197 = vunpack.c.l.b16 %v4096
    %v4198 = vpack.c.b16 %v4183, %v4182
    %v4199 = vpack.c.b16 %v4185, %v4184
    %v4200 = vpack.c.b16 %v4187, %v4186
    %v4201 = vpack.c.b16 %v4189, %v4188
    %v4202 = vpack.c.b16 %v4191, %v4190
    %v4203 = vpack.c.b16 %v4193, %v4192
    %v4204 = vpack.c.b16 %v4195, %v4194
    %v4205 = vpack.c.b16 %v4197, %v4196
    %4214 = vmatprep.subr.bf16.mxu0 0
    %4215 = vmatpush1.bf16.msra.mxu0 %v4205
    %4216 = vmatprep.subr.bf16.mxu0 0
    %4217 = vmatpush1.bf16.msra.mxu0 %v4204
    %4218 = vmatprep.subr.bf16.mxu0 0
    %4219 = vmatpush1.bf16.msra.mxu0 %v4203
    %4220 = vmatprep.subr.bf16.mxu0 0
    %4221 = vmatpush1.bf16.msra.mxu0 %v4202
    %4222 = vmatprep.subr.bf16.mxu0 0
    %4223 = vmatpush1.bf16.msra.mxu0 %v4201
    %4224 = vmatprep.subr.bf16.mxu0 0
    %4225 = vmatpush1.bf16.msra.mxu0 %v4200
    %4226 = vmatprep.subr.bf16.mxu0 0
    %4227 = vmatpush1.bf16.msra.mxu0 %v4199
    %4228 = vmatprep.subr.bf16.mxu0 0
    %4229 = vmatpush1.bf16.msra.mxu0 %v4198
    %4230 = vmatprep.subr.bf16.mxu0 0
    %4231 = vmatpush2.bf16.msra.mxu0 0
    %4232 = vmatprep.subr.bf16.mxu0 0
    %4233 = vmatpush2.bf16.msra.mxu0 0
    %4234 = vmatprep.subr.bf16.mxu0 0
    %4235 = vmatpush2.bf16.msra.mxu0 0
    %4236 = vmatprep.subr.bf16.mxu0 0
    %4237 = vmatpush2.bf16.msra.mxu0 0
    %4238 = vmatprep.subr.bf16.mxu0 0
    %4239 = vmatpush2.bf16.msra.mxu0 0
    %4240 = vmatprep.subr.bf16.mxu0 0
    %4241 = vmatpush2.bf16.msra.mxu0 0
    %4242 = vmatprep.subr.bf16.mxu0 0
    %4243 = vmatpush2.bf16.msra.mxu0 0
    %4244 = vmatprep.subr.bf16.mxu0 0
    %4245 = vmatpush2.bf16.msra.mxu0 0
    %4246 = vmatprep.mubr.bf16.mxu0 0
    %4247 = vmatmul.mubr.bf16.gmra.mxu0 %v4164
    %v4248 = vpop.f32.mrf.mxu0
    %v4249 = vadd.f32 0.0, %v4248
    %v4250 = vpop.f32.mrf.mxu0
    %v4251 = vpop.f32.mrf.mxu0
    %v4252 = vadd.f32 0.0, %v4251
    %v4253 = vpop.f32.mrf.mxu0
    %4254 = vdwg.mxu0
    %v4255 = vrot.slane %v4114, 7
    %v4256 = vsel %vm4130, %v4255, %v4113
    %v4257 = vrot.slane %v4115, 6
    %v4258 = vsel %vm4133, %v4257, %v4256
    %v4259 = vrot.slane %v4116, 5
    %v4260 = vsel %vm4136, %v4259, %v4258
    %v4261 = vrot.slane %v4117, 4
    %v4262 = vsel %vm4139, %v4261, %v4260
    %v4263 = vrot.slane %v4118, 3
    %v4264 = vsel %vm4142, %v4263, %v4262
    %v4265 = vrot.slane %v4119, 2
    %v4266 = vsel %vm4145, %v4265, %v4264
    %v4267 = vrot.slane %v4120, 1
    %v4268 = vsel %vm4148, %v4267, %v4266
    %v4269 = vrot.slane %v4122, 7
    %v4270 = vsel %vm4130, %v4269, %v4121
    %v4271 = vrot.slane %v4123, 6
    %v4272 = vsel %vm4133, %v4271, %v4270
    %v4273 = vrot.slane %v4124, 5
    %v4274 = vsel %vm4136, %v4273, %v4272
    %v4275 = vrot.slane %v4125, 4
    %v4276 = vsel %vm4139, %v4275, %v4274
    %v4277 = vrot.slane %v4126, 3
    %v4278 = vsel %vm4142, %v4277, %v4276
    %v4279 = vrot.slane %v4127, 2
    %v4280 = vsel %vm4145, %v4279, %v4278
    %v4281 = vrot.slane %v4128, 1
    %v4282 = vsel %vm4148, %v4281, %v4280
    %v4283 = vpack.c.b16 %v4282, %v4268
    %v4301 = vunpack.c.l.b16 %v4064
    %v4302 = vunpack.c.l.b16 %v4065
    %v4303 = vunpack.c.l.b16 %v4066
    %v4304 = vunpack.c.l.b16 %v4067
    %v4305 = vunpack.c.l.b16 %v4068
    %v4306 = vunpack.c.l.b16 %v4069
    %v4307 = vunpack.c.l.b16 %v4070
    %v4308 = vunpack.c.l.b16 %v4071
    %v4309 = vunpack.c.l.b16 %v4072
    %v4310 = vunpack.c.l.b16 %v4073
    %v4311 = vunpack.c.l.b16 %v4074
    %v4312 = vunpack.c.l.b16 %v4075
    %v4313 = vunpack.c.l.b16 %v4076
    %v4314 = vunpack.c.l.b16 %v4077
    %v4315 = vunpack.c.l.b16 %v4078
    %v4316 = vunpack.c.l.b16 %v4079
    %v4317 = vpack.c.b16 %v4302, %v4301
    %v4318 = vpack.c.b16 %v4304, %v4303
    %v4319 = vpack.c.b16 %v4306, %v4305
    %v4320 = vpack.c.b16 %v4308, %v4307
    %v4321 = vpack.c.b16 %v4310, %v4309
    %v4322 = vpack.c.b16 %v4312, %v4311
    %v4323 = vpack.c.b16 %v4314, %v4313
    %v4324 = vpack.c.b16 %v4316, %v4315
    %4333 = vmatprep.subr.bf16.mxu0 0
    %4334 = vmatpush1.bf16.msra.mxu0 %v4324
    %4335 = vmatprep.subr.bf16.mxu0 0
    %4336 = vmatpush1.bf16.msra.mxu0 %v4323
    %4337 = vmatprep.subr.bf16.mxu0 0
    %4338 = vmatpush1.bf16.msra.mxu0 %v4322
    %4339 = vmatprep.subr.bf16.mxu0 0
    %4340 = vmatpush1.bf16.msra.mxu0 %v4321
    %4341 = vmatprep.subr.bf16.mxu0 0
    %4342 = vmatpush1.bf16.msra.mxu0 %v4320
    %4343 = vmatprep.subr.bf16.mxu0 0
    %4344 = vmatpush1.bf16.msra.mxu0 %v4319
    %4345 = vmatprep.subr.bf16.mxu0 0
    %4346 = vmatpush1.bf16.msra.mxu0 %v4318
    %4347 = vmatprep.subr.bf16.mxu0 0
    %4348 = vmatpush1.bf16.msra.mxu0 %v4317
    %4349 = vmatprep.subr.bf16.mxu0 0
    %4350 = vmatpush2.bf16.msra.mxu0 0
    %4351 = vmatprep.subr.bf16.mxu0 0
    %4352 = vmatpush2.bf16.msra.mxu0 0
    %4353 = vmatprep.subr.bf16.mxu0 0
    %4354 = vmatpush2.bf16.msra.mxu0 0
    %4355 = vmatprep.subr.bf16.mxu0 0
    %4356 = vmatpush2.bf16.msra.mxu0 0
    %4357 = vmatprep.subr.bf16.mxu0 0
    %4358 = vmatpush2.bf16.msra.mxu0 0
    %4359 = vmatprep.subr.bf16.mxu0 0
    %4360 = vmatpush2.bf16.msra.mxu0 0
    %4361 = vmatprep.subr.bf16.mxu0 0
    %4362 = vmatpush2.bf16.msra.mxu0 0
    %4363 = vmatprep.subr.bf16.mxu0 0
    %4364 = vmatpush2.bf16.msra.mxu0 0
    %4365 = vmatprep.mubr.bf16.mxu0 0
    %4366 = vmatmul.mubr.bf16.gmra.mxu0 %v4283
    %v4367 = vpop.f32.mrf.mxu0
    %v4368 = vadd.f32 %v4249, %v4367
    %v4369 = vpop.f32.mrf.mxu0
    %v4370 = vpop.f32.mrf.mxu0
    %v4371 = vadd.f32 %v4252, %v4370
    %v4372 = vpop.f32.mrf.mxu0
    %4373 = vdwg.mxu0
    %s4374 = scalar_lea.vmem [#allocation5], 128
    %v4375 = vld [vmem:[%s4374] sm:$0xf]
    %v4376 = vld [vmem:[%s4374 + $0x4] sm:$0xf]
    %v4377 = vld [vmem:[%s4374 + $0x8] sm:$0xf]
    %v4378 = vld [vmem:[%s4374 + $0xc] sm:$0xf]
    %v4379 = vld [vmem:[%s4374 + $0x10] sm:$0xf]
    %v4380 = vld [vmem:[%s4374 + $0x14] sm:$0xf]
    %v4381 = vld [vmem:[%s4374 + $0x18] sm:$0xf]
    %v4382 = vld [vmem:[%s4374 + $0x1c] sm:$0xf]
    %v4383 = vld [vmem:[%s4374 + $0x20] sm:$0xf]
    %v4384 = vld [vmem:[%s4374 + $0x24] sm:$0xf]
    %v4385 = vld [vmem:[%s4374 + $0x28] sm:$0xf]
    %v4386 = vld [vmem:[%s4374 + $0x2c] sm:$0xf]
    %v4387 = vld [vmem:[%s4374 + $0x30] sm:$0xf]
    %v4388 = vld [vmem:[%s4374 + $0x34] sm:$0xf]
    %v4389 = vld [vmem:[%s4374 + $0x38] sm:$0xf]
    %v4390 = vld [vmem:[%s4374 + $0x3c] sm:$0xf]
    %v4391 = vrot.slane %v4113, 2
    %v4392 = vrot.slane %v4114, 1
    %v4393 = vsel %vm4130, %v4392, %v4391
    %v4394 = vsel %vm4133, %v4115, %v4393
    %v4395 = vrot.slane %v4116, 7
    %v4396 = vsel %vm4136, %v4395, %v4394
    %v4397 = vrot.slane %v4117, 6
    %v4398 = vsel %vm4139, %v4397, %v4396
    %v4399 = vrot.slane %v4118, 5
    %v4400 = vsel %vm4142, %v4399, %v4398
    %v4401 = vrot.slane %v4119, 4
    %v4402 = vsel %vm4145, %v4401, %v4400
    %v4403 = vrot.slane %v4120, 3
    %v4404 = vsel %vm4148, %v4403, %v4402
    %v4405 = vrot.slane %v4121, 2
    %v4406 = vrot.slane %v4122, 1
    %v4407 = vsel %vm4130, %v4406, %v4405
    %v4408 = vsel %vm4133, %v4123, %v4407
    %v4409 = vrot.slane %v4124, 7
    %v4410 = vsel %vm4136, %v4409, %v4408
    %v4411 = vrot.slane %v4125, 6
    %v4412 = vsel %vm4139, %v4411, %v4410
    %v4413 = vrot.slane %v4126, 5
    %v4414 = vsel %vm4142, %v4413, %v4412
    %v4415 = vrot.slane %v4127, 4
    %v4416 = vsel %vm4145, %v4415, %v4414
    %v4417 = vrot.slane %v4128, 3
    %v4418 = vsel %vm4148, %v4417, %v4416
    %v4419 = vpack.c.b16 %v4418, %v4404
    %v4437 = vunpack.c.l.b16 %v4375
    %v4438 = vunpack.c.l.b16 %v4376
    %v4439 = vunpack.c.l.b16 %v4377
    %v4440 = vunpack.c.l.b16 %v4378
    %v4441 = vunpack.c.l.b16 %v4379
    %v4442 = vunpack.c.l.b16 %v4380
    %v4443 = vunpack.c.l.b16 %v4381
    %v4444 = vunpack.c.l.b16 %v4382
    %v4445 = vunpack.c.l.b16 %v4383
    %v4446 = vunpack.c.l.b16 %v4384
    %v4447 = vunpack.c.l.b16 %v4385
    %v4448 = vunpack.c.l.b16 %v4386
    %v4449 = vunpack.c.l.b16 %v4387
    %v4450 = vunpack.c.l.b16 %v4388
    %v4451 = vunpack.c.l.b16 %v4389
    %v4452 = vunpack.c.l.b16 %v4390
    %v4453 = vpack.c.b16 %v4438, %v4437
    %v4454 = vpack.c.b16 %v4440, %v4439
    %v4455 = vpack.c.b16 %v4442, %v4441
    %v4456 = vpack.c.b16 %v4444, %v4443
    %v4457 = vpack.c.b16 %v4446, %v4445
    %v4458 = vpack.c.b16 %v4448, %v4447
    %v4459 = vpack.c.b16 %v4450, %v4449
    %v4460 = vpack.c.b16 %v4452, %v4451
    %4469 = vmatprep.subr.bf16.mxu0 0
    %4470 = vmatpush1.bf16.msra.mxu0 %v4460
    %4471 = vmatprep.subr.bf16.mxu0 0
    %4472 = vmatpush1.bf16.msra.mxu0 %v4459
    %4473 = vmatprep.subr.bf16.mxu0 0
    %4474 = vmatpush1.bf16.msra.mxu0 %v4458
    %4475 = vmatprep.subr.bf16.mxu0 0
    %4476 = vmatpush1.bf16.msra.mxu0 %v4457
    %4477 = vmatprep.subr.bf16.mxu0 0
    %4478 = vmatpush1.bf16.msra.mxu0 %v4456
    %4479 = vmatprep.subr.bf16.mxu0 0
    %4480 = vmatpush1.bf16.msra.mxu0 %v4455
    %4481 = vmatprep.subr.bf16.mxu0 0
    %4482 = vmatpush1.bf16.msra.mxu0 %v4454
    %4483 = vmatprep.subr.bf16.mxu0 0
    %4484 = vmatpush1.bf16.msra.mxu0 %v4453
    %4485 = vmatprep.subr.bf16.mxu0 0
    %4486 = vmatpush2.bf16.msra.mxu0 0
    %4487 = vmatprep.subr.bf16.mxu0 0
    %4488 = vmatpush2.bf16.msra.mxu0 0
    %4489 = vmatprep.subr.bf16.mxu0 0
    %4490 = vmatpush2.bf16.msra.mxu0 0
    %4491 = vmatprep.subr.bf16.mxu0 0
    %4492 = vmatpush2.bf16.msra.mxu0 0
    %4493 = vmatprep.subr.bf16.mxu0 0
    %4494 = vmatpush2.bf16.msra.mxu0 0
    %4495 = vmatprep.subr.bf16.mxu0 0
    %4496 = vmatpush2.bf16.msra.mxu0 0
    %4497 = vmatprep.subr.bf16.mxu0 0
    %4498 = vmatpush2.bf16.msra.mxu0 0
    %4499 = vmatprep.subr.bf16.mxu0 0
    %4500 = vmatpush2.bf16.msra.mxu0 0
    %4501 = vmatprep.mubr.bf16.mxu0 0
    %4502 = vmatmul.mubr.bf16.gmra.mxu0 %v4419
    %v4503 = vpop.f32.mrf.mxu0
    %v4504 = vadd.f32 0.0, %v4503
    %v4505 = vpop.f32.mrf.mxu0
    %v4506 = vpop.f32.mrf.mxu0
    %v4507 = vadd.f32 0.0, %v4506
    %v4508 = vpop.f32.mrf.mxu0
    %4509 = vdwg.mxu0
    %v4510 = vadd.f32 %v4368, %v4504
    %v4511 = vadd.f32 %v4371, %v4507
    %s4512 = scalar_lea.vmem [#allocation5], 192
    %v4513 = vld [vmem:[%s4512] sm:$0xf]
    %v4514 = vld [vmem:[%s4512 + $0x4] sm:$0xf]
    %v4515 = vld [vmem:[%s4512 + $0x8] sm:$0xf]
    %v4516 = vld [vmem:[%s4512 + $0xc] sm:$0xf]
    %v4517 = vld [vmem:[%s4512 + $0x10] sm:$0xf]
    %v4518 = vld [vmem:[%s4512 + $0x14] sm:$0xf]
    %v4519 = vld [vmem:[%s4512 + $0x18] sm:$0xf]
    %v4520 = vld [vmem:[%s4512 + $0x1c] sm:$0xf]
    %v4521 = vld [vmem:[%s4512 + $0x20] sm:$0xf]
    %v4522 = vld [vmem:[%s4512 + $0x24] sm:$0xf]
    %v4523 = vld [vmem:[%s4512 + $0x28] sm:$0xf]
    %v4524 = vld [vmem:[%s4512 + $0x2c] sm:$0xf]
    %v4525 = vld [vmem:[%s4512 + $0x30] sm:$0xf]
    %v4526 = vld [vmem:[%s4512 + $0x34] sm:$0xf]
    %v4527 = vld [vmem:[%s4512 + $0x38] sm:$0xf]
    %v4528 = vld [vmem:[%s4512 + $0x3c] sm:$0xf]
    %v4529 = vrot.slane %v4113, 3
    %v4530 = vrot.slane %v4114, 2
    %v4531 = vsel %vm4130, %v4530, %v4529
    %v4532 = vrot.slane %v4115, 1
    %v4533 = vsel %vm4133, %v4532, %v4531
    %v4534 = vsel %vm4136, %v4116, %v4533
    %v4535 = vrot.slane %v4117, 7
    %v4536 = vsel %vm4139, %v4535, %v4534
    %v4537 = vrot.slane %v4118, 6
    %v4538 = vsel %vm4142, %v4537, %v4536
    %v4539 = vrot.slane %v4119, 5
    %v4540 = vsel %vm4145, %v4539, %v4538
    %v4541 = vrot.slane %v4120, 4
    %v4542 = vsel %vm4148, %v4541, %v4540
    %v4543 = vrot.slane %v4121, 3
    %v4544 = vrot.slane %v4122, 2
    %v4545 = vsel %vm4130, %v4544, %v4543
    %v4546 = vrot.slane %v4123, 1
    %v4547 = vsel %vm4133, %v4546, %v4545
    %v4548 = vsel %vm4136, %v4124, %v4547
    %v4549 = vrot.slane %v4125, 7
    %v4550 = vsel %vm4139, %v4549, %v4548
    %v4551 = vrot.slane %v4126, 6
    %v4552 = vsel %vm4142, %v4551, %v4550
    %v4553 = vrot.slane %v4127, 5
    %v4554 = vsel %vm4145, %v4553, %v4552
    %v4555 = vrot.slane %v4128, 4
    %v4556 = vsel %vm4148, %v4555, %v4554
    %v4557 = vpack.c.b16 %v4556, %v4542
    %v4575 = vunpack.c.l.b16 %v4513
    %v4576 = vunpack.c.l.b16 %v4514
    %v4577 = vunpack.c.l.b16 %v4515
    %v4578 = vunpack.c.l.b16 %v4516
    %v4579 = vunpack.c.l.b16 %v4517
    %v4580 = vunpack.c.l.b16 %v4518
    %v4581 = vunpack.c.l.b16 %v4519
    %v4582 = vunpack.c.l.b16 %v4520
    %v4583 = vunpack.c.l.b16 %v4521
    %v4584 = vunpack.c.l.b16 %v4522
    %v4585 = vunpack.c.l.b16 %v4523
    %v4586 = vunpack.c.l.b16 %v4524
    %v4587 = vunpack.c.l.b16 %v4525
    %v4588 = vunpack.c.l.b16 %v4526
    %v4589 = vunpack.c.l.b16 %v4527
    %v4590 = vunpack.c.l.b16 %v4528
    %v4591 = vpack.c.b16 %v4576, %v4575
    %v4592 = vpack.c.b16 %v4578, %v4577
    %v4593 = vpack.c.b16 %v4580, %v4579
    %v4594 = vpack.c.b16 %v4582, %v4581
    %v4595 = vpack.c.b16 %v4584, %v4583
    %v4596 = vpack.c.b16 %v4586, %v4585
    %v4597 = vpack.c.b16 %v4588, %v4587
    %v4598 = vpack.c.b16 %v4590, %v4589
    %4607 = vmatprep.subr.bf16.mxu0 0
    %4608 = vmatpush1.bf16.msra.mxu0 %v4598
    %4609 = vmatprep.subr.bf16.mxu0 0
    %4610 = vmatpush1.bf16.msra.mxu0 %v4597
    %4611 = vmatprep.subr.bf16.mxu0 0
    %4612 = vmatpush1.bf16.msra.mxu0 %v4596
    %4613 = vmatprep.subr.bf16.mxu0 0
    %4614 = vmatpush1.bf16.msra.mxu0 %v4595
    %4615 = vmatprep.subr.bf16.mxu0 0
    %4616 = vmatpush1.bf16.msra.mxu0 %v4594
    %4617 = vmatprep.subr.bf16.mxu0 0
    %4618 = vmatpush1.bf16.msra.mxu0 %v4593
    %4619 = vmatprep.subr.bf16.mxu0 0
    %4620 = vmatpush1.bf16.msra.mxu0 %v4592
    %4621 = vmatprep.subr.bf16.mxu0 0
    %4622 = vmatpush1.bf16.msra.mxu0 %v4591
    %4623 = vmatprep.subr.bf16.mxu0 0
    %4624 = vmatpush2.bf16.msra.mxu0 0
    %4625 = vmatprep.subr.bf16.mxu0 0
    %4626 = vmatpush2.bf16.msra.mxu0 0
    %4627 = vmatprep.subr.bf16.mxu0 0
    %4628 = vmatpush2.bf16.msra.mxu0 0
    %4629 = vmatprep.subr.bf16.mxu0 0
    %4630 = vmatpush2.bf16.msra.mxu0 0
    %4631 = vmatprep.subr.bf16.mxu0 0
    %4632 = vmatpush2.bf16.msra.mxu0 0
    %4633 = vmatprep.subr.bf16.mxu0 0
    %4634 = vmatpush2.bf16.msra.mxu0 0
    %4635 = vmatprep.subr.bf16.mxu0 0
    %4636 = vmatpush2.bf16.msra.mxu0 0
    %4637 = vmatprep.subr.bf16.mxu0 0
    %4638 = vmatpush2.bf16.msra.mxu0 0
    %4639 = vmatprep.mubr.bf16.mxu0 0
    %4640 = vmatmul.mubr.bf16.gmra.mxu0 %v4557
    %v4641 = vpop.f32.mrf.mxu0
    %v4642 = vadd.f32 0.0, %v4641
    %v4643 = vpop.f32.mrf.mxu0
    %v4644 = vpop.f32.mrf.mxu0
    %v4645 = vadd.f32 0.0, %v4644
    %v4646 = vpop.f32.mrf.mxu0
    %4647 = vdwg.mxu0
    %v4648 = vadd.f32 %v4510, %v4642
    %v4649 = vadd.f32 %v4511, %v4645
    %s4650 = scalar_lea.vmem [#allocation5], 256
    %v4651 = vld [vmem:[%s4650] sm:$0xf]
    %v4652 = vld [vmem:[%s4650 + $0x4] sm:$0xf]
    %v4653 = vld [vmem:[%s4650 + $0x8] sm:$0xf]
    %v4654 = vld [vmem:[%s4650 + $0xc] sm:$0xf]
    %v4655 = vld [vmem:[%s4650 + $0x10] sm:$0xf]
    %v4656 = vld [vmem:[%s4650 + $0x14] sm:$0xf]
    %v4657 = vld [vmem:[%s4650 + $0x18] sm:$0xf]
    %v4658 = vld [vmem:[%s4650 + $0x1c] sm:$0xf]
    %v4659 = vld [vmem:[%s4650 + $0x20] sm:$0xf]
    %v4660 = vld [vmem:[%s4650 + $0x24] sm:$0xf]
    %v4661 = vld [vmem:[%s4650 + $0x28] sm:$0xf]
    %v4662 = vld [vmem:[%s4650 + $0x2c] sm:$0xf]
    %v4663 = vld [vmem:[%s4650 + $0x30] sm:$0xf]
    %v4664 = vld [vmem:[%s4650 + $0x34] sm:$0xf]
    %v4665 = vld [vmem:[%s4650 + $0x38] sm:$0xf]
    %v4666 = vld [vmem:[%s4650 + $0x3c] sm:$0xf]
    %v4667 = vrot.slane %v4113, 4
    %v4668 = vrot.slane %v4114, 3
    %v4669 = vsel %vm4130, %v4668, %v4667
    %v4670 = vrot.slane %v4115, 2
    %v4671 = vsel %vm4133, %v4670, %v4669
    %v4672 = vrot.slane %v4116, 1
    %v4673 = vsel %vm4136, %v4672, %v4671
    %v4674 = vsel %vm4139, %v4117, %v4673
    %v4675 = vrot.slane %v4118, 7
    %v4676 = vsel %vm4142, %v4675, %v4674
    %v4677 = vrot.slane %v4119, 6
    %v4678 = vsel %vm4145, %v4677, %v4676
    %v4679 = vrot.slane %v4120, 5
    %v4680 = vsel %vm4148, %v4679, %v4678
    %v4681 = vrot.slane %v4121, 4
    %v4682 = vrot.slane %v4122, 3
    %v4683 = vsel %vm4130, %v4682, %v4681
    %v4684 = vrot.slane %v4123, 2
    %v4685 = vsel %vm4133, %v4684, %v4683
    %v4686 = vrot.slane %v4124, 1
    %v4687 = vsel %vm4136, %v4686, %v4685
    %v4688 = vsel %vm4139, %v4125, %v4687
    %v4689 = vrot.slane %v4126, 7
    %v4690 = vsel %vm4142, %v4689, %v4688
    %v4691 = vrot.slane %v4127, 6
    %v4692 = vsel %vm4145, %v4691, %v4690
    %v4693 = vrot.slane %v4128, 5
    %v4694 = vsel %vm4148, %v4693, %v4692
    %v4695 = vpack.c.b16 %v4694, %v4680
    %v4713 = vunpack.c.l.b16 %v4651
    %v4714 = vunpack.c.l.b16 %v4652
    %v4715 = vunpack.c.l.b16 %v4653
    %v4716 = vunpack.c.l.b16 %v4654
    %v4717 = vunpack.c.l.b16 %v4655
    %v4718 = vunpack.c.l.b16 %v4656
    %v4719 = vunpack.c.l.b16 %v4657
    %v4720 = vunpack.c.l.b16 %v4658
    %v4721 = vunpack.c.l.b16 %v4659
    %v4722 = vunpack.c.l.b16 %v4660
    %v4723 = vunpack.c.l.b16 %v4661
    %v4724 = vunpack.c.l.b16 %v4662
    %v4725 = vunpack.c.l.b16 %v4663
    %v4726 = vunpack.c.l.b16 %v4664
    %v4727 = vunpack.c.l.b16 %v4665
    %v4728 = vunpack.c.l.b16 %v4666
    %v4729 = vpack.c.b16 %v4714, %v4713
    %v4730 = vpack.c.b16 %v4716, %v4715
    %v4731 = vpack.c.b16 %v4718, %v4717
    %v4732 = vpack.c.b16 %v4720, %v4719
    %v4733 = vpack.c.b16 %v4722, %v4721
    %v4734 = vpack.c.b16 %v4724, %v4723
    %v4735 = vpack.c.b16 %v4726, %v4725
    %v4736 = vpack.c.b16 %v4728, %v4727
    %4745 = vmatprep.subr.bf16.mxu0 0
    %4746 = vmatpush1.bf16.msra.mxu0 %v4736
    %4747 = vmatprep.subr.bf16.mxu0 0
    %4748 = vmatpush1.bf16.msra.mxu0 %v4735
    %4749 = vmatprep.subr.bf16.mxu0 0
    %4750 = vmatpush1.bf16.msra.mxu0 %v4734
    %4751 = vmatprep.subr.bf16.mxu0 0
    %4752 = vmatpush1.bf16.msra.mxu0 %v4733
    %4753 = vmatprep.subr.bf16.mxu0 0
    %4754 = vmatpush1.bf16.msra.mxu0 %v4732
    %4755 = vmatprep.subr.bf16.mxu0 0
    %4756 = vmatpush1.bf16.msra.mxu0 %v4731
    %4757 = vmatprep.subr.bf16.mxu0 0
    %4758 = vmatpush1.bf16.msra.mxu0 %v4730
    %4759 = vmatprep.subr.bf16.mxu0 0
    %4760 = vmatpush1.bf16.msra.mxu0 %v4729
    %4761 = vmatprep.subr.bf16.mxu0 0
    %4762 = vmatpush2.bf16.msra.mxu0 0
    %4763 = vmatprep.subr.bf16.mxu0 0
    %4764 = vmatpush2.bf16.msra.mxu0 0
    %4765 = vmatprep.subr.bf16.mxu0 0
    %4766 = vmatpush2.bf16.msra.mxu0 0
    %4767 = vmatprep.subr.bf16.mxu0 0
    %4768 = vmatpush2.bf16.msra.mxu0 0
    %4769 = vmatprep.subr.bf16.mxu0 0
    %4770 = vmatpush2.bf16.msra.mxu0 0
    %4771 = vmatprep.subr.bf16.mxu0 0
    %4772 = vmatpush2.bf16.msra.mxu0 0
    %4773 = vmatprep.subr.bf16.mxu0 0
    %4774 = vmatpush2.bf16.msra.mxu0 0
    %4775 = vmatprep.subr.bf16.mxu0 0
    %4776 = vmatpush2.bf16.msra.mxu0 0
    %4777 = vmatprep.mubr.bf16.mxu0 0
    %4778 = vmatmul.mubr.bf16.gmra.mxu0 %v4695
    %v4779 = vpop.f32.mrf.mxu0
    %v4780 = vadd.f32 0.0, %v4779
    %v4781 = vpop.f32.mrf.mxu0
    %v4782 = vpop.f32.mrf.mxu0
    %v4783 = vadd.f32 0.0, %v4782
    %v4784 = vpop.f32.mrf.mxu0
    %4785 = vdwg.mxu0
    %v4786 = vadd.f32 %v4648, %v4780
    %v4787 = vadd.f32 %v4649, %v4783
    %s4788 = scalar_lea.vmem [#allocation5], 320
    %v4789 = vld [vmem:[%s4788] sm:$0xf]
    %v4790 = vld [vmem:[%s4788 + $0x4] sm:$0xf]
    %v4791 = vld [vmem:[%s4788 + $0x8] sm:$0xf]
    %v4792 = vld [vmem:[%s4788 + $0xc] sm:$0xf]
    %v4793 = vld [vmem:[%s4788 + $0x10] sm:$0xf]
    %v4794 = vld [vmem:[%s4788 + $0x14] sm:$0xf]
    %v4795 = vld [vmem:[%s4788 + $0x18] sm:$0xf]
    %v4796 = vld [vmem:[%s4788 + $0x1c] sm:$0xf]
    %v4797 = vld [vmem:[%s4788 + $0x20] sm:$0xf]
    %v4798 = vld [vmem:[%s4788 + $0x24] sm:$0xf]
    %v4799 = vld [vmem:[%s4788 + $0x28] sm:$0xf]
    %v4800 = vld [vmem:[%s4788 + $0x2c] sm:$0xf]
    %v4801 = vld [vmem:[%s4788 + $0x30] sm:$0xf]
    %v4802 = vld [vmem:[%s4788 + $0x34] sm:$0xf]
    %v4803 = vld [vmem:[%s4788 + $0x38] sm:$0xf]
    %v4804 = vld [vmem:[%s4788 + $0x3c] sm:$0xf]
    %v4805 = vrot.slane %v4113, 5
    %v4806 = vrot.slane %v4114, 4
    %v4807 = vsel %vm4130, %v4806, %v4805
    %v4808 = vrot.slane %v4115, 3
    %v4809 = vsel %vm4133, %v4808, %v4807
    %v4810 = vrot.slane %v4116, 2
    %v4811 = vsel %vm4136, %v4810, %v4809
    %v4812 = vrot.slane %v4117, 1
    %v4813 = vsel %vm4139, %v4812, %v4811
    %v4814 = vsel %vm4142, %v4118, %v4813
    %v4815 = vrot.slane %v4119, 7
    %v4816 = vsel %vm4145, %v4815, %v4814
    %v4817 = vrot.slane %v4120, 6
    %v4818 = vsel %vm4148, %v4817, %v4816
    %v4819 = vrot.slane %v4121, 5
    %v4820 = vrot.slane %v4122, 4
    %v4821 = vsel %vm4130, %v4820, %v4819
    %v4822 = vrot.slane %v4123, 3
    %v4823 = vsel %vm4133, %v4822, %v4821
    %v4824 = vrot.slane %v4124, 2
    %v4825 = vsel %vm4136, %v4824, %v4823
    %v4826 = vrot.slane %v4125, 1
    %v4827 = vsel %vm4139, %v4826, %v4825
    %v4828 = vsel %vm4142, %v4126, %v4827
    %v4829 = vrot.slane %v4127, 7
    %v4830 = vsel %vm4145, %v4829, %v4828
    %v4831 = vrot.slane %v4128, 6
    %v4832 = vsel %vm4148, %v4831, %v4830
    %v4833 = vpack.c.b16 %v4832, %v4818
    %v4851 = vunpack.c.l.b16 %v4789
    %v4852 = vunpack.c.l.b16 %v4790
    %v4853 = vunpack.c.l.b16 %v4791
    %v4854 = vunpack.c.l.b16 %v4792
    %v4855 = vunpack.c.l.b16 %v4793
    %v4856 = vunpack.c.l.b16 %v4794
    %v4857 = vunpack.c.l.b16 %v4795
    %v4858 = vunpack.c.l.b16 %v4796
    %v4859 = vunpack.c.l.b16 %v4797
    %v4860 = vunpack.c.l.b16 %v4798
    %v4861 = vunpack.c.l.b16 %v4799
    %v4862 = vunpack.c.l.b16 %v4800
    %v4863 = vunpack.c.l.b16 %v4801
    %v4864 = vunpack.c.l.b16 %v4802
    %v4865 = vunpack.c.l.b16 %v4803
    %v4866 = vunpack.c.l.b16 %v4804
    %v4867 = vpack.c.b16 %v4852, %v4851
    %v4868 = vpack.c.b16 %v4854, %v4853
    %v4869 = vpack.c.b16 %v4856, %v4855
    %v4870 = vpack.c.b16 %v4858, %v4857
    %v4871 = vpack.c.b16 %v4860, %v4859
    %v4872 = vpack.c.b16 %v4862, %v4861
    %v4873 = vpack.c.b16 %v4864, %v4863
    %v4874 = vpack.c.b16 %v4866, %v4865
    %4883 = vmatprep.subr.bf16.mxu0 0
    %4884 = vmatpush1.bf16.msra.mxu0 %v4874
    %4885 = vmatprep.subr.bf16.mxu0 0
    %4886 = vmatpush1.bf16.msra.mxu0 %v4873
    %4887 = vmatprep.subr.bf16.mxu0 0
    %4888 = vmatpush1.bf16.msra.mxu0 %v4872
    %4889 = vmatprep.subr.bf16.mxu0 0
    %4890 = vmatpush1.bf16.msra.mxu0 %v4871
    %4891 = vmatprep.subr.bf16.mxu0 0
    %4892 = vmatpush1.bf16.msra.mxu0 %v4870
    %4893 = vmatprep.subr.bf16.mxu0 0
    %4894 = vmatpush1.bf16.msra.mxu0 %v4869
    %4895 = vmatprep.subr.bf16.mxu0 0
    %4896 = vmatpush1.bf16.msra.mxu0 %v4868
    %4897 = vmatprep.subr.bf16.mxu0 0
    %4898 = vmatpush1.bf16.msra.mxu0 %v4867
    %4899 = vmatprep.subr.bf16.mxu0 0
    %4900 = vmatpush2.bf16.msra.mxu0 0
    %4901 = vmatprep.subr.bf16.mxu0 0
    %4902 = vmatpush2.bf16.msra.mxu0 0
    %4903 = vmatprep.subr.bf16.mxu0 0
    %4904 = vmatpush2.bf16.msra.mxu0 0
    %4905 = vmatprep.subr.bf16.mxu0 0
    %4906 = vmatpush2.bf16.msra.mxu0 0
    %4907 = vmatprep.subr.bf16.mxu0 0
    %4908 = vmatpush2.bf16.msra.mxu0 0
    %4909 = vmatprep.subr.bf16.mxu0 0
    %4910 = vmatpush2.bf16.msra.mxu0 0
    %4911 = vmatprep.subr.bf16.mxu0 0
    %4912 = vmatpush2.bf16.msra.mxu0 0
    %4913 = vmatprep.subr.bf16.mxu0 0
    %4914 = vmatpush2.bf16.msra.mxu0 0
    %4915 = vmatprep.mubr.bf16.mxu0 0
    %4916 = vmatmul.mubr.bf16.gmra.mxu0 %v4833
    %v4917 = vpop.f32.mrf.mxu0
    %v4918 = vadd.f32 0.0, %v4917
    %v4919 = vpop.f32.mrf.mxu0
    %v4920 = vpop.f32.mrf.mxu0
    %v4921 = vadd.f32 0.0, %v4920
    %v4922 = vpop.f32.mrf.mxu0
    %4923 = vdwg.mxu0
    %v4924 = vadd.f32 %v4786, %v4918
    %v4925 = vadd.f32 %v4787, %v4921
    %s4926 = scalar_lea.vmem [#allocation5], 384
    %v4927 = vld [vmem:[%s4926] sm:$0xf]
    %v4928 = vld [vmem:[%s4926 + $0x4] sm:$0xf]
    %v4929 = vld [vmem:[%s4926 + $0x8] sm:$0xf]
    %v4930 = vld [vmem:[%s4926 + $0xc] sm:$0xf]
    %v4931 = vld [vmem:[%s4926 + $0x10] sm:$0xf]
    %v4932 = vld [vmem:[%s4926 + $0x14] sm:$0xf]
    %v4933 = vld [vmem:[%s4926 + $0x18] sm:$0xf]
    %v4934 = vld [vmem:[%s4926 + $0x1c] sm:$0xf]
    %v4935 = vld [vmem:[%s4926 + $0x20] sm:$0xf]
    %v4936 = vld [vmem:[%s4926 + $0x24] sm:$0xf]
    %v4937 = vld [vmem:[%s4926 + $0x28] sm:$0xf]
    %v4938 = vld [vmem:[%s4926 + $0x2c] sm:$0xf]
    %v4939 = vld [vmem:[%s4926 + $0x30] sm:$0xf]
    %v4940 = vld [vmem:[%s4926 + $0x34] sm:$0xf]
    %v4941 = vld [vmem:[%s4926 + $0x38] sm:$0xf]
    %v4942 = vld [vmem:[%s4926 + $0x3c] sm:$0xf]
    %v4943 = vrot.slane %v4113, 6
    %v4944 = vrot.slane %v4114, 5
    %v4945 = vsel %vm4130, %v4944, %v4943
    %v4946 = vrot.slane %v4115, 4
    %v4947 = vsel %vm4133, %v4946, %v4945
    %v4948 = vrot.slane %v4116, 3
    %v4949 = vsel %vm4136, %v4948, %v4947
    %v4950 = vrot.slane %v4117, 2
    %v4951 = vsel %vm4139, %v4950, %v4949
    %v4952 = vrot.slane %v4118, 1
    %v4953 = vsel %vm4142, %v4952, %v4951
    %v4954 = vsel %vm4145, %v4119, %v4953
    %v4955 = vrot.slane %v4120, 7
    %v4956 = vsel %vm4148, %v4955, %v4954
    %v4957 = vrot.slane %v4121, 6
    %v4958 = vrot.slane %v4122, 5
    %v4959 = vsel %vm4130, %v4958, %v4957
    %v4960 = vrot.slane %v4123, 4
    %v4961 = vsel %vm4133, %v4960, %v4959
    %v4962 = vrot.slane %v4124, 3
    %v4963 = vsel %vm4136, %v4962, %v4961
    %v4964 = vrot.slane %v4125, 2
    %v4965 = vsel %vm4139, %v4964, %v4963
    %v4966 = vrot.slane %v4126, 1
    %v4967 = vsel %vm4142, %v4966, %v4965
    %v4968 = vsel %vm4145, %v4127, %v4967
    %v4969 = vrot.slane %v4128, 7
    %v4970 = vsel %vm4148, %v4969, %v4968
    %v4971 = vpack.c.b16 %v4970, %v4956
    %v4989 = vunpack.c.l.b16 %v4927
    %v4990 = vunpack.c.l.b16 %v4928
    %v4991 = vunpack.c.l.b16 %v4929
    %v4992 = vunpack.c.l.b16 %v4930
    %v4993 = vunpack.c.l.b16 %v4931
    %v4994 = vunpack.c.l.b16 %v4932
    %v4995 = vunpack.c.l.b16 %v4933
    %v4996 = vunpack.c.l.b16 %v4934
    %v4997 = vunpack.c.l.b16 %v4935
    %v4998 = vunpack.c.l.b16 %v4936
    %v4999 = vunpack.c.l.b16 %v4937
    %v5000 = vunpack.c.l.b16 %v4938
    %v5001 = vunpack.c.l.b16 %v4939
    %v5002 = vunpack.c.l.b16 %v4940
    %v5003 = vunpack.c.l.b16 %v4941
    %v5004 = vunpack.c.l.b16 %v4942
    %v5005 = vpack.c.b16 %v4990, %v4989
    %v5006 = vpack.c.b16 %v4992, %v4991
    %v5007 = vpack.c.b16 %v4994, %v4993
    %v5008 = vpack.c.b16 %v4996, %v4995
    %v5009 = vpack.c.b16 %v4998, %v4997
    %v5010 = vpack.c.b16 %v5000, %v4999
    %v5011 = vpack.c.b16 %v5002, %v5001
    %v5012 = vpack.c.b16 %v5004, %v5003
    %5021 = vmatprep.subr.bf16.mxu0 0
    %5022 = vmatpush1.bf16.msra.mxu0 %v5012
    %5023 = vmatprep.subr.bf16.mxu0 0
    %5024 = vmatpush1.bf16.msra.mxu0 %v5011
    %5025 = vmatprep.subr.bf16.mxu0 0
    %5026 = vmatpush1.bf16.msra.mxu0 %v5010
    %5027 = vmatprep.subr.bf16.mxu0 0
    %5028 = vmatpush1.bf16.msra.mxu0 %v5009
    %5029 = vmatprep.subr.bf16.mxu0 0
    %5030 = vmatpush1.bf16.msra.mxu0 %v5008
    %5031 = vmatprep.subr.bf16.mxu0 0
    %5032 = vmatpush1.bf16.msra.mxu0 %v5007
    %5033 = vmatprep.subr.bf16.mxu0 0
    %5034 = vmatpush1.bf16.msra.mxu0 %v5006
    %5035 = vmatprep.subr.bf16.mxu0 0
    %5036 = vmatpush1.bf16.msra.mxu0 %v5005
    %5037 = vmatprep.subr.bf16.mxu0 0
    %5038 = vmatpush2.bf16.msra.mxu0 0
    %5039 = vmatprep.subr.bf16.mxu0 0
    %5040 = vmatpush2.bf16.msra.mxu0 0
    %5041 = vmatprep.subr.bf16.mxu0 0
    %5042 = vmatpush2.bf16.msra.mxu0 0
    %5043 = vmatprep.subr.bf16.mxu0 0
    %5044 = vmatpush2.bf16.msra.mxu0 0
    %5045 = vmatprep.subr.bf16.mxu0 0
    %5046 = vmatpush2.bf16.msra.mxu0 0
    %5047 = vmatprep.subr.bf16.mxu0 0
    %5048 = vmatpush2.bf16.msra.mxu0 0
    %5049 = vmatprep.subr.bf16.mxu0 0
    %5050 = vmatpush2.bf16.msra.mxu0 0
    %5051 = vmatprep.subr.bf16.mxu0 0
    %5052 = vmatpush2.bf16.msra.mxu0 0
    %5053 = vmatprep.mubr.bf16.mxu0 0
    %5054 = vmatmul.mubr.bf16.gmra.mxu0 %v4971
    %v5055 = vpop.f32.mrf.mxu0
    %v5056 = vadd.f32 0.0, %v5055
    %v5057 = vpop.f32.mrf.mxu0
    %v5058 = vpop.f32.mrf.mxu0
    %v5059 = vadd.f32 0.0, %v5058
    %v5060 = vpop.f32.mrf.mxu0
    %5061 = vdwg.mxu0
    %v5062 = vadd.f32 %v4924, %v5056
    %v5063 = vadd.f32 %v4925, %v5059
    %s5064 = scalar_lea.vmem [#allocation5], 448
    %v5065 = vld [vmem:[%s5064] sm:$0xf]
    %v5066 = vld [vmem:[%s5064 + $0x4] sm:$0xf]
    %v5067 = vld [vmem:[%s5064 + $0x8] sm:$0xf]
    %v5068 = vld [vmem:[%s5064 + $0xc] sm:$0xf]
    %v5069 = vld [vmem:[%s5064 + $0x10] sm:$0xf]
    %v5070 = vld [vmem:[%s5064 + $0x14] sm:$0xf]
    %v5071 = vld [vmem:[%s5064 + $0x18] sm:$0xf]
    %v5072 = vld [vmem:[%s5064 + $0x1c] sm:$0xf]
    %v5073 = vld [vmem:[%s5064 + $0x20] sm:$0xf]
    %v5074 = vld [vmem:[%s5064 + $0x24] sm:$0xf]
    %v5075 = vld [vmem:[%s5064 + $0x28] sm:$0xf]
    %v5076 = vld [vmem:[%s5064 + $0x2c] sm:$0xf]
    %v5077 = vld [vmem:[%s5064 + $0x30] sm:$0xf]
    %v5078 = vld [vmem:[%s5064 + $0x34] sm:$0xf]
    %v5079 = vld [vmem:[%s5064 + $0x38] sm:$0xf]
    %v5080 = vld [vmem:[%s5064 + $0x3c] sm:$0xf]
    %v5081 = vrot.slane %v4113, 7
    %v5082 = vrot.slane %v4114, 6
    %v5083 = vsel %vm4130, %v5082, %v5081
    %v5084 = vrot.slane %v4115, 5
    %v5085 = vsel %vm4133, %v5084, %v5083
    %v5086 = vrot.slane %v4116, 4
    %v5087 = vsel %vm4136, %v5086, %v5085
    %v5088 = vrot.slane %v4117, 3
    %v5089 = vsel %vm4139, %v5088, %v5087
    %v5090 = vrot.slane %v4118, 2
    %v5091 = vsel %vm4142, %v5090, %v5089
    %v5092 = vrot.slane %v4119, 1
    %v5093 = vsel %vm4145, %v5092, %v5091
    %v5094 = vsel %vm4148, %v4120, %v5093
    %v5095 = vrot.slane %v4121, 7
    %v5096 = vrot.slane %v4122, 6
    %v5097 = vsel %vm4130, %v5096, %v5095
    %v5098 = vrot.slane %v4123, 5
    %v5099 = vsel %vm4133, %v5098, %v5097
    %v5100 = vrot.slane %v4124, 4
    %v5101 = vsel %vm4136, %v5100, %v5099
    %v5102 = vrot.slane %v4125, 3
    %v5103 = vsel %vm4139, %v5102, %v5101
    %v5104 = vrot.slane %v4126, 2
    %v5105 = vsel %vm4142, %v5104, %v5103
    %v5106 = vrot.slane %v4127, 1
    %v5107 = vsel %vm4145, %v5106, %v5105
    %v5108 = vsel %vm4148, %v4128, %v5107
    %v5109 = vpack.c.b16 %v5108, %v5094
    %v5127 = vunpack.c.l.b16 %v5065
    %v5128 = vunpack.c.l.b16 %v5066
    %v5129 = vunpack.c.l.b16 %v5067
    %v5130 = vunpack.c.l.b16 %v5068
    %v5131 = vunpack.c.l.b16 %v5069
    %v5132 = vunpack.c.l.b16 %v5070
    %v5133 = vunpack.c.l.b16 %v5071
    %v5134 = vunpack.c.l.b16 %v5072
    %v5135 = vunpack.c.l.b16 %v5073
    %v5136 = vunpack.c.l.b16 %v5074
    %v5137 = vunpack.c.l.b16 %v5075
    %v5138 = vunpack.c.l.b16 %v5076
    %v5139 = vunpack.c.l.b16 %v5077
    %v5140 = vunpack.c.l.b16 %v5078
    %v5141 = vunpack.c.l.b16 %v5079
    %v5142 = vunpack.c.l.b16 %v5080
    %v5143 = vpack.c.b16 %v5128, %v5127
    %v5144 = vpack.c.b16 %v5130, %v5129
    %v5145 = vpack.c.b16 %v5132, %v5131
    %v5146 = vpack.c.b16 %v5134, %v5133
    %v5147 = vpack.c.b16 %v5136, %v5135
    %v5148 = vpack.c.b16 %v5138, %v5137
    %v5149 = vpack.c.b16 %v5140, %v5139
    %v5150 = vpack.c.b16 %v5142, %v5141
    %5159 = vmatprep.subr.bf16.mxu0 0
    %5160 = vmatpush1.bf16.msra.mxu0 %v5150
    %5161 = vmatprep.subr.bf16.mxu0 0
    %5162 = vmatpush1.bf16.msra.mxu0 %v5149
    %5163 = vmatprep.subr.bf16.mxu0 0
    %5164 = vmatpush1.bf16.msra.mxu0 %v5148
    %5165 = vmatprep.subr.bf16.mxu0 0
    %5166 = vmatpush1.bf16.msra.mxu0 %v5147
    %5167 = vmatprep.subr.bf16.mxu0 0
    %5168 = vmatpush1.bf16.msra.mxu0 %v5146
    %5169 = vmatprep.subr.bf16.mxu0 0
    %5170 = vmatpush1.bf16.msra.mxu0 %v5145
    %5171 = vmatprep.subr.bf16.mxu0 0
    %5172 = vmatpush1.bf16.msra.mxu0 %v5144
    %5173 = vmatprep.subr.bf16.mxu0 0
    %5174 = vmatpush1.bf16.msra.mxu0 %v5143
    %5175 = vmatprep.subr.bf16.mxu0 0
    %5176 = vmatpush2.bf16.msra.mxu0 0
    %5177 = vmatprep.subr.bf16.mxu0 0
    %5178 = vmatpush2.bf16.msra.mxu0 0
    %5179 = vmatprep.subr.bf16.mxu0 0
    %5180 = vmatpush2.bf16.msra.mxu0 0
    %5181 = vmatprep.subr.bf16.mxu0 0
    %5182 = vmatpush2.bf16.msra.mxu0 0
    %5183 = vmatprep.subr.bf16.mxu0 0
    %5184 = vmatpush2.bf16.msra.mxu0 0
    %5185 = vmatprep.subr.bf16.mxu0 0
    %5186 = vmatpush2.bf16.msra.mxu0 0
    %5187 = vmatprep.subr.bf16.mxu0 0
    %5188 = vmatpush2.bf16.msra.mxu0 0
    %5189 = vmatprep.subr.bf16.mxu0 0
    %5190 = vmatpush2.bf16.msra.mxu0 0
    %5191 = vmatprep.mubr.bf16.mxu0 0
    %5192 = vmatmul.mubr.bf16.gmra.mxu0 %v5109
    %v5193 = vpop.f32.mrf.mxu0
    %v5194 = vadd.f32 0.0, %v5193
    %v5195 = vpop.f32.mrf.mxu0
    %v5196 = vpop.f32.mrf.mxu0
    %v5197 = vadd.f32 0.0, %v5196
    %v5198 = vpop.f32.mrf.mxu0
    %5199 = vdwg.mxu0
    %v5200 = vadd.f32 %v5062, %v5194
    %v5201 = vadd.f32 %v5063, %v5197
    %v5202 = vld [vmem:[%s11] sm:$0x1]
    %v5204 = vlaneseq
    %v5205 = vshrl.u32 %v5204, 7
    %v5206 = vsub.s32 0, %v5205
    %v5207 = vrot.slane %v5202, %v5206
    %v5209 = vadd.f32 %v5200, %v5207
    %v5210 = vadd.f32 %v5201, %v5207
    %5211 = vst [vmem:[%s12] sm:$0xff] %v5209
    %5212 = vst [vmem:[%s12 + $0x8] sm:$0xff] %v5210
    // Predicated region
    $region58: #{resunit_forward.1} parent=1 // pred_check
      _
    $region59: #{resunit_forward.1} parent=1 // pred_check_branch
      %5214 = sbr.rel (0) target = $region61
    $region60: #{resunit_forward.1} parent=1 // pred_region
      _
    $region61: #{resunit_forward.1} parent=1 // pred_fallthru
      _
    // Predicated region
    $region62: #{resunit_forward.1} parent=1 // pred_check
      _
    $region63: #{resunit_forward.1} parent=1 // pred_check_branch
      %5216 = sbr.rel (0) target = $region65
    $region64: #{resunit_forward.1} parent=1 // pred_region
      _
    $region65: #{resunit_forward.1} parent=1 // pred_fallthru
      _
    %5217 = vsyncpa [#allocation4], 1
    %5218 = vsyncpa [#allocation6], 1

</llo_original>
